<compile_context>
chip_gen: v7x
topology: tpu7x:2x2x1
jax: 0.10.0
libtpu: 0.0.40
codegen_flags: <defaults>
</compile_context>

<pallas_src>
import jax
import jax.numpy as jnp
from jax.experimental import pallas as pl
from jax.experimental.pallas import tpu as pltpu

LANE = 128  # vreg lane width / padded channel width


def _round_up(x, m):
    return ((x + m - 1) // m) * m


# ----------------------------------------------------------------------------
# Pallas kernels
# ----------------------------------------------------------------------------
def _conv_bias_relu_pool_kernel(p_ref, w_ref, b_ref, o_ref):
    """p_ref: (4, TM, Kp) im2col patches, one slab per 2x2 pool-window phase.
    Computes relu(max_phase(p @ w) + b) == maxpool2x2(relu(conv + b))."""
    w = w_ref[...]
    z = jnp.dot(p_ref[0], w, preferred_element_type=jnp.float32)
    z = jnp.maximum(z, jnp.dot(p_ref[1], w, preferred_element_type=jnp.float32))
    z = jnp.maximum(z, jnp.dot(p_ref[2], w, preferred_element_type=jnp.float32))
    z = jnp.maximum(z, jnp.dot(p_ref[3], w, preferred_element_type=jnp.float32))
    o_ref[...] = jnp.maximum(z + b_ref[...], 0.0).astype(o_ref.dtype)


def _fc_chain_kernel(x_ref, w1_ref, b1_ref, w2_ref, b2_ref, w3_ref, b3_ref,
                     o_ref):
    """Fused fc1 -> ReLU -> fc2 -> ReLU -> fc3; intermediates stay on-chip."""
    h = jnp.dot(x_ref[...], w1_ref[...], preferred_element_type=jnp.float32)
    h = jnp.maximum(h + b1_ref[...], 0.0)
    h = jnp.dot(h, w2_ref[...], preferred_element_type=jnp.float32)
    h = jnp.maximum(h + b2_ref[...], 0.0)
    h = jnp.dot(h, w3_ref[...], preferred_element_type=jnp.float32)
    o_ref[...] = (h + b3_ref[...]).astype(o_ref.dtype)


# ----------------------------------------------------------------------------
# Pallas wrappers
# ----------------------------------------------------------------------------
def conv_relu_pool(phases, w, b, *, tm_cap=512):
    """phases: (4, M, Kp) f32; w: (Kp, 128); b: (1, 128)  ->  (M, 128) f32."""
    _, M, Kp = phases.shape
    assert w.shape == (Kp, LANE) and b.shape == (1, LANE)
    tm = M if M <= tm_cap else tm_cap          # full block if small, else tile
    grid = (pl.cdiv(M, tm),)
    return pl.pallas_call(
        _conv_bias_relu_pool_kernel,
        out_shape=jax.ShapeDtypeStruct((M, LANE), jnp.float32),
        grid=grid,
        in_specs=[
            pl.BlockSpec((4, tm, Kp), lambda i: (0, i, 0)),
            pl.BlockSpec((Kp, LANE), lambda i: (0, 0)),   # constant -> DMA'd once
            pl.BlockSpec((1, LANE), lambda i: (0, 0)),
        ],
        out_specs=pl.BlockSpec((tm, LANE), lambda i: (i, 0)),
        compiler_params=pltpu.CompilerParams(
            dimension_semantics=("parallel",)),
    )(phases, w, b)


def fc_chain(x, w1, b1, w2, b2, w3, b3, *, tm_cap=512):
    """x: (M, K) -> (M, 128) logits (lane-padded); all three FCs in one call."""
    M, K = x.shape
    Mp = _round_up(M, 8)                       # at least one full sublane tile
    if Mp != M:
        x = jnp.pad(x, ((0, Mp - M), (0, 0)))
    tm = Mp if Mp <= tm_cap else tm_cap
    grid = (pl.cdiv(Mp, tm),)
    out = pl.pallas_call(
        _fc_chain_kernel,
        out_shape=jax.ShapeDtypeStruct((Mp, LANE), jnp.float32),
        grid=grid,
        in_specs=[
            pl.BlockSpec((tm, K), lambda i: (i, 0)),
            pl.BlockSpec(w1.shape, lambda i: (0, 0)),
            pl.BlockSpec((1, LANE), lambda i: (0, 0)),
            pl.BlockSpec(w2.shape, lambda i: (0, 0)),
            pl.BlockSpec((1, LANE), lambda i: (0, 0)),
            pl.BlockSpec(w3.shape, lambda i: (0, 0)),
            pl.BlockSpec((1, LANE), lambda i: (0, 0)),
        ],
        out_specs=pl.BlockSpec((tm, LANE), lambda i: (i, 0)),
        compiler_params=pltpu.CompilerParams(
            dimension_semantics=("parallel",)),
    )(x, w1, b1, w2, b2, w3, b3)
    return out[:M]


# ----------------------------------------------------------------------------
# Glue: im2col grouped by 2x2 pool phase (NHWC, stride-1 valid conv)
# ----------------------------------------------------------------------------
# TODO(synk): the patch gather below is still XLA glue; the next step would be
# gathering the 25 shifted windows inside the kernel from a VMEM-resident
# padded image so conv1 becomes compute-bound at large batch.
def _im2col_pool_phases(x, kh, kw, k_pad):
    """x: (N, H, W, C).  Returns (4, N*PH*PW, k_pad) patches, PH, PW, where the
    leading axis enumerates the 4 positions of each 2x2 pool window."""
    N, H, W, C = x.shape
    OH, OW = H - kh + 1, W - kw + 1
    assert OH % 2 == 0 and OW % 2 == 0, "2x2/2 max-pool needs even conv output"
    cols = [x[:, i:i + OH, j:j + OW, :] for i in range(kh) for j in range(kw)]
    pat = jnp.concatenate(cols, axis=-1)       # (N, OH, OW, kh*kw*C) inner (i,j,c)
    PH, PW = OH // 2, OW // 2
    ph = jnp.stack([pat[:, 0::2, 0::2], pat[:, 0::2, 1::2],
                    pat[:, 1::2, 0::2], pat[:, 1::2, 1::2]], axis=0)
    ph = ph.reshape(4, N * PH * PW, kh * kw * C)
    K = kh * kw * C
    if k_pad > K:
        ph = jnp.pad(ph, ((0, 0), (0, 0), (0, k_pad - K)))
    return ph, PH, PW


# ----------------------------------------------------------------------------
# Parameters (PyTorch-style init) + one-time packing
# ----------------------------------------------------------------------------
def init_params(key):
    ks = jax.random.split(key, 10)

    def u(k, shape, fan_in):
        bound = 1.0 / jnp.sqrt(fan_in)
        return jax.random.uniform(k, shape, jnp.float32, -bound, bound)

    return {
        "conv1_w": u(ks[0], (6, 1, 5, 5), 1 * 5 * 5),
        "conv1_b": u(ks[1], (6,), 1 * 5 * 5),
        "conv2_w": u(ks[2], (16, 6, 5, 5), 6 * 5 * 5),
        "conv2_b": u(ks[3], (16,), 6 * 5 * 5),
        "fc1_w": u(ks[4], (120, 400), 400),   # torch Linear: (out, in)
        "fc1_b": u(ks[5], (120,), 400),
        "fc2_w": u(ks[6], (84, 120), 120),
        "fc2_b": u(ks[7], (84,), 120),
        "fc3_w": u(ks[8], (10, 84), 84),
        "fc3_b": u(ks[9], (10,), 84),
    }


def pack_params(p):
    """One-time packing: (K, N) matmul layout, K padded to a multiple of 8,
    output dim padded to 128 lanes (zero padding -> numerics unchanged)."""
    def pad2(a, rows, cols):
        a = a.astype(jnp.float32)
        return jnp.pad(a, ((0, rows - a.shape[0]), (0, cols - a.shape[1])))

    def pack_conv(w, b):
        cout, cin, kh, kw = w.shape
        k = kh * kw * cin
        # match patch inner layout (kh, kw, cin)
        wm = w.transpose(0, 2, 3, 1).reshape(cout, k).T        # (K, Cout)
        return pad2(wm, _round_up(k, 8), LANE), pad2(b.reshape(1, cout), 1, LANE)

    def pack_fc(w, b, k_pad):
        out_f, _ = w.shape
        return pad2(w.T, k_pad, LANE), pad2(b.reshape(1, out_f), 1, LANE)

    c1w, c1b = pack_conv(p["conv1_w"], p["conv1_b"])
    c2w, c2b = pack_conv(p["conv2_w"], p["conv2_b"])
    # fc1 consumes the NHWC-flattened (5,5,16) activation: permute torch's
    # (C,H,W) input ordering to (H,W,C) once, here.
    f1 = p["fc1_w"].reshape(120, 16, 5, 5).transpose(0, 2, 3, 1).reshape(120, 400)
    f1w, f1b = pack_fc(f1, p["fc1_b"], _round_up(400, 8))
    # fc2/fc3 consume the lane-padded (..., 128) hidden activations.
    f2w, f2b = pack_fc(p["fc2_w"], p["fc2_b"], LANE)
    f3w, f3b = pack_fc(p["fc3_w"], p["fc3_b"], LANE)
    return {"conv1_w": c1w, "conv1_b": c1b, "conv2_w": c2w, "conv2_b": c2b,
            "fc1_w": f1w, "fc1_b": f1b, "fc2_w": f2w, "fc2_b": f2b,
            "fc3_w": f3w, "fc3_b": f3b}


# ----------------------------------------------------------------------------
# LeNet5 forward
# ----------------------------------------------------------------------------
@jax.jit
def lenet5_forward(img_nchw, packed):
    N = img_nchw.shape[0]
    x = jnp.transpose(img_nchw, (0, 2, 3, 1))          # NHWC (C=1 -> free reshape)
    # conv1 (pad=2) + ReLU + 2x2 pool : (N,28,28,1) -> (N*14*14, 128 lanes)
    xp = jnp.pad(x, ((0, 0), (2, 2), (2, 2), (0, 0)))
    ph1, PH1, PW1 = _im2col_pool_phases(xp, 5, 5, packed["conv1_w"].shape[0])
    y1 = conv_relu_pool(ph1, packed["conv1_w"], packed["conv1_b"])
    a1 = y1.reshape(N, PH1, PW1, LANE)[..., :6]        # (N,14,14,6)
    # conv2 (pad=0) + ReLU + 2x2 pool : -> (N*5*5, 128 lanes)
    ph2, PH2, PW2 = _im2col_pool_phases(a1, 5, 5, packed["conv2_w"].shape[0])
    y2 = conv_relu_pool(ph2, packed["conv2_w"], packed["conv2_b"])
    a2 = y2.reshape(N, PH2, PW2, LANE)[..., :16].reshape(N, PH2 * PW2 * 16)
    # fused fc1 -> fc2 -> fc3 (bias / ReLU inside the kernel)
    logits = fc_chain(a2, packed["fc1_w"], packed["fc1_b"],
                      packed["fc2_w"], packed["fc2_b"],
                      packed["fc3_w"], packed["fc3_b"])   # (N, 128)
    return logits[:, :10]


# ----------------------------------------------------------------------------
# Pure-JAX reference (for a numerical sanity check)
# ----------------------------------------------------------------------------
def _reference_forward(img, p):
    hp = jax.lax.Precision.HIGHEST
    dn = ("NCHW", "OIHW", "NCHW")
    x = jax.lax.conv_general_dilated(img, p["conv1_w"], (1, 1), ((2, 2), (2, 2)),
                                     dimension_numbers=dn, precision=hp)
    x = jax.nn.relu(x + p["conv1_b"][None, :, None, None])
    n, c, h, w = x.shape
    x = x.reshape(n, c, h // 2, 2, w // 2, 2).max(axis=(3, 5))
    x = jax.lax.conv_general_dilated(x, p["conv2_w"], (1, 1), ((0, 0), (0, 0)),
                                     dimension_numbers=dn, precision=hp)
    x = jax.nn.relu(x + p["conv2_b"][None, :, None, None])
    n, c, h, w = x.shape
    x = x.reshape(n, c, h // 2, 2, w // 2, 2).max(axis=(3, 5))
    x = x.reshape(n, -1)                               # torch .view (CHW order)
    x = jax.nn.relu(jnp.dot(x, p["fc1_w"].T, precision=hp) + p["fc1_b"])
    x = jax.nn.relu(jnp.dot(x, p["fc2_w"].T, precision=hp) + p["fc2_b"])
    return jnp.dot(x, p["fc3_w"].T, precision=hp) + p["fc3_b"]


if __name__ == "__main__":
    key = jax.random.PRNGKey(0)
    k_img, k_param = jax.random.split(key)
    img = jax.random.normal(k_img, (2, 1, 28, 28), dtype=jnp.float32)
    params = init_params(k_param)
    packed = pack_params(params)                       # one-time weight packing

    out = lenet5_forward(img, packed)
    out = jax.block_until_ready(out)
    assert out.shape == (2, 10) and out.dtype == jnp.float32

    ref = _reference_forward(img, params)
    assert jnp.allclose(out, ref, atol=2e-2, rtol=2e-2), (
        "max abs diff = %f" % float(jnp.max(jnp.abs(out - ref))))
    print("KERNEL_OK")
</pallas_src>

<mosaic_0001>
module attributes {stable_mosaic.version = 11 : i64} {
  func.func @_conv_bias_relu_pool_kernel(%arg0: i32, %arg1: memref<4x392x32xf32, #tpu.memory_space<vmem>>, %arg2: memref<32x128xf32, #tpu.memory_space<vmem>>, %arg3: memref<1x128xf32, #tpu.memory_space<vmem>>, %arg4: memref<392x128xf32, #tpu.memory_space<vmem>>) attributes {dimension_semantics = [#tpu.dimension_semantics<parallel>], iteration_bounds = array<i64: 1>, scalar_prefetch = 0 : i64, scratch_operands = 0 : i64, tpu.core_type = #tpu.core_type<tc>, window_params = [{transform_indices = @transform_0, window_bounds = array<i64: 4, 392, 32>}, {pipeline_mode = #tpu.pipeline_mode<synchronous>, transform_indices = @transform_1, window_bounds = array<i64: 32, 128>}, {pipeline_mode = #tpu.pipeline_mode<synchronous>, transform_indices = @transform_2, window_bounds = array<i64: 1, 128>}, {transform_indices = @transform_3, window_bounds = array<i64: 392, 128>}]} {
    %c0 = arith.constant 0 : index
    %c0_0 = arith.constant 0 : index
    %0 = vector.load %arg2[%c0, %c0_0] : memref<32x128xf32, #tpu.memory_space<vmem>>, vector<32x128xf32>
    %c0_1 = arith.constant 0 : index
    %c0_2 = arith.constant 0 : index
    %c0_3 = arith.constant 0 : index
    %1 = vector.load %arg1[%c0_1, %c0_2, %c0_3] : memref<4x392x32xf32, #tpu.memory_space<vmem>>, vector<1x392x32xf32>
    %2 = vector.shape_cast %1 : vector<1x392x32xf32> to vector<392x32xf32>
    %cst = arith.constant dense<0.000000e+00> : vector<392x128xf32>
    %3 = tpu.matmul %2, %0, %cst {dimension_numbers = #tpu.dot_dimension_numbers<[1], [0], [0], [1], [0, 0, 1, 1], [], []>} : vector<392x32xf32>, vector<32x128xf32>, vector<392x128xf32> -> vector<392x128xf32>
    %c1 = arith.constant 1 : index
    %c0_4 = arith.constant 0 : index
    %c0_5 = arith.constant 0 : index
    %4 = vector.load %arg1[%c1, %c0_4, %c0_5] : memref<4x392x32xf32, #tpu.memory_space<vmem>>, vector<1x392x32xf32>
    %5 = vector.shape_cast %4 : vector<1x392x32xf32> to vector<392x32xf32>
    %cst_6 = arith.constant dense<0.000000e+00> : vector<392x128xf32>
    %6 = tpu.matmul %5, %0, %cst_6 {dimension_numbers = #tpu.dot_dimension_numbers<[1], [0], [0], [1], [0, 0, 1, 1], [], []>} : vector<392x32xf32>, vector<32x128xf32>, vector<392x128xf32> -> vector<392x128xf32>
    %7 = arith.maximumf %3, %6 : vector<392x128xf32>
    %c2 = arith.constant 2 : index
    %c0_7 = arith.constant 0 : index
    %c0_8 = arith.constant 0 : index
    %8 = vector.load %arg1[%c2, %c0_7, %c0_8] : memref<4x392x32xf32, #tpu.memory_space<vmem>>, vector<1x392x32xf32>
    %9 = vector.shape_cast %8 : vector<1x392x32xf32> to vector<392x32xf32>
    %cst_9 = arith.constant dense<0.000000e+00> : vector<392x128xf32>
    %10 = tpu.matmul %9, %0, %cst_9 {dimension_numbers = #tpu.dot_dimension_numbers<[1], [0], [0], [1], [0, 0, 1, 1], [], []>} : vector<392x32xf32>, vector<32x128xf32>, vector<392x128xf32> -> vector<392x128xf32>
    %11 = arith.maximumf %7, %10 : vector<392x128xf32>
    %c3 = arith.constant 3 : index
    %c0_10 = arith.constant 0 : index
    %c0_11 = arith.constant 0 : index
    %12 = vector.load %arg1[%c3, %c0_10, %c0_11] : memref<4x392x32xf32, #tpu.memory_space<vmem>>, vector<1x392x32xf32>
    %13 = vector.shape_cast %12 : vector<1x392x32xf32> to vector<392x32xf32>
    %cst_12 = arith.constant dense<0.000000e+00> : vector<392x128xf32>
    %14 = tpu.matmul %13, %0, %cst_12 {dimension_numbers = #tpu.dot_dimension_numbers<[1], [0], [0], [1], [0, 0, 1, 1], [], []>} : vector<392x32xf32>, vector<32x128xf32>, vector<392x128xf32> -> vector<392x128xf32>
    %15 = arith.maximumf %11, %14 : vector<392x128xf32>
    %c0_13 = arith.constant 0 : index
    %c0_14 = arith.constant 0 : index
    %16 = vector.load %arg3[%c0_13, %c0_14] : memref<1x128xf32, #tpu.memory_space<vmem>>, vector<1x128xf32>
    %17 = vector.broadcast %16 : vector<1x128xf32> to vector<392x128xf32>
    %18 = arith.addf %15, %17 : vector<392x128xf32>
    %cst_15 = arith.constant 0.000000e+00 : f32
    %19 = vector.broadcast %cst_15 : f32 to vector<392x128xf32>
    %20 = arith.maximumf %18, %19 : vector<392x128xf32>
    %c0_16 = arith.constant 0 : index
    %c0_17 = arith.constant 0 : index
    %21 = vector.load %arg4[%c0_16, %c0_17] : memref<392x128xf32, #tpu.memory_space<vmem>>, vector<392x128xf32>
    tpu.vector_store %arg4[%c0_16, %c0_17], %20 {strides = array<i32>} : memref<392x128xf32, #tpu.memory_space<vmem>>, vector<392x128xf32>,
    return
  }
  func.func @transform_0(%arg0: i32) -> (i32, i32, i32) {
    %c0_i32 = arith.constant 0 : i32
    %c0_i32_0 = arith.constant 0 : i32
    %c0_i32_1 = arith.constant 0 : i32
    return %c0_i32, %arg0, %c0_i32_0 : i32, i32, i32
  }
  func.func @transform_1(%arg0: i32) -> (i32, i32) {
    %c0_i32 = arith.constant 0 : i32
    %c0_i32_0 = arith.constant 0 : i32
    %c0_i32_1 = arith.constant 0 : i32
    return %c0_i32, %c0_i32_0 : i32, i32
  }
  func.func @transform_2(%arg0: i32) -> (i32, i32) {
    %c0_i32 = arith.constant 0 : i32
    %c0_i32_0 = arith.constant 0 : i32
    %c0_i32_1 = arith.constant 0 : i32
    return %c0_i32, %c0_i32_0 : i32, i32
  }
  func.func @transform_3(%arg0: i32) -> (i32, i32) {
    %c0_i32 = arith.constant 0 : i32
    %c0_i32_0 = arith.constant 0 : i32
    return %arg0, %c0_i32 : i32, i32
  }
}

module attributes {stable_mosaic.version = 11 : i64} {
  func.func @_conv_bias_relu_pool_kernel(%arg0: i32, %arg1: memref<4x50x152xf32, #tpu.memory_space<vmem>>, %arg2: memref<152x128xf32, #tpu.memory_space<vmem>>, %arg3: memref<1x128xf32, #tpu.memory_space<vmem>>, %arg4: memref<50x128xf32, #tpu.memory_space<vmem>>) attributes {dimension_semantics = [#tpu.dimension_semantics<parallel>], iteration_bounds = array<i64: 1>, scalar_prefetch = 0 : i64, scratch_operands = 0 : i64, tpu.core_type = #tpu.core_type<tc>, window_params = [{transform_indices = @transform_0, window_bounds = array<i64: 4, 50, 152>}, {pipeline_mode = #tpu.pipeline_mode<synchronous>, transform_indices = @transform_1, window_bounds = array<i64: 152, 128>}, {pipeline_mode = #tpu.pipeline_mode<synchronous>, transform_indices = @transform_2, window_bounds = array<i64: 1, 128>}, {transform_indices = @transform_3, window_bounds = array<i64: 50, 128>}]} {
    %c0 = arith.constant 0 : index
    %c0_0 = arith.constant 0 : index
    %0 = vector.load %arg2[%c0, %c0_0] : memref<152x128xf32, #tpu.memory_space<vmem>>, vector<152x128xf32>
    %c0_1 = arith.constant 0 : index
    %c0_2 = arith.constant 0 : index
    %c0_3 = arith.constant 0 : index
    %1 = vector.load %arg1[%c0_1, %c0_2, %c0_3] : memref<4x50x152xf32, #tpu.memory_space<vmem>>, vector<1x50x152xf32>
    %2 = vector.shape_cast %1 : vector<1x50x152xf32> to vector<50x152xf32>
    %cst = arith.constant dense<0.000000e+00> : vector<50x128xf32>
    %3 = tpu.matmul %2, %0, %cst {dimension_numbers = #tpu.dot_dimension_numbers<[1], [0], [0], [1], [0, 0, 1, 1], [], []>} : vector<50x152xf32>, vector<152x128xf32>, vector<50x128xf32> -> vector<50x128xf32>
    %c1 = arith.constant 1 : index
    %c0_4 = arith.constant 0 : index
    %c0_5 = arith.constant 0 : index
    %4 = vector.load %arg1[%c1, %c0_4, %c0_5] : memref<4x50x152xf32, #tpu.memory_space<vmem>>, vector<1x50x152xf32>
    %5 = vector.shape_cast %4 : vector<1x50x152xf32> to vector<50x152xf32>
    %cst_6 = arith.constant dense<0.000000e+00> : vector<50x128xf32>
    %6 = tpu.matmul %5, %0, %cst_6 {dimension_numbers = #tpu.dot_dimension_numbers<[1], [0], [0], [1], [0, 0, 1, 1], [], []>} : vector<50x152xf32>, vector<152x128xf32>, vector<50x128xf32> -> vector<50x128xf32>
    %7 = arith.maximumf %3, %6 : vector<50x128xf32>
    %c2 = arith.constant 2 : index
    %c0_7 = arith.constant 0 : index
    %c0_8 = arith.constant 0 : index
    %8 = vector.load %arg1[%c2, %c0_7, %c0_8] : memref<4x50x152xf32, #tpu.memory_space<vmem>>, vector<1x50x152xf32>
    %9 = vector.shape_cast %8 : vector<1x50x152xf32> to vector<50x152xf32>
    %cst_9 = arith.constant dense<0.000000e+00> : vector<50x128xf32>
    %10 = tpu.matmul %9, %0, %cst_9 {dimension_numbers = #tpu.dot_dimension_numbers<[1], [0], [0], [1], [0, 0, 1, 1], [], []>} : vector<50x152xf32>, vector<152x128xf32>, vector<50x128xf32> -> vector<50x128xf32>
    %11 = arith.maximumf %7, %10 : vector<50x128xf32>
    %c3 = arith.constant 3 : index
    %c0_10 = arith.constant 0 : index
    %c0_11 = arith.constant 0 : index
    %12 = vector.load %arg1[%c3, %c0_10, %c0_11] : memref<4x50x152xf32, #tpu.memory_space<vmem>>, vector<1x50x152xf32>
    %13 = vector.shape_cast %12 : vector<1x50x152xf32> to vector<50x152xf32>
    %cst_12 = arith.constant dense<0.000000e+00> : vector<50x128xf32>
    %14 = tpu.matmul %13, %0, %cst_12 {dimension_numbers = #tpu.dot_dimension_numbers<[1], [0], [0], [1], [0, 0, 1, 1], [], []>} : vector<50x152xf32>, vector<152x128xf32>, vector<50x128xf32> -> vector<50x128xf32>
    %15 = arith.maximumf %11, %14 : vector<50x128xf32>
    %c0_13 = arith.constant 0 : index
    %c0_14 = arith.constant 0 : index
    %16 = vector.load %arg3[%c0_13, %c0_14] : memref<1x128xf32, #tpu.memory_space<vmem>>, vector<1x128xf32>
    %17 = vector.broadcast %16 : vector<1x128xf32> to vector<50x128xf32>
    %18 = arith.addf %15, %17 : vector<50x128xf32>
    %cst_15 = arith.constant 0.000000e+00 : f32
    %19 = vector.broadcast %cst_15 : f32 to vector<50x128xf32>
    %20 = arith.maximumf %18, %19 : vector<50x128xf32>
    %c0_16 = arith.constant 0 : index
    %c0_17 = arith.constant 0 : index
    %21 = vector.load %arg4[%c0_16, %c0_17] : memref<50x128xf32, #tpu.memory_space<vmem>>, vector<50x128xf32>
    tpu.vector_store %arg4[%c0_16, %c0_17], %20 {strides = array<i32>} : memref<50x128xf32, #tpu.memory_space<vmem>>, vector<50x128xf32>,
    return
  }
  func.func @transform_0(%arg0: i32) -> (i32, i32, i32) {
    %c0_i32 = arith.constant 0 : i32
    %c0_i32_0 = arith.constant 0 : i32
    %c0_i32_1 = arith.constant 0 : i32
    return %c0_i32, %arg0, %c0_i32_0 : i32, i32, i32
  }
  func.func @transform_1(%arg0: i32) -> (i32, i32) {
    %c0_i32 = arith.constant 0 : i32
    %c0_i32_0 = arith.constant 0 : i32
    %c0_i32_1 = arith.constant 0 : i32
    return %c0_i32, %c0_i32_0 : i32, i32
  }
  func.func @transform_2(%arg0: i32) -> (i32, i32) {
    %c0_i32 = arith.constant 0 : i32
    %c0_i32_0 = arith.constant 0 : i32
    %c0_i32_1 = arith.constant 0 : i32
    return %c0_i32, %c0_i32_0 : i32, i32
  }
  func.func @transform_3(%arg0: i32) -> (i32, i32) {
    %c0_i32 = arith.constant 0 : i32
    %c0_i32_0 = arith.constant 0 : i32
    return %arg0, %c0_i32 : i32, i32
  }
}

module attributes {stable_mosaic.version = 11 : i64} {
  func.func @_fc_chain_kernel(%arg0: i32, %arg1: memref<8x400xf32, #tpu.memory_space<vmem>>, %arg2: memref<400x128xf32, #tpu.memory_space<vmem>>, %arg3: memref<1x128xf32, #tpu.memory_space<vmem>>, %arg4: memref<128x128xf32, #tpu.memory_space<vmem>>, %arg5: memref<1x128xf32, #tpu.memory_space<vmem>>, %arg6: memref<128x128xf32, #tpu.memory_space<vmem>>, %arg7: memref<1x128xf32, #tpu.memory_space<vmem>>, %arg8: memref<8x128xf32, #tpu.memory_space<vmem>>) attributes {dimension_semantics = [#tpu.dimension_semantics<parallel>], iteration_bounds = array<i64: 1>, scalar_prefetch = 0 : i64, scratch_operands = 0 : i64, tpu.core_type = #tpu.core_type<tc>, window_params = [{transform_indices = @transform_0, window_bounds = array<i64: 8, 400>}, {pipeline_mode = #tpu.pipeline_mode<synchronous>, transform_indices = @transform_1, window_bounds = array<i64: 400, 128>}, {pipeline_mode = #tpu.pipeline_mode<synchronous>, transform_indices = @transform_2, window_bounds = array<i64: 1, 128>}, {pipeline_mode = #tpu.pipeline_mode<synchronous>, transform_indices = @transform_3, window_bounds = array<i64: 128, 128>}, {pipeline_mode = #tpu.pipeline_mode<synchronous>, transform_indices = @transform_4, window_bounds = array<i64: 1, 128>}, {pipeline_mode = #tpu.pipeline_mode<synchronous>, transform_indices = @transform_5, window_bounds = array<i64: 128, 128>}, {pipeline_mode = #tpu.pipeline_mode<synchronous>, transform_indices = @transform_6, window_bounds = array<i64: 1, 128>}, {transform_indices = @transform_7, window_bounds = array<i64: 8, 128>}]} {
    %c0 = arith.constant 0 : index
    %c0_0 = arith.constant 0 : index
    %0 = vector.load %arg1[%c0, %c0_0] : memref<8x400xf32, #tpu.memory_space<vmem>>, vector<8x400xf32>
    %c0_1 = arith.constant 0 : index
    %c0_2 = arith.constant 0 : index
    %1 = vector.load %arg2[%c0_1, %c0_2] : memref<400x128xf32, #tpu.memory_space<vmem>>, vector<400x128xf32>
    %cst = arith.constant dense<0.000000e+00> : vector<8x128xf32>
    %2 = tpu.matmul %0, %1, %cst {dimension_numbers = #tpu.dot_dimension_numbers<[1], [0], [0], [1], [0, 0, 1, 1], [], []>} : vector<8x400xf32>, vector<400x128xf32>, vector<8x128xf32> -> vector<8x128xf32>
    %c0_3 = arith.constant 0 : index
    %c0_4 = arith.constant 0 : index
    %3 = vector.load %arg3[%c0_3, %c0_4] : memref<1x128xf32, #tpu.memory_space<vmem>>, vector<1x128xf32>
    %4 = vector.broadcast %3 : vector<1x128xf32> to vector<8x128xf32>
    %5 = arith.addf %2, %4 : vector<8x128xf32>
    %cst_5 = arith.constant 0.000000e+00 : f32
    %6 = vector.broadcast %cst_5 : f32 to vector<8x128xf32>
    %7 = arith.maximumf %5, %6 : vector<8x128xf32>
    %c0_6 = arith.constant 0 : index
    %c0_7 = arith.constant 0 : index
    %8 = vector.load %arg4[%c0_6, %c0_7] : memref<128x128xf32, #tpu.memory_space<vmem>>, vector<128x128xf32>
    %cst_8 = arith.constant dense<0.000000e+00> : vector<8x128xf32>
    %9 = tpu.matmul %7, %8, %cst_8 {dimension_numbers = #tpu.dot_dimension_numbers<[1], [0], [0], [1], [0, 0, 1, 1], [], []>} : vector<8x128xf32>, vector<128x128xf32>, vector<8x128xf32> -> vector<8x128xf32>
    %c0_9 = arith.constant 0 : index
    %c0_10 = arith.constant 0 : index
    %10 = vector.load %arg5[%c0_9, %c0_10] : memref<1x128xf32, #tpu.memory_space<vmem>>, vector<1x128xf32>
    %11 = vector.broadcast %10 : vector<1x128xf32> to vector<8x128xf32>
    %12 = arith.addf %9, %11 : vector<8x128xf32>
    %cst_11 = arith.constant 0.000000e+00 : f32
    %13 = vector.broadcast %cst_11 : f32 to vector<8x128xf32>
    %14 = arith.maximumf %12, %13 : vector<8x128xf32>
    %c0_12 = arith.constant 0 : index
    %c0_13 = arith.constant 0 : index
    %15 = vector.load %arg6[%c0_12, %c0_13] : memref<128x128xf32, #tpu.memory_space<vmem>>, vector<128x128xf32>
    %cst_14 = arith.constant dense<0.000000e+00> : vector<8x128xf32>
    %16 = tpu.matmul %14, %15, %cst_14 {dimension_numbers = #tpu.dot_dimension_numbers<[1], [0], [0], [1], [0, 0, 1, 1], [], []>} : vector<8x128xf32>, vector<128x128xf32>, vector<8x128xf32> -> vector<8x128xf32>
    %c0_15 = arith.constant 0 : index
    %c0_16 = arith.constant 0 : index
    %17 = vector.load %arg7[%c0_15, %c0_16] : memref<1x128xf32, #tpu.memory_space<vmem>>, vector<1x128xf32>
    %18 = vector.broadcast %17 : vector<1x128xf32> to vector<8x128xf32>
    %19 = arith.addf %16, %18 : vector<8x128xf32>
    %c0_17 = arith.constant 0 : index
    %c0_18 = arith.constant 0 : index
    %20 = vector.load %arg8[%c0_17, %c0_18] : memref<8x128xf32, #tpu.memory_space<vmem>>, vector<8x128xf32>
    tpu.vector_store %arg8[%c0_17, %c0_18], %19 {strides = array<i32>} : memref<8x128xf32, #tpu.memory_space<vmem>>, vector<8x128xf32>,
    return
  }
  func.func @transform_0(%arg0: i32) -> (i32, i32) {
    %c0_i32 = arith.constant 0 : i32
    %c0_i32_0 = arith.constant 0 : i32
    return %arg0, %c0_i32 : i32, i32
  }
  func.func @transform_1(%arg0: i32) -> (i32, i32) {
    %c0_i32 = arith.constant 0 : i32
    %c0_i32_0 = arith.constant 0 : i32
    %c0_i32_1 = arith.constant 0 : i32
    return %c0_i32, %c0_i32_0 : i32, i32
  }
  func.func @transform_2(%arg0: i32) -> (i32, i32) {
    %c0_i32 = arith.constant 0 : i32
    %c0_i32_0 = arith.constant 0 : i32
    %c0_i32_1 = arith.constant 0 : i32
    return %c0_i32, %c0_i32_0 : i32, i32
  }
  func.func @transform_3(%arg0: i32) -> (i32, i32) {
    %c0_i32 = arith.constant 0 : i32
    %c0_i32_0 = arith.constant 0 : i32
    %c0_i32_1 = arith.constant 0 : i32
    return %c0_i32, %c0_i32_0 : i32, i32
  }
  func.func @transform_4(%arg0: i32) -> (i32, i32) {
    %c0_i32 = arith.constant 0 : i32
    %c0_i32_0 = arith.constant 0 : i32
    %c0_i32_1 = arith.constant 0 : i32
    return %c0_i32, %c0_i32_0 : i32, i32
  }
  func.func @transform_5(%arg0: i32) -> (i32, i32) {
    %c0_i32 = arith.constant 0 : i32
    %c0_i32_0 = arith.constant 0 : i32
    %c0_i32_1 = arith.constant 0 : i32
    return %c0_i32, %c0_i32_0 : i32, i32
  }
  func.func @transform_6(%arg0: i32) -> (i32, i32) {
    %c0_i32 = arith.constant 0 : i32
    %c0_i32_0 = arith.constant 0 : i32
    %c0_i32_1 = arith.constant 0 : i32
    return %c0_i32, %c0_i32_0 : i32, i32
  }
  func.func @transform_7(%arg0: i32) -> (i32, i32) {
    %c0_i32 = arith.constant 0 : i32
    %c0_i32_0 = arith.constant 0 : i32
    return %arg0, %c0_i32 : i32, i32
  }
}

</mosaic_0001>

<llo_original>
// kernel: lenet5_forward.3
$region0: #{lenet5_forward.3}
  #allocation0 [shape = 'u32[]', space=smem, size = 0x4, offset = 0x4, fixed_abs, tag = 'smem constant byte address 0x4 - core index']
  #allocation1 [shape = 'u32[144,128]{1,0:T(1,128)}', space=vmem, size = 0x12000, scoped, tag = 'internal scratch']
  %s0 = inlined_call_operand.vmem [shape: f32[4,392,32], index: 0, kind: input, shape index: {}]
  %s1 = inlined_call_operand.vmem [shape: f32[32,128], index: 1, kind: input, shape index: {}]
  %s2 = inlined_call_operand.vmem [shape: f32[1,128], index: 2, kind: input, shape index: {}]
  %s3 = inlined_call_operand.vmem [shape: f32[392,128], index: 3, kind: output, shape index: {}]
  %s4 = sld [smem:[#allocation0]]
  $region22: #{lenet5_forward.3} parent=0
    _
  %s6 = ssub.s32 1, %s4
  %s7 = scalar_select 0, %s6, %s4
  // Predicated region
  $region2: #{lenet5_forward.3} parent=0 // pred_check
    _
  $region3: #{lenet5_forward.3} parent=0 // pred_check_branch
    %9 = sbr.rel (0) target = $region5
  $region4: #{lenet5_forward.3} parent=0 // pred_region
    _
  $region5: #{lenet5_forward.3} parent=0 // pred_fallthru
    _
  // Predicated region
  $region6: #{lenet5_forward.3} parent=0 // pred_check
    _
  $region7: #{lenet5_forward.3} parent=0 // pred_check_branch
    %11 = sbr.rel (0) target = $region9
  $region8: #{lenet5_forward.3} parent=0 // pred_region
    _
  $region9: #{lenet5_forward.3} parent=0 // pred_fallthru
    _
  // Predicated region
  $region10: #{lenet5_forward.3} parent=0 // pred_check
    _
  $region11: #{lenet5_forward.3} parent=0 // pred_check_branch
    %13 = sbr.rel (0) target = $region13
  $region12: #{lenet5_forward.3} parent=0 // pred_region
    _
  $region13: #{lenet5_forward.3} parent=0 // pred_fallthru
    _
  %v14 = vld [vmem:[%s1] sm:$0xff]
  %v15 = vld [vmem:[%s1 + $0x8] sm:$0xff]
  %v16 = vld [vmem:[%s1 + $0x10] sm:$0xff]
  %v17 = vld [vmem:[%s1 + $0x18] sm:$0xff]
  %v18 = vld [vmem:[%s0] sm:$0xff]
  %v19 = vld [vmem:[%s0 + $0x8] sm:$0xff]
  %v20 = vld [vmem:[%s0 + $0x10] sm:$0xff]
  %v21 = vld [vmem:[%s0 + $0x18] sm:$0xff]
  %v22 = vld [vmem:[%s0 + $0x20] sm:$0xff]
  %v23 = vld [vmem:[%s0 + $0x28] sm:$0xff]
  %v24 = vld [vmem:[%s0 + $0x30] sm:$0xff]
  %v25 = vld [vmem:[%s0 + $0x38] sm:$0xff]
  %v26 = vld [vmem:[%s0 + $0x40] sm:$0xff]
  %v27 = vld [vmem:[%s0 + $0x48] sm:$0xff]
  %v28 = vld [vmem:[%s0 + $0x50] sm:$0xff]
  %v29 = vld [vmem:[%s0 + $0x58] sm:$0xff]
  %v30 = vld [vmem:[%s0 + $0x60] sm:$0xff]
  %v31 = vld [vmem:[%s0 + $0x68] sm:$0xff]
  %v32 = vld [vmem:[%s0 + $0x70] sm:$0xff]
  %v33 = vld [vmem:[%s0 + $0x78] sm:$0xff]
  %v34 = vld [vmem:[%s0 + $0x80] sm:$0xff]
  %v35 = vld [vmem:[%s0 + $0x88] sm:$0xff]
  %v36 = vld [vmem:[%s0 + $0x90] sm:$0xff]
  %v37 = vld [vmem:[%s0 + $0x98] sm:$0xff]
  %v38 = vld [vmem:[%s0 + $0xa0] sm:$0xff]
  %v39 = vld [vmem:[%s0 + $0xa8] sm:$0xff]
  %v40 = vld [vmem:[%s0 + $0xb0] sm:$0xff]
  %v41 = vld [vmem:[%s0 + $0xb8] sm:$0xff]
  %v42 = vld [vmem:[%s0 + $0xc0] sm:$0xff]
  %v43 = vld [vmem:[%s0 + $0xc8] sm:$0xff]
  %v44 = vld [vmem:[%s0 + $0xd0] sm:$0xff]
  %v45 = vld [vmem:[%s0 + $0xd8] sm:$0xff]
  %v46 = vld [vmem:[%s0 + $0xe0] sm:$0xff]
  %v47 = vld [vmem:[%s0 + $0xe8] sm:$0xff]
  %v48 = vld [vmem:[%s0 + $0xf0] sm:$0xff]
  %v49 = vld [vmem:[%s0 + $0xf8] sm:$0xff]
  %v50 = vld [vmem:[%s0 + $0x100] sm:$0xff]
  %v51 = vld [vmem:[%s0 + $0x108] sm:$0xff]
  %v52 = vld [vmem:[%s0 + $0x110] sm:$0xff]
  %v53 = vld [vmem:[%s0 + $0x118] sm:$0xff]
  %v54 = vld [vmem:[%s0 + $0x120] sm:$0xff]
  %v55 = vld [vmem:[%s0 + $0x128] sm:$0xff]
  %v56 = vld [vmem:[%s0 + $0x130] sm:$0xff]
  %v57 = vld [vmem:[%s0 + $0x138] sm:$0xff]
  %v58 = vld [vmem:[%s0 + $0x140] sm:$0xff]
  %v59 = vld [vmem:[%s0 + $0x148] sm:$0xff]
  %v60 = vld [vmem:[%s0 + $0x150] sm:$0xff]
  %v61 = vld [vmem:[%s0 + $0x158] sm:$0xff]
  %v62 = vld [vmem:[%s0 + $0x160] sm:$0xff]
  %v63 = vld [vmem:[%s0 + $0x168] sm:$0xff]
  %v64 = vld [vmem:[%s0 + $0x170] sm:$0xff]
  %v65 = vld [vmem:[%s0 + $0x178] sm:$0xff]
  %v66 = vld [vmem:[%s0 + $0x180] sm:$0xff]
  %vm67 = vcmask 261120
  %v69 = vsel %vm67, %v18, 0
  %v72 = vsel %vm67, %v19, 0
  %v75 = vsel %vm67, %v20, 0
  %v78 = vsel %vm67, %v21, 0
  %v81 = vsel %vm67, %v22, 0
  %v84 = vsel %vm67, %v23, 0
  %v87 = vsel %vm67, %v24, 0
  %v90 = vsel %vm67, %v25, 0
  %v93 = vsel %vm67, %v26, 0
  %v96 = vsel %vm67, %v27, 0
  %v99 = vsel %vm67, %v28, 0
  %v102 = vsel %vm67, %v29, 0
  %v105 = vsel %vm67, %v30, 0
  %v108 = vsel %vm67, %v31, 0
  %v111 = vsel %vm67, %v32, 0
  %v114 = vsel %vm67, %v33, 0
  %v117 = vsel %vm67, %v34, 0
  %v120 = vsel %vm67, %v35, 0
  %v123 = vsel %vm67, %v36, 0
  %v126 = vsel %vm67, %v37, 0
  %v129 = vsel %vm67, %v38, 0
  %v132 = vsel %vm67, %v39, 0
  %v135 = vsel %vm67, %v40, 0
  %v138 = vsel %vm67, %v41, 0
  %v141 = vsel %vm67, %v42, 0
  %v144 = vsel %vm67, %v43, 0
  %v147 = vsel %vm67, %v44, 0
  %v150 = vsel %vm67, %v45, 0
  %v153 = vsel %vm67, %v46, 0
  %v156 = vsel %vm67, %v47, 0
  %v159 = vsel %vm67, %v48, 0
  %v162 = vsel %vm67, %v49, 0
  %v165 = vsel %vm67, %v50, 0
  %v168 = vsel %vm67, %v51, 0
  %v171 = vsel %vm67, %v52, 0
  %v174 = vsel %vm67, %v53, 0
  %v177 = vsel %vm67, %v54, 0
  %v180 = vsel %vm67, %v55, 0
  %v183 = vsel %vm67, %v56, 0
  %v186 = vsel %vm67, %v57, 0
  %v189 = vsel %vm67, %v58, 0
  %v192 = vsel %vm67, %v59, 0
  %v195 = vsel %vm67, %v60, 0
  %v198 = vsel %vm67, %v61, 0
  %v201 = vsel %vm67, %v62, 0
  %v204 = vsel %vm67, %v63, 0
  %v207 = vsel %vm67, %v64, 0
  %v210 = vsel %vm67, %v65, 0
  %v213 = vsel %vm67, %v66, 0
  %215 = vmatprep.subr.mxu0 0.0
  %216 = vmatpush1.msra.mxu0 %v14
  %217 = vmatprep.subr.mxu0 0.0
  %218 = vmatpush1.msra.mxu0 %v15
  %219 = vmatprep.subr.mxu0 0.0
  %220 = vmatpush1.msra.mxu0 %v16
  %221 = vmatprep.subr.mxu0 0.0
  %222 = vmatpush1.msra.mxu0 %v17
  %223 = vmatprep.subr.mxu0 0.0
  %224 = vmatpush1.msra.mxu0 0.0
  %225 = vmatprep.subr.mxu0 0.0
  %226 = vmatpush1.msra.mxu0 0.0
  %227 = vmatprep.subr.mxu0 0.0
  %228 = vmatpush1.msra.mxu0 0.0
  %229 = vmatprep.subr.mxu0 0.0
  %230 = vmatpush1.msra.mxu0 0.0
  %231 = vmatprep.subr.mxu0 0.0
  %232 = vmatpush1.msra.mxu0 0.0
  %233 = vmatprep.subr.mxu0 0.0
  %234 = vmatpush1.msra.mxu0 0.0
  %235 = vmatprep.subr.mxu0 0.0
  %236 = vmatpush1.msra.mxu0 0.0
  %237 = vmatprep.subr.mxu0 0.0
  %238 = vmatpush1.msra.mxu0 0.0
  %239 = vmatprep.subr.mxu0 0.0
  %240 = vmatpush1.msra.mxu0 0.0
  %241 = vmatprep.subr.mxu0 0.0
  %242 = vmatpush1.msra.mxu0 0.0
  %243 = vmatprep.subr.mxu0 0.0
  %244 = vmatpush1.msra.mxu0 0.0
  %245 = vmatprep.subr.mxu0 0.0
  %246 = vmatpush1.msra.mxu0 0.0
  %247 = vmatprep.subr.mxu0 0.0
  %248 = vmatpush1.msra.mxu0 0.0
  %249 = vmatprep.subr.mxu0 0.0
  %250 = vmatpush1.msra.mxu0 0.0
  %251 = vmatprep.subr.mxu0 0.0
  %252 = vmatpush1.msra.mxu0 0.0
  %253 = vmatprep.subr.mxu0 0.0
  %254 = vmatpush1.msra.mxu0 0.0
  %255 = vmatprep.subr.mxu0 0.0
  %256 = vmatpush1.msra.mxu0 0.0
  %257 = vmatprep.subr.mxu0 0.0
  %258 = vmatpush1.msra.mxu0 0.0
  %259 = vmatprep.subr.mxu0 0.0
  %260 = vmatpush1.msra.mxu0 0.0
  %261 = vmatprep.subr.mxu0 0.0
  %262 = vmatpush1.msra.mxu0 0.0
  %263 = vmatprep.subr.mxu0 0.0
  %264 = vmatpush1.msra.mxu0 0.0
  %265 = vmatprep.subr.mxu0 0.0
  %266 = vmatpush1.msra.mxu0 0.0
  %267 = vmatprep.subr.mxu0 0.0
  %268 = vmatpush1.msra.mxu0 0.0
  %269 = vmatprep.subr.mxu0 0.0
  %270 = vmatpush1.msra.mxu0 0.0
  %271 = vmatprep.subr.mxu0 0.0
  %272 = vmatpush1.msra.mxu0 0.0
  %273 = vmatprep.subr.mxu0 0.0
  %274 = vmatpush1.msra.mxu0 0.0
  %275 = vmatprep.subr.mxu0 0.0
  %276 = vmatpush1.msra.mxu0 0.0
  %277 = vmatprep.subr.mxu0 0.0
  %278 = vmatpush1.msra.mxu0 0.0
  %279 = vmatprep.mubr.f32.mxu0 0.0
  %280 = vmatmul.mubr.f32.gmra.mrb[0].mxu0 %v69
  %v281 = vpop.f32.mrb[0].mxu0
  %v282 = vadd.f32 0.0, %v281
  %v283 = vpop.f32.mrb[0].mxu0
  %284 = vmatprep.mubr.f32.mxu0 0.0
  %285 = vmatmul.mubr.f32.gmra.mrb[0].mxu0 %v72
  %v286 = vpop.f32.mrb[0].mxu0
  %v287 = vadd.f32 0.0, %v286
  %v288 = vpop.f32.mrb[0].mxu0
  %289 = vmatprep.mubr.f32.mxu0 0.0
  %290 = vmatmul.mubr.f32.gmra.mrb[0].mxu0 %v75
  %v291 = vpop.f32.mrb[0].mxu0
  %v292 = vadd.f32 0.0, %v291
  %v293 = vpop.f32.mrb[0].mxu0
  %294 = vmatprep.mubr.f32.mxu0 0.0
  %295 = vmatmul.mubr.f32.gmra.mrb[0].mxu0 %v78
  %v296 = vpop.f32.mrb[0].mxu0
  %v297 = vadd.f32 0.0, %v296
  %v298 = vpop.f32.mrb[0].mxu0
  %299 = vmatprep.mubr.f32.mxu0 0.0
  %300 = vmatmul.mubr.f32.gmra.mrb[0].mxu0 %v81
  %v301 = vpop.f32.mrb[0].mxu0
  %v302 = vadd.f32 0.0, %v301
  %v303 = vpop.f32.mrb[0].mxu0
  %304 = vmatprep.mubr.f32.mxu0 0.0
  %305 = vmatmul.mubr.f32.gmra.mrb[0].mxu0 %v84
  %v306 = vpop.f32.mrb[0].mxu0
  %v307 = vadd.f32 0.0, %v306
  %v308 = vpop.f32.mrb[0].mxu0
  %309 = vmatprep.mubr.f32.mxu0 0.0
  %310 = vmatmul.mubr.f32.gmra.mrb[0].mxu0 %v87
  %v311 = vpop.f32.mrb[0].mxu0
  %v312 = vadd.f32 0.0, %v311
  %v313 = vpop.f32.mrb[0].mxu0
  %314 = vmatprep.mubr.f32.mxu0 0.0
  %315 = vmatmul.mubr.f32.gmra.mrb[0].mxu0 %v90
  %v316 = vpop.f32.mrb[0].mxu0
  %v317 = vadd.f32 0.0, %v316
  %v318 = vpop.f32.mrb[0].mxu0
  %319 = vmatprep.mubr.f32.mxu0 0.0
  %320 = vmatmul.mubr.f32.gmra.mrb[0].mxu0 %v93
  %v321 = vpop.f32.mrb[0].mxu0
  %v322 = vadd.f32 0.0, %v321
  %v323 = vpop.f32.mrb[0].mxu0
  %324 = vmatprep.mubr.f32.mxu0 0.0
  %325 = vmatmul.mubr.f32.gmra.mrb[0].mxu0 %v96
  %v326 = vpop.f32.mrb[0].mxu0
  %v327 = vadd.f32 0.0, %v326
  %v328 = vpop.f32.mrb[0].mxu0
  %329 = vmatprep.mubr.f32.mxu0 0.0
  %330 = vmatmul.mubr.f32.gmra.mrb[0].mxu0 %v99
  %v331 = vpop.f32.mrb[0].mxu0
  %v332 = vadd.f32 0.0, %v331
  %v333 = vpop.f32.mrb[0].mxu0
  %334 = vmatprep.mubr.f32.mxu0 0.0
  %335 = vmatmul.mubr.f32.gmra.mrb[0].mxu0 %v102
  %v336 = vpop.f32.mrb[0].mxu0
  %v337 = vadd.f32 0.0, %v336
  %v338 = vpop.f32.mrb[0].mxu0
  %339 = vmatprep.mubr.f32.mxu0 0.0
  %340 = vmatmul.mubr.f32.gmra.mrb[0].mxu0 %v105
  %v341 = vpop.f32.mrb[0].mxu0
  %v342 = vadd.f32 0.0, %v341
  %v343 = vpop.f32.mrb[0].mxu0
  %344 = vmatprep.mubr.f32.mxu0 0.0
  %345 = vmatmul.mubr.f32.gmra.mrb[0].mxu0 %v108
  %v346 = vpop.f32.mrb[0].mxu0
  %v347 = vadd.f32 0.0, %v346
  %v348 = vpop.f32.mrb[0].mxu0
  %349 = vmatprep.mubr.f32.mxu0 0.0
  %350 = vmatmul.mubr.f32.gmra.mrb[0].mxu0 %v111
  %v351 = vpop.f32.mrb[0].mxu0
  %v352 = vadd.f32 0.0, %v351
  %v353 = vpop.f32.mrb[0].mxu0
  %354 = vmatprep.mubr.f32.mxu0 0.0
  %355 = vmatmul.mubr.f32.gmra.mrb[0].mxu0 %v114
  %v356 = vpop.f32.mrb[0].mxu0
  %v357 = vadd.f32 0.0, %v356
  %v358 = vpop.f32.mrb[0].mxu0
  %359 = vmatprep.mubr.f32.mxu0 0.0
  %360 = vmatmul.mubr.f32.gmra.mrb[0].mxu0 %v117
  %v361 = vpop.f32.mrb[0].mxu0
  %v362 = vadd.f32 0.0, %v361
  %v363 = vpop.f32.mrb[0].mxu0
  %364 = vmatprep.mubr.f32.mxu0 0.0
  %365 = vmatmul.mubr.f32.gmra.mrb[0].mxu0 %v120
  %v366 = vpop.f32.mrb[0].mxu0
  %v367 = vadd.f32 0.0, %v366
  %v368 = vpop.f32.mrb[0].mxu0
  %369 = vmatprep.mubr.f32.mxu0 0.0
  %370 = vmatmul.mubr.f32.gmra.mrb[0].mxu0 %v123
  %v371 = vpop.f32.mrb[0].mxu0
  %v372 = vadd.f32 0.0, %v371
  %v373 = vpop.f32.mrb[0].mxu0
  %374 = vmatprep.mubr.f32.mxu0 0.0
  %375 = vmatmul.mubr.f32.gmra.mrb[0].mxu0 %v126
  %v376 = vpop.f32.mrb[0].mxu0
  %v377 = vadd.f32 0.0, %v376
  %v378 = vpop.f32.mrb[0].mxu0
  %379 = vmatprep.mubr.f32.mxu0 0.0
  %380 = vmatmul.mubr.f32.gmra.mrb[0].mxu0 %v129
  %v381 = vpop.f32.mrb[0].mxu0
  %v382 = vadd.f32 0.0, %v381
  %v383 = vpop.f32.mrb[0].mxu0
  %384 = vmatprep.mubr.f32.mxu0 0.0
  %385 = vmatmul.mubr.f32.gmra.mrb[0].mxu0 %v132
  %v386 = vpop.f32.mrb[0].mxu0
  %v387 = vadd.f32 0.0, %v386
  %v388 = vpop.f32.mrb[0].mxu0
  %389 = vmatprep.mubr.f32.mxu0 0.0
  %390 = vmatmul.mubr.f32.gmra.mrb[0].mxu0 %v135
  %v391 = vpop.f32.mrb[0].mxu0
  %v392 = vadd.f32 0.0, %v391
  %v393 = vpop.f32.mrb[0].mxu0
  %394 = vmatprep.mubr.f32.mxu0 0.0
  %395 = vmatmul.mubr.f32.gmra.mrb[0].mxu0 %v138
  %v396 = vpop.f32.mrb[0].mxu0
  %v397 = vadd.f32 0.0, %v396
  %v398 = vpop.f32.mrb[0].mxu0
  %399 = vmatprep.mubr.f32.mxu0 0.0
  %400 = vmatmul.mubr.f32.gmra.mrb[0].mxu0 %v141
  %v401 = vpop.f32.mrb[0].mxu0
  %v402 = vadd.f32 0.0, %v401
  %v403 = vpop.f32.mrb[0].mxu0
  %404 = vmatprep.mubr.f32.mxu0 0.0
  %405 = vmatmul.mubr.f32.gmra.mrb[0].mxu0 %v144
  %v406 = vpop.f32.mrb[0].mxu0
  %v407 = vadd.f32 0.0, %v406
  %v408 = vpop.f32.mrb[0].mxu0
  %409 = vmatprep.mubr.f32.mxu0 0.0
  %410 = vmatmul.mubr.f32.gmra.mrb[0].mxu0 %v147
  %v411 = vpop.f32.mrb[0].mxu0
  %v412 = vadd.f32 0.0, %v411
  %v413 = vpop.f32.mrb[0].mxu0
  %414 = vmatprep.mubr.f32.mxu0 0.0
  %415 = vmatmul.mubr.f32.gmra.mrb[0].mxu0 %v150
  %v416 = vpop.f32.mrb[0].mxu0
  %v417 = vadd.f32 0.0, %v416
  %v418 = vpop.f32.mrb[0].mxu0
  %419 = vmatprep.mubr.f32.mxu0 0.0
  %420 = vmatmul.mubr.f32.gmra.mrb[0].mxu0 %v153
  %v421 = vpop.f32.mrb[0].mxu0
  %v422 = vadd.f32 0.0, %v421
  %v423 = vpop.f32.mrb[0].mxu0
  %424 = vmatprep.mubr.f32.mxu0 0.0
  %425 = vmatmul.mubr.f32.gmra.mrb[0].mxu0 %v156
  %v426 = vpop.f32.mrb[0].mxu0
  %v427 = vadd.f32 0.0, %v426
  %v428 = vpop.f32.mrb[0].mxu0
  %429 = vmatprep.mubr.f32.mxu0 0.0
  %430 = vmatmul.mubr.f32.gmra.mrb[0].mxu0 %v159
  %v431 = vpop.f32.mrb[0].mxu0
  %v432 = vadd.f32 0.0, %v431
  %v433 = vpop.f32.mrb[0].mxu0
  %434 = vmatprep.mubr.f32.mxu0 0.0
  %435 = vmatmul.mubr.f32.gmra.mrb[0].mxu0 %v162
  %v436 = vpop.f32.mrb[0].mxu0
  %v437 = vadd.f32 0.0, %v436
  %v438 = vpop.f32.mrb[0].mxu0
  %439 = vmatprep.mubr.f32.mxu0 0.0
  %440 = vmatmul.mubr.f32.gmra.mrb[0].mxu0 %v165
  %v441 = vpop.f32.mrb[0].mxu0
  %v442 = vadd.f32 0.0, %v441
  %v443 = vpop.f32.mrb[0].mxu0
  %444 = vmatprep.mubr.f32.mxu0 0.0
  %445 = vmatmul.mubr.f32.gmra.mrb[0].mxu0 %v168
  %v446 = vpop.f32.mrb[0].mxu0
  %v447 = vadd.f32 0.0, %v446
  %v448 = vpop.f32.mrb[0].mxu0
  %449 = vmatprep.mubr.f32.mxu0 0.0
  %450 = vmatmul.mubr.f32.gmra.mrb[0].mxu0 %v171
  %v451 = vpop.f32.mrb[0].mxu0
  %v452 = vadd.f32 0.0, %v451
  %v453 = vpop.f32.mrb[0].mxu0
  %454 = vmatprep.mubr.f32.mxu0 0.0
  %455 = vmatmul.mubr.f32.gmra.mrb[0].mxu0 %v174
  %v456 = vpop.f32.mrb[0].mxu0
  %v457 = vadd.f32 0.0, %v456
  %v458 = vpop.f32.mrb[0].mxu0
  %459 = vmatprep.mubr.f32.mxu0 0.0
  %460 = vmatmul.mubr.f32.gmra.mrb[0].mxu0 %v177
  %v461 = vpop.f32.mrb[0].mxu0
  %v462 = vadd.f32 0.0, %v461
  %v463 = vpop.f32.mrb[0].mxu0
  %464 = vmatprep.mubr.f32.mxu0 0.0
  %465 = vmatmul.mubr.f32.gmra.mrb[0].mxu0 %v180
  %v466 = vpop.f32.mrb[0].mxu0
  %v467 = vadd.f32 0.0, %v466
  %v468 = vpop.f32.mrb[0].mxu0
  %469 = vmatprep.mubr.f32.mxu0 0.0
  %470 = vmatmul.mubr.f32.gmra.mrb[0].mxu0 %v183
  %v471 = vpop.f32.mrb[0].mxu0
  %v472 = vadd.f32 0.0, %v471
  %v473 = vpop.f32.mrb[0].mxu0
  %474 = vmatprep.mubr.f32.mxu0 0.0
  %475 = vmatmul.mubr.f32.gmra.mrb[0].mxu0 %v186
  %v476 = vpop.f32.mrb[0].mxu0
  %v477 = vadd.f32 0.0, %v476
  %v478 = vpop.f32.mrb[0].mxu0
  %479 = vmatprep.mubr.f32.mxu0 0.0
  %480 = vmatmul.mubr.f32.gmra.mrb[0].mxu0 %v189
  %v481 = vpop.f32.mrb[0].mxu0
  %v482 = vadd.f32 0.0, %v481
  %v483 = vpop.f32.mrb[0].mxu0
  %484 = vmatprep.mubr.f32.mxu0 0.0
  %485 = vmatmul.mubr.f32.gmra.mrb[0].mxu0 %v192
  %v486 = vpop.f32.mrb[0].mxu0
  %v487 = vadd.f32 0.0, %v486
  %v488 = vpop.f32.mrb[0].mxu0
  %489 = vmatprep.mubr.f32.mxu0 0.0
  %490 = vmatmul.mubr.f32.gmra.mrb[0].mxu0 %v195
  %v491 = vpop.f32.mrb[0].mxu0
  %v492 = vadd.f32 0.0, %v491
  %v493 = vpop.f32.mrb[0].mxu0
  %494 = vmatprep.mubr.f32.mxu0 0.0
  %495 = vmatmul.mubr.f32.gmra.mrb[0].mxu0 %v198
  %v496 = vpop.f32.mrb[0].mxu0
  %v497 = vadd.f32 0.0, %v496
  %v498 = vpop.f32.mrb[0].mxu0
  %499 = vmatprep.mubr.f32.mxu0 0.0
  %500 = vmatmul.mubr.f32.gmra.mrb[0].mxu0 %v201
  %v501 = vpop.f32.mrb[0].mxu0
  %v502 = vadd.f32 0.0, %v501
  %v503 = vpop.f32.mrb[0].mxu0
  %504 = vmatprep.mubr.f32.mxu0 0.0
  %505 = vmatmul.mubr.f32.gmra.mrb[0].mxu0 %v204
  %v506 = vpop.f32.mrb[0].mxu0
  %v507 = vadd.f32 0.0, %v506
  %v508 = vpop.f32.mrb[0].mxu0
  %509 = vmatprep.mubr.f32.mxu0 0.0
  %510 = vmatmul.mubr.f32.gmra.mrb[0].mxu0 %v207
  %v511 = vpop.f32.mrb[0].mxu0
  %v512 = vadd.f32 0.0, %v511
  %v513 = vpop.f32.mrb[0].mxu0
  %514 = vmatprep.mubr.f32.mxu0 0.0
  %515 = vmatmul.mubr.f32.gmra.mrb[0].mxu0 %v210
  %v516 = vpop.f32.mrb[0].mxu0
  %v517 = vadd.f32 0.0, %v516
  %v518 = vpop.f32.mrb[0].mxu0
  %519 = vmatprep.mubr.f32.mxu0 0.0
  %520 = vmatmul.mubr.f32.gmra.mrb[0].mxu0 %v213
  %v521 = vpop.f32.mrb[0].mxu0
  %v522 = vadd.f32 0.0, %v521
  %v523 = vpop.f32.mrb[0].mxu0
  %524 = vdwg.mxu0
  %s525 = scalar_lea.vmem %s0, 392
  %v526 = vld [vmem:[%s525] sm:$0xff]
  %v527 = vld [vmem:[%s525 + $0x8] sm:$0xff]
  %v528 = vld [vmem:[%s525 + $0x10] sm:$0xff]
  %v529 = vld [vmem:[%s525 + $0x18] sm:$0xff]
  %v530 = vld [vmem:[%s525 + $0x20] sm:$0xff]
  %v531 = vld [vmem:[%s525 + $0x28] sm:$0xff]
  %v532 = vld [vmem:[%s525 + $0x30] sm:$0xff]
  %v533 = vld [vmem:[%s525 + $0x38] sm:$0xff]
  %v534 = vld [vmem:[%s525 + $0x40] sm:$0xff]
  %v535 = vld [vmem:[%s525 + $0x48] sm:$0xff]
  %v536 = vld [vmem:[%s525 + $0x50] sm:$0xff]
  %v537 = vld [vmem:[%s525 + $0x58] sm:$0xff]
  %v538 = vld [vmem:[%s525 + $0x60] sm:$0xff]
  %v539 = vld [vmem:[%s525 + $0x68] sm:$0xff]
  %v540 = vld [vmem:[%s525 + $0x70] sm:$0xff]
  %v541 = vld [vmem:[%s525 + $0x78] sm:$0xff]
  %v542 = vld [vmem:[%s525 + $0x80] sm:$0xff]
  %v543 = vld [vmem:[%s525 + $0x88] sm:$0xff]
  %v544 = vld [vmem:[%s525 + $0x90] sm:$0xff]
  %v545 = vld [vmem:[%s525 + $0x98] sm:$0xff]
  %v546 = vld [vmem:[%s525 + $0xa0] sm:$0xff]
  %v547 = vld [vmem:[%s525 + $0xa8] sm:$0xff]
  %v548 = vld [vmem:[%s525 + $0xb0] sm:$0xff]
  %v549 = vld [vmem:[%s525 + $0xb8] sm:$0xff]
  %v550 = vld [vmem:[%s525 + $0xc0] sm:$0xff]
  %v551 = vld [vmem:[%s525 + $0xc8] sm:$0xff]
  %v552 = vld [vmem:[%s525 + $0xd0] sm:$0xff]
  %v553 = vld [vmem:[%s525 + $0xd8] sm:$0xff]
  %v554 = vld [vmem:[%s525 + $0xe0] sm:$0xff]
  %v555 = vld [vmem:[%s525 + $0xe8] sm:$0xff]
  %v556 = vld [vmem:[%s525 + $0xf0] sm:$0xff]
  %v557 = vld [vmem:[%s525 + $0xf8] sm:$0xff]
  %v558 = vld [vmem:[%s525 + $0x100] sm:$0xff]
  %v559 = vld [vmem:[%s525 + $0x108] sm:$0xff]
  %v560 = vld [vmem:[%s525 + $0x110] sm:$0xff]
  %v561 = vld [vmem:[%s525 + $0x118] sm:$0xff]
  %v562 = vld [vmem:[%s525 + $0x120] sm:$0xff]
  %v563 = vld [vmem:[%s525 + $0x128] sm:$0xff]
  %v564 = vld [vmem:[%s525 + $0x130] sm:$0xff]
  %v565 = vld [vmem:[%s525 + $0x138] sm:$0xff]
  %v566 = vld [vmem:[%s525 + $0x140] sm:$0xff]
  %v567 = vld [vmem:[%s525 + $0x148] sm:$0xff]
  %v568 = vld [vmem:[%s525 + $0x150] sm:$0xff]
  %v569 = vld [vmem:[%s525 + $0x158] sm:$0xff]
  %v570 = vld [vmem:[%s525 + $0x160] sm:$0xff]
  %v571 = vld [vmem:[%s525 + $0x168] sm:$0xff]
  %v572 = vld [vmem:[%s525 + $0x170] sm:$0xff]
  %v573 = vld [vmem:[%s525 + $0x178] sm:$0xff]
  %v574 = vld [vmem:[%s525 + $0x180] sm:$0xff]
  %v576 = vsel %vm67, %v526, 0
  %v579 = vsel %vm67, %v527, 0
  %v582 = vsel %vm67, %v528, 0
  %v585 = vsel %vm67, %v529, 0
  %v588 = vsel %vm67, %v530, 0
  %v591 = vsel %vm67, %v531, 0
  %v594 = vsel %vm67, %v532, 0
  %v597 = vsel %vm67, %v533, 0
  %v600 = vsel %vm67, %v534, 0
  %v603 = vsel %vm67, %v535, 0
  %v606 = vsel %vm67, %v536, 0
  %v609 = vsel %vm67, %v537, 0
  %v612 = vsel %vm67, %v538, 0
  %v615 = vsel %vm67, %v539, 0
  %v618 = vsel %vm67, %v540, 0
  %v621 = vsel %vm67, %v541, 0
  %v624 = vsel %vm67, %v542, 0
  %v627 = vsel %vm67, %v543, 0
  %v630 = vsel %vm67, %v544, 0
  %v633 = vsel %vm67, %v545, 0
  %v636 = vsel %vm67, %v546, 0
  %v639 = vsel %vm67, %v547, 0
  %v642 = vsel %vm67, %v548, 0
  %v645 = vsel %vm67, %v549, 0
  %v648 = vsel %vm67, %v550, 0
  %v651 = vsel %vm67, %v551, 0
  %v654 = vsel %vm67, %v552, 0
  %v657 = vsel %vm67, %v553, 0
  %v660 = vsel %vm67, %v554, 0
  %v663 = vsel %vm67, %v555, 0
  %v666 = vsel %vm67, %v556, 0
  %v669 = vsel %vm67, %v557, 0
  %v672 = vsel %vm67, %v558, 0
  %v675 = vsel %vm67, %v559, 0
  %v678 = vsel %vm67, %v560, 0
  %v681 = vsel %vm67, %v561, 0
  %v684 = vsel %vm67, %v562, 0
  %v687 = vsel %vm67, %v563, 0
  %v690 = vsel %vm67, %v564, 0
  %v693 = vsel %vm67, %v565, 0
  %v696 = vsel %vm67, %v566, 0
  %v699 = vsel %vm67, %v567, 0
  %v702 = vsel %vm67, %v568, 0
  %v705 = vsel %vm67, %v569, 0
  %v708 = vsel %vm67, %v570, 0
  %v711 = vsel %vm67, %v571, 0
  %v714 = vsel %vm67, %v572, 0
  %v717 = vsel %vm67, %v573, 0
  %v720 = vsel %vm67, %v574, 0
  %722 = vmatprep.subr.mxu0 0.0
  %723 = vmatpush1.msra.mxu0 %v14
  %724 = vmatprep.subr.mxu0 0.0
  %725 = vmatpush1.msra.mxu0 %v15
  %726 = vmatprep.subr.mxu0 0.0
  %727 = vmatpush1.msra.mxu0 %v16
  %728 = vmatprep.subr.mxu0 0.0
  %729 = vmatpush1.msra.mxu0 %v17
  %730 = vmatprep.subr.mxu0 0.0
  %731 = vmatpush1.msra.mxu0 0.0
  %732 = vmatprep.subr.mxu0 0.0
  %733 = vmatpush1.msra.mxu0 0.0
  %734 = vmatprep.subr.mxu0 0.0
  %735 = vmatpush1.msra.mxu0 0.0
  %736 = vmatprep.subr.mxu0 0.0
  %737 = vmatpush1.msra.mxu0 0.0
  %738 = vmatprep.subr.mxu0 0.0
  %739 = vmatpush1.msra.mxu0 0.0
  %740 = vmatprep.subr.mxu0 0.0
  %741 = vmatpush1.msra.mxu0 0.0
  %742 = vmatprep.subr.mxu0 0.0
  %743 = vmatpush1.msra.mxu0 0.0
  %744 = vmatprep.subr.mxu0 0.0
  %745 = vmatpush1.msra.mxu0 0.0
  %746 = vmatprep.subr.mxu0 0.0
  %747 = vmatpush1.msra.mxu0 0.0
  %748 = vmatprep.subr.mxu0 0.0
  %749 = vmatpush1.msra.mxu0 0.0
  %750 = vmatprep.subr.mxu0 0.0
  %751 = vmatpush1.msra.mxu0 0.0
  %752 = vmatprep.subr.mxu0 0.0
  %753 = vmatpush1.msra.mxu0 0.0
  %754 = vmatprep.subr.mxu0 0.0
  %755 = vmatpush1.msra.mxu0 0.0
  %756 = vmatprep.subr.mxu0 0.0
  %757 = vmatpush1.msra.mxu0 0.0
  %758 = vmatprep.subr.mxu0 0.0
  %759 = vmatpush1.msra.mxu0 0.0
  %760 = vmatprep.subr.mxu0 0.0
  %761 = vmatpush1.msra.mxu0 0.0
  %762 = vmatprep.subr.mxu0 0.0
  %763 = vmatpush1.msra.mxu0 0.0
  %764 = vmatprep.subr.mxu0 0.0
  %765 = vmatpush1.msra.mxu0 0.0
  %766 = vmatprep.subr.mxu0 0.0
  %767 = vmatpush1.msra.mxu0 0.0
  %768 = vmatprep.subr.mxu0 0.0
  %769 = vmatpush1.msra.mxu0 0.0
  %770 = vmatprep.subr.mxu0 0.0
  %771 = vmatpush1.msra.mxu0 0.0
  %772 = vmatprep.subr.mxu0 0.0
  %773 = vmatpush1.msra.mxu0 0.0
  %774 = vmatprep.subr.mxu0 0.0
  %775 = vmatpush1.msra.mxu0 0.0
  %776 = vmatprep.subr.mxu0 0.0
  %777 = vmatpush1.msra.mxu0 0.0
  %778 = vmatprep.subr.mxu0 0.0
  %779 = vmatpush1.msra.mxu0 0.0
  %780 = vmatprep.subr.mxu0 0.0
  %781 = vmatpush1.msra.mxu0 0.0
  %782 = vmatprep.subr.mxu0 0.0
  %783 = vmatpush1.msra.mxu0 0.0
  %784 = vmatprep.subr.mxu0 0.0
  %785 = vmatpush1.msra.mxu0 0.0
  %786 = vmatprep.mubr.f32.mxu0 0.0
  %787 = vmatmul.mubr.f32.gmra.mrb[0].mxu0 %v576
  %v788 = vpop.f32.mrb[0].mxu0
  %v789 = vadd.f32 0.0, %v788
  %v790 = vpop.f32.mrb[0].mxu0
  %791 = vmatprep.mubr.f32.mxu0 0.0
  %792 = vmatmul.mubr.f32.gmra.mrb[0].mxu0 %v579
  %v793 = vpop.f32.mrb[0].mxu0
  %v794 = vadd.f32 0.0, %v793
  %v795 = vpop.f32.mrb[0].mxu0
  %796 = vmatprep.mubr.f32.mxu0 0.0
  %797 = vmatmul.mubr.f32.gmra.mrb[0].mxu0 %v582
  %v798 = vpop.f32.mrb[0].mxu0
  %v799 = vadd.f32 0.0, %v798
  %v800 = vpop.f32.mrb[0].mxu0
  %801 = vmatprep.mubr.f32.mxu0 0.0
  %802 = vmatmul.mubr.f32.gmra.mrb[0].mxu0 %v585
  %v803 = vpop.f32.mrb[0].mxu0
  %v804 = vadd.f32 0.0, %v803
  %v805 = vpop.f32.mrb[0].mxu0
  %806 = vmatprep.mubr.f32.mxu0 0.0
  %807 = vmatmul.mubr.f32.gmra.mrb[0].mxu0 %v588
  %v808 = vpop.f32.mrb[0].mxu0
  %v809 = vadd.f32 0.0, %v808
  %v810 = vpop.f32.mrb[0].mxu0
  %811 = vmatprep.mubr.f32.mxu0 0.0
  %812 = vmatmul.mubr.f32.gmra.mrb[0].mxu0 %v591
  %v813 = vpop.f32.mrb[0].mxu0
  %v814 = vadd.f32 0.0, %v813
  %v815 = vpop.f32.mrb[0].mxu0
  %816 = vmatprep.mubr.f32.mxu0 0.0
  %817 = vmatmul.mubr.f32.gmra.mrb[0].mxu0 %v594
  %v818 = vpop.f32.mrb[0].mxu0
  %v819 = vadd.f32 0.0, %v818
  %v820 = vpop.f32.mrb[0].mxu0
  %821 = vmatprep.mubr.f32.mxu0 0.0
  %822 = vmatmul.mubr.f32.gmra.mrb[0].mxu0 %v597
  %v823 = vpop.f32.mrb[0].mxu0
  %v824 = vadd.f32 0.0, %v823
  %v825 = vpop.f32.mrb[0].mxu0
  %826 = vmatprep.mubr.f32.mxu0 0.0
  %827 = vmatmul.mubr.f32.gmra.mrb[0].mxu0 %v600
  %v828 = vpop.f32.mrb[0].mxu0
  %v829 = vadd.f32 0.0, %v828
  %v830 = vpop.f32.mrb[0].mxu0
  %831 = vmatprep.mubr.f32.mxu0 0.0
  %832 = vmatmul.mubr.f32.gmra.mrb[0].mxu0 %v603
  %v833 = vpop.f32.mrb[0].mxu0
  %v834 = vadd.f32 0.0, %v833
  %v835 = vpop.f32.mrb[0].mxu0
  %836 = vmatprep.mubr.f32.mxu0 0.0
  %837 = vmatmul.mubr.f32.gmra.mrb[0].mxu0 %v606
  %v838 = vpop.f32.mrb[0].mxu0
  %v839 = vadd.f32 0.0, %v838
  %v840 = vpop.f32.mrb[0].mxu0
  %841 = vmatprep.mubr.f32.mxu0 0.0
  %842 = vmatmul.mubr.f32.gmra.mrb[0].mxu0 %v609
  %v843 = vpop.f32.mrb[0].mxu0
  %v844 = vadd.f32 0.0, %v843
  %v845 = vpop.f32.mrb[0].mxu0
  %846 = vmatprep.mubr.f32.mxu0 0.0
  %847 = vmatmul.mubr.f32.gmra.mrb[0].mxu0 %v612
  %v848 = vpop.f32.mrb[0].mxu0
  %v849 = vadd.f32 0.0, %v848
  %v850 = vpop.f32.mrb[0].mxu0
  %851 = vmatprep.mubr.f32.mxu0 0.0
  %852 = vmatmul.mubr.f32.gmra.mrb[0].mxu0 %v615
  %v853 = vpop.f32.mrb[0].mxu0
  %v854 = vadd.f32 0.0, %v853
  %v855 = vpop.f32.mrb[0].mxu0
  %856 = vmatprep.mubr.f32.mxu0 0.0
  %857 = vmatmul.mubr.f32.gmra.mrb[0].mxu0 %v618
  %v858 = vpop.f32.mrb[0].mxu0
  %v859 = vadd.f32 0.0, %v858
  %v860 = vpop.f32.mrb[0].mxu0
  %861 = vmatprep.mubr.f32.mxu0 0.0
  %862 = vmatmul.mubr.f32.gmra.mrb[0].mxu0 %v621
  %v863 = vpop.f32.mrb[0].mxu0
  %v864 = vadd.f32 0.0, %v863
  %v865 = vpop.f32.mrb[0].mxu0
  %866 = vmatprep.mubr.f32.mxu0 0.0
  %867 = vmatmul.mubr.f32.gmra.mrb[0].mxu0 %v624
  %v868 = vpop.f32.mrb[0].mxu0
  %v869 = vadd.f32 0.0, %v868
  %v870 = vpop.f32.mrb[0].mxu0
  %871 = vmatprep.mubr.f32.mxu0 0.0
  %872 = vmatmul.mubr.f32.gmra.mrb[0].mxu0 %v627
  %v873 = vpop.f32.mrb[0].mxu0
  %v874 = vadd.f32 0.0, %v873
  %v875 = vpop.f32.mrb[0].mxu0
  %876 = vmatprep.mubr.f32.mxu0 0.0
  %877 = vmatmul.mubr.f32.gmra.mrb[0].mxu0 %v630
  %v878 = vpop.f32.mrb[0].mxu0
  %v879 = vadd.f32 0.0, %v878
  %v880 = vpop.f32.mrb[0].mxu0
  %881 = vmatprep.mubr.f32.mxu0 0.0
  %882 = vmatmul.mubr.f32.gmra.mrb[0].mxu0 %v633
  %v883 = vpop.f32.mrb[0].mxu0
  %v884 = vadd.f32 0.0, %v883
  %v885 = vpop.f32.mrb[0].mxu0
  %886 = vmatprep.mubr.f32.mxu0 0.0
  %887 = vmatmul.mubr.f32.gmra.mrb[0].mxu0 %v636
  %v888 = vpop.f32.mrb[0].mxu0
  %v889 = vadd.f32 0.0, %v888
  %v890 = vpop.f32.mrb[0].mxu0
  %891 = vmatprep.mubr.f32.mxu0 0.0
  %892 = vmatmul.mubr.f32.gmra.mrb[0].mxu0 %v639
  %v893 = vpop.f32.mrb[0].mxu0
  %v894 = vadd.f32 0.0, %v893
  %v895 = vpop.f32.mrb[0].mxu0
  %896 = vmatprep.mubr.f32.mxu0 0.0
  %897 = vmatmul.mubr.f32.gmra.mrb[0].mxu0 %v642
  %v898 = vpop.f32.mrb[0].mxu0
  %v899 = vadd.f32 0.0, %v898
  %v900 = vpop.f32.mrb[0].mxu0
  %901 = vmatprep.mubr.f32.mxu0 0.0
  %902 = vmatmul.mubr.f32.gmra.mrb[0].mxu0 %v645
  %v903 = vpop.f32.mrb[0].mxu0
  %v904 = vadd.f32 0.0, %v903
  %v905 = vpop.f32.mrb[0].mxu0
  %906 = vmatprep.mubr.f32.mxu0 0.0
  %907 = vmatmul.mubr.f32.gmra.mrb[0].mxu0 %v648
  %v908 = vpop.f32.mrb[0].mxu0
  %v909 = vadd.f32 0.0, %v908
  %v910 = vpop.f32.mrb[0].mxu0
  %911 = vmatprep.mubr.f32.mxu0 0.0
  %912 = vmatmul.mubr.f32.gmra.mrb[0].mxu0 %v651
  %v913 = vpop.f32.mrb[0].mxu0
  %v914 = vadd.f32 0.0, %v913
  %v915 = vpop.f32.mrb[0].mxu0
  %916 = vmatprep.mubr.f32.mxu0 0.0
  %917 = vmatmul.mubr.f32.gmra.mrb[0].mxu0 %v654
  %v918 = vpop.f32.mrb[0].mxu0
  %v919 = vadd.f32 0.0, %v918
  %v920 = vpop.f32.mrb[0].mxu0
  %921 = vmatprep.mubr.f32.mxu0 0.0
  %922 = vmatmul.mubr.f32.gmra.mrb[0].mxu0 %v657
  %v923 = vpop.f32.mrb[0].mxu0
  %v924 = vadd.f32 0.0, %v923
  %v925 = vpop.f32.mrb[0].mxu0
  %926 = vmatprep.mubr.f32.mxu0 0.0
  %927 = vmatmul.mubr.f32.gmra.mrb[0].mxu0 %v660
  %v928 = vpop.f32.mrb[0].mxu0
  %v929 = vadd.f32 0.0, %v928
  %v930 = vpop.f32.mrb[0].mxu0
  %931 = vmatprep.mubr.f32.mxu0 0.0
  %932 = vmatmul.mubr.f32.gmra.mrb[0].mxu0 %v663
  %v933 = vpop.f32.mrb[0].mxu0
  %v934 = vadd.f32 0.0, %v933
  %v935 = vpop.f32.mrb[0].mxu0
  %936 = vmatprep.mubr.f32.mxu0 0.0
  %937 = vmatmul.mubr.f32.gmra.mrb[0].mxu0 %v666
  %v938 = vpop.f32.mrb[0].mxu0
  %v939 = vadd.f32 0.0, %v938
  %v940 = vpop.f32.mrb[0].mxu0
  %941 = vmatprep.mubr.f32.mxu0 0.0
  %942 = vmatmul.mubr.f32.gmra.mrb[0].mxu0 %v669
  %v943 = vpop.f32.mrb[0].mxu0
  %v944 = vadd.f32 0.0, %v943
  %v945 = vpop.f32.mrb[0].mxu0
  %946 = vmatprep.mubr.f32.mxu0 0.0
  %947 = vmatmul.mubr.f32.gmra.mrb[0].mxu0 %v672
  %v948 = vpop.f32.mrb[0].mxu0
  %v949 = vadd.f32 0.0, %v948
  %v950 = vpop.f32.mrb[0].mxu0
  %951 = vmatprep.mubr.f32.mxu0 0.0
  %952 = vmatmul.mubr.f32.gmra.mrb[0].mxu0 %v675
  %v953 = vpop.f32.mrb[0].mxu0
  %v954 = vadd.f32 0.0, %v953
  %v955 = vpop.f32.mrb[0].mxu0
  %956 = vmatprep.mubr.f32.mxu0 0.0
  %957 = vmatmul.mubr.f32.gmra.mrb[0].mxu0 %v678
  %v958 = vpop.f32.mrb[0].mxu0
  %v959 = vadd.f32 0.0, %v958
  %v960 = vpop.f32.mrb[0].mxu0
  %961 = vmatprep.mubr.f32.mxu0 0.0
  %962 = vmatmul.mubr.f32.gmra.mrb[0].mxu0 %v681
  %v963 = vpop.f32.mrb[0].mxu0
  %v964 = vadd.f32 0.0, %v963
  %v965 = vpop.f32.mrb[0].mxu0
  %966 = vmatprep.mubr.f32.mxu0 0.0
  %967 = vmatmul.mubr.f32.gmra.mrb[0].mxu0 %v684
  %v968 = vpop.f32.mrb[0].mxu0
  %v969 = vadd.f32 0.0, %v968
  %v970 = vpop.f32.mrb[0].mxu0
  %971 = vmatprep.mubr.f32.mxu0 0.0
  %972 = vmatmul.mubr.f32.gmra.mrb[0].mxu0 %v687
  %v973 = vpop.f32.mrb[0].mxu0
  %v974 = vadd.f32 0.0, %v973
  %v975 = vpop.f32.mrb[0].mxu0
  %976 = vmatprep.mubr.f32.mxu0 0.0
  %977 = vmatmul.mubr.f32.gmra.mrb[0].mxu0 %v690
  %v978 = vpop.f32.mrb[0].mxu0
  %v979 = vadd.f32 0.0, %v978
  %v980 = vpop.f32.mrb[0].mxu0
  %981 = vmatprep.mubr.f32.mxu0 0.0
  %982 = vmatmul.mubr.f32.gmra.mrb[0].mxu0 %v693
  %v983 = vpop.f32.mrb[0].mxu0
  %v984 = vadd.f32 0.0, %v983
  %v985 = vpop.f32.mrb[0].mxu0
  %986 = vmatprep.mubr.f32.mxu0 0.0
  %987 = vmatmul.mubr.f32.gmra.mrb[0].mxu0 %v696
  %v988 = vpop.f32.mrb[0].mxu0
  %v989 = vadd.f32 0.0, %v988
  %v990 = vpop.f32.mrb[0].mxu0
  %991 = vmatprep.mubr.f32.mxu0 0.0
  %992 = vmatmul.mubr.f32.gmra.mrb[0].mxu0 %v699
  %v993 = vpop.f32.mrb[0].mxu0
  %v994 = vadd.f32 0.0, %v993
  %v995 = vpop.f32.mrb[0].mxu0
  %996 = vmatprep.mubr.f32.mxu0 0.0
  %997 = vmatmul.mubr.f32.gmra.mrb[0].mxu0 %v702
  %v998 = vpop.f32.mrb[0].mxu0
  %v999 = vadd.f32 0.0, %v998
  %v1000 = vpop.f32.mrb[0].mxu0
  %1001 = vmatprep.mubr.f32.mxu0 0.0
  %1002 = vmatmul.mubr.f32.gmra.mrb[0].mxu0 %v705
  %v1003 = vpop.f32.mrb[0].mxu0
  %v1004 = vadd.f32 0.0, %v1003
  %v1005 = vpop.f32.mrb[0].mxu0
  %1006 = vmatprep.mubr.f32.mxu0 0.0
  %1007 = vmatmul.mubr.f32.gmra.mrb[0].mxu0 %v708
  %v1008 = vpop.f32.mrb[0].mxu0
  %v1009 = vadd.f32 0.0, %v1008
  %v1010 = vpop.f32.mrb[0].mxu0
  %1011 = vmatprep.mubr.f32.mxu0 0.0
  %1012 = vmatmul.mubr.f32.gmra.mrb[0].mxu0 %v711
  %v1013 = vpop.f32.mrb[0].mxu0
  %v1014 = vadd.f32 0.0, %v1013
  %v1015 = vpop.f32.mrb[0].mxu0
  %1016 = vmatprep.mubr.f32.mxu0 0.0
  %1017 = vmatmul.mubr.f32.gmra.mrb[0].mxu0 %v714
  %v1018 = vpop.f32.mrb[0].mxu0
  %v1019 = vadd.f32 0.0, %v1018
  %v1020 = vpop.f32.mrb[0].mxu0
  %1021 = vmatprep.mubr.f32.mxu0 0.0
  %1022 = vmatmul.mubr.f32.gmra.mrb[0].mxu0 %v717
  %v1023 = vpop.f32.mrb[0].mxu0
  %v1024 = vadd.f32 0.0, %v1023
  %v1025 = vpop.f32.mrb[0].mxu0
  %1026 = vmatprep.mubr.f32.mxu0 0.0
  %1027 = vmatmul.mubr.f32.gmra.mrb[0].mxu0 %v720
  %v1028 = vpop.f32.mrb[0].mxu0
  %v1029 = vadd.f32 0.0, %v1028
  %v1030 = vpop.f32.mrb[0].mxu0
  %1031 = vdwg.mxu0
  %v1032 = vmax.f32 %v282, %v789
  %v1033 = vmax.f32 %v287, %v794
  %v1034 = vmax.f32 %v292, %v799
  %v1035 = vmax.f32 %v297, %v804
  %v1036 = vmax.f32 %v302, %v809
  %v1037 = vmax.f32 %v307, %v814
  %v1038 = vmax.f32 %v312, %v819
  %v1039 = vmax.f32 %v317, %v824
  %v1040 = vmax.f32 %v322, %v829
  %v1041 = vmax.f32 %v327, %v834
  %v1042 = vmax.f32 %v332, %v839
  %v1043 = vmax.f32 %v337, %v844
  %v1044 = vmax.f32 %v342, %v849
  %v1045 = vmax.f32 %v347, %v854
  %v1046 = vmax.f32 %v352, %v859
  %v1047 = vmax.f32 %v357, %v864
  %v1048 = vmax.f32 %v362, %v869
  %v1049 = vmax.f32 %v367, %v874
  %v1050 = vmax.f32 %v372, %v879
  %v1051 = vmax.f32 %v377, %v884
  %v1052 = vmax.f32 %v382, %v889
  %v1053 = vmax.f32 %v387, %v894
  %v1054 = vmax.f32 %v392, %v899
  %v1055 = vmax.f32 %v397, %v904
  %v1056 = vmax.f32 %v402, %v909
  %v1057 = vmax.f32 %v407, %v914
  %v1058 = vmax.f32 %v412, %v919
  %v1059 = vmax.f32 %v417, %v924
  %v1060 = vmax.f32 %v422, %v929
  %v1061 = vmax.f32 %v427, %v934
  %v1062 = vmax.f32 %v432, %v939
  %v1063 = vmax.f32 %v437, %v944
  %v1064 = vmax.f32 %v442, %v949
  %v1065 = vmax.f32 %v447, %v954
  %v1066 = vmax.f32 %v452, %v959
  %v1067 = vmax.f32 %v457, %v964
  %v1068 = vmax.f32 %v462, %v969
  %v1069 = vmax.f32 %v467, %v974
  %v1070 = vmax.f32 %v472, %v979
  %v1071 = vmax.f32 %v477, %v984
  %v1072 = vmax.f32 %v482, %v989
  %v1073 = vmax.f32 %v487, %v994
  %v1074 = vmax.f32 %v492, %v999
  %v1075 = vmax.f32 %v497, %v1004
  %v1076 = vmax.f32 %v502, %v1009
  %v1077 = vmax.f32 %v507, %v1014
  %v1078 = vmax.f32 %v512, %v1019
  %v1079 = vmax.f32 %v517, %v1024
  %v1080 = vmax.f32 %v522, %v1029
  %s1081 = scalar_lea.vmem %s0, 784
  %v1082 = vld [vmem:[%s1081] sm:$0xff]
  %v1083 = vld [vmem:[%s1081 + $0x8] sm:$0xff]
  %v1084 = vld [vmem:[%s1081 + $0x10] sm:$0xff]
  %v1085 = vld [vmem:[%s1081 + $0x18] sm:$0xff]
  %v1086 = vld [vmem:[%s1081 + $0x20] sm:$0xff]
  %v1087 = vld [vmem:[%s1081 + $0x28] sm:$0xff]
  %v1088 = vld [vmem:[%s1081 + $0x30] sm:$0xff]
  %v1089 = vld [vmem:[%s1081 + $0x38] sm:$0xff]
  %v1090 = vld [vmem:[%s1081 + $0x40] sm:$0xff]
  %v1091 = vld [vmem:[%s1081 + $0x48] sm:$0xff]
  %v1092 = vld [vmem:[%s1081 + $0x50] sm:$0xff]
  %v1093 = vld [vmem:[%s1081 + $0x58] sm:$0xff]
  %v1094 = vld [vmem:[%s1081 + $0x60] sm:$0xff]
  %v1095 = vld [vmem:[%s1081 + $0x68] sm:$0xff]
  %v1096 = vld [vmem:[%s1081 + $0x70] sm:$0xff]
  %v1097 = vld [vmem:[%s1081 + $0x78] sm:$0xff]
  %v1098 = vld [vmem:[%s1081 + $0x80] sm:$0xff]
  %v1099 = vld [vmem:[%s1081 + $0x88] sm:$0xff]
  %v1100 = vld [vmem:[%s1081 + $0x90] sm:$0xff]
  %v1101 = vld [vmem:[%s1081 + $0x98] sm:$0xff]
  %v1102 = vld [vmem:[%s1081 + $0xa0] sm:$0xff]
  %v1103 = vld [vmem:[%s1081 + $0xa8] sm:$0xff]
  %v1104 = vld [vmem:[%s1081 + $0xb0] sm:$0xff]
  %v1105 = vld [vmem:[%s1081 + $0xb8] sm:$0xff]
  %v1106 = vld [vmem:[%s1081 + $0xc0] sm:$0xff]
  %v1107 = vld [vmem:[%s1081 + $0xc8] sm:$0xff]
  %v1108 = vld [vmem:[%s1081 + $0xd0] sm:$0xff]
  %v1109 = vld [vmem:[%s1081 + $0xd8] sm:$0xff]
  %v1110 = vld [vmem:[%s1081 + $0xe0] sm:$0xff]
  %v1111 = vld [vmem:[%s1081 + $0xe8] sm:$0xff]
  %v1112 = vld [vmem:[%s1081 + $0xf0] sm:$0xff]
  %v1113 = vld [vmem:[%s1081 + $0xf8] sm:$0xff]
  %v1114 = vld [vmem:[%s1081 + $0x100] sm:$0xff]
  %v1115 = vld [vmem:[%s1081 + $0x108] sm:$0xff]
  %v1116 = vld [vmem:[%s1081 + $0x110] sm:$0xff]
  %v1117 = vld [vmem:[%s1081 + $0x118] sm:$0xff]
  %v1118 = vld [vmem:[%s1081 + $0x120] sm:$0xff]
  %v1119 = vld [vmem:[%s1081 + $0x128] sm:$0xff]
  %v1120 = vld [vmem:[%s1081 + $0x130] sm:$0xff]
  %v1121 = vld [vmem:[%s1081 + $0x138] sm:$0xff]
  %v1122 = vld [vmem:[%s1081 + $0x140] sm:$0xff]
  %v1123 = vld [vmem:[%s1081 + $0x148] sm:$0xff]
  %v1124 = vld [vmem:[%s1081 + $0x150] sm:$0xff]
  %v1125 = vld [vmem:[%s1081 + $0x158] sm:$0xff]
  %v1126 = vld [vmem:[%s1081 + $0x160] sm:$0xff]
  %v1127 = vld [vmem:[%s1081 + $0x168] sm:$0xff]
  %v1128 = vld [vmem:[%s1081 + $0x170] sm:$0xff]
  %v1129 = vld [vmem:[%s1081 + $0x178] sm:$0xff]
  %v1130 = vld [vmem:[%s1081 + $0x180] sm:$0xff]
  %v1132 = vsel %vm67, %v1082, 0
  %v1135 = vsel %vm67, %v1083, 0
  %v1138 = vsel %vm67, %v1084, 0
  %v1141 = vsel %vm67, %v1085, 0
  %v1144 = vsel %vm67, %v1086, 0
  %v1147 = vsel %vm67, %v1087, 0
  %v1150 = vsel %vm67, %v1088, 0
  %v1153 = vsel %vm67, %v1089, 0
  %v1156 = vsel %vm67, %v1090, 0
  %v1159 = vsel %vm67, %v1091, 0
  %v1162 = vsel %vm67, %v1092, 0
  %v1165 = vsel %vm67, %v1093, 0
  %v1168 = vsel %vm67, %v1094, 0
  %v1171 = vsel %vm67, %v1095, 0
  %v1174 = vsel %vm67, %v1096, 0
  %v1177 = vsel %vm67, %v1097, 0
  %v1180 = vsel %vm67, %v1098, 0
  %v1183 = vsel %vm67, %v1099, 0
  %v1186 = vsel %vm67, %v1100, 0
  %v1189 = vsel %vm67, %v1101, 0
  %v1192 = vsel %vm67, %v1102, 0
  %v1195 = vsel %vm67, %v1103, 0
  %v1198 = vsel %vm67, %v1104, 0
  %v1201 = vsel %vm67, %v1105, 0
  %v1204 = vsel %vm67, %v1106, 0
  %v1207 = vsel %vm67, %v1107, 0
  %v1210 = vsel %vm67, %v1108, 0
  %v1213 = vsel %vm67, %v1109, 0
  %v1216 = vsel %vm67, %v1110, 0
  %v1219 = vsel %vm67, %v1111, 0
  %v1222 = vsel %vm67, %v1112, 0
  %v1225 = vsel %vm67, %v1113, 0
  %v1228 = vsel %vm67, %v1114, 0
  %v1231 = vsel %vm67, %v1115, 0
  %v1234 = vsel %vm67, %v1116, 0
  %v1237 = vsel %vm67, %v1117, 0
  %v1240 = vsel %vm67, %v1118, 0
  %v1243 = vsel %vm67, %v1119, 0
  %v1246 = vsel %vm67, %v1120, 0
  %v1249 = vsel %vm67, %v1121, 0
  %v1252 = vsel %vm67, %v1122, 0
  %v1255 = vsel %vm67, %v1123, 0
  %v1258 = vsel %vm67, %v1124, 0
  %v1261 = vsel %vm67, %v1125, 0
  %v1264 = vsel %vm67, %v1126, 0
  %v1267 = vsel %vm67, %v1127, 0
  %v1270 = vsel %vm67, %v1128, 0
  %v1273 = vsel %vm67, %v1129, 0
  %v1276 = vsel %vm67, %v1130, 0
  %1278 = vmatprep.subr.mxu0 0.0
  %1279 = vmatpush1.msra.mxu0 %v14
  %1280 = vmatprep.subr.mxu0 0.0
  %1281 = vmatpush1.msra.mxu0 %v15
  %1282 = vmatprep.subr.mxu0 0.0
  %1283 = vmatpush1.msra.mxu0 %v16
  %1284 = vmatprep.subr.mxu0 0.0
  %1285 = vmatpush1.msra.mxu0 %v17
  %1286 = vmatprep.subr.mxu0 0.0
  %1287 = vmatpush1.msra.mxu0 0.0
  %1288 = vmatprep.subr.mxu0 0.0
  %1289 = vmatpush1.msra.mxu0 0.0
  %1290 = vmatprep.subr.mxu0 0.0
  %1291 = vmatpush1.msra.mxu0 0.0
  %1292 = vmatprep.subr.mxu0 0.0
  %1293 = vmatpush1.msra.mxu0 0.0
  %1294 = vmatprep.subr.mxu0 0.0
  %1295 = vmatpush1.msra.mxu0 0.0
  %1296 = vmatprep.subr.mxu0 0.0
  %1297 = vmatpush1.msra.mxu0 0.0
  %1298 = vmatprep.subr.mxu0 0.0
  %1299 = vmatpush1.msra.mxu0 0.0
  %1300 = vmatprep.subr.mxu0 0.0
  %1301 = vmatpush1.msra.mxu0 0.0
  %1302 = vmatprep.subr.mxu0 0.0
  %1303 = vmatpush1.msra.mxu0 0.0
  %1304 = vmatprep.subr.mxu0 0.0
  %1305 = vmatpush1.msra.mxu0 0.0
  %1306 = vmatprep.subr.mxu0 0.0
  %1307 = vmatpush1.msra.mxu0 0.0
  %1308 = vmatprep.subr.mxu0 0.0
  %1309 = vmatpush1.msra.mxu0 0.0
  %1310 = vmatprep.subr.mxu0 0.0
  %1311 = vmatpush1.msra.mxu0 0.0
  %1312 = vmatprep.subr.mxu0 0.0
  %1313 = vmatpush1.msra.mxu0 0.0
  %1314 = vmatprep.subr.mxu0 0.0
  %1315 = vmatpush1.msra.mxu0 0.0
  %1316 = vmatprep.subr.mxu0 0.0
  %1317 = vmatpush1.msra.mxu0 0.0
  %1318 = vmatprep.subr.mxu0 0.0
  %1319 = vmatpush1.msra.mxu0 0.0
  %1320 = vmatprep.subr.mxu0 0.0
  %1321 = vmatpush1.msra.mxu0 0.0
  %1322 = vmatprep.subr.mxu0 0.0
  %1323 = vmatpush1.msra.mxu0 0.0
  %1324 = vmatprep.subr.mxu0 0.0
  %1325 = vmatpush1.msra.mxu0 0.0
  %1326 = vmatprep.subr.mxu0 0.0
  %1327 = vmatpush1.msra.mxu0 0.0
  %1328 = vmatprep.subr.mxu0 0.0
  %1329 = vmatpush1.msra.mxu0 0.0
  %1330 = vmatprep.subr.mxu0 0.0
  %1331 = vmatpush1.msra.mxu0 0.0
  %1332 = vmatprep.subr.mxu0 0.0
  %1333 = vmatpush1.msra.mxu0 0.0
  %1334 = vmatprep.subr.mxu0 0.0
  %1335 = vmatpush1.msra.mxu0 0.0
  %1336 = vmatprep.subr.mxu0 0.0
  %1337 = vmatpush1.msra.mxu0 0.0
  %1338 = vmatprep.subr.mxu0 0.0
  %1339 = vmatpush1.msra.mxu0 0.0
  %1340 = vmatprep.subr.mxu0 0.0
  %1341 = vmatpush1.msra.mxu0 0.0
  %1342 = vmatprep.mubr.f32.mxu0 0.0
  %1343 = vmatmul.mubr.f32.gmra.mrb[0].mxu0 %v1132
  %v1344 = vpop.f32.mrb[0].mxu0
  %v1345 = vadd.f32 0.0, %v1344
  %v1346 = vpop.f32.mrb[0].mxu0
  %1347 = vmatprep.mubr.f32.mxu0 0.0
  %1348 = vmatmul.mubr.f32.gmra.mrb[0].mxu0 %v1135
  %v1349 = vpop.f32.mrb[0].mxu0
  %v1350 = vadd.f32 0.0, %v1349
  %v1351 = vpop.f32.mrb[0].mxu0
  %1352 = vmatprep.mubr.f32.mxu0 0.0
  %1353 = vmatmul.mubr.f32.gmra.mrb[0].mxu0 %v1138
  %v1354 = vpop.f32.mrb[0].mxu0
  %v1355 = vadd.f32 0.0, %v1354
  %v1356 = vpop.f32.mrb[0].mxu0
  %1357 = vmatprep.mubr.f32.mxu0 0.0
  %1358 = vmatmul.mubr.f32.gmra.mrb[0].mxu0 %v1141
  %v1359 = vpop.f32.mrb[0].mxu0
  %v1360 = vadd.f32 0.0, %v1359
  %v1361 = vpop.f32.mrb[0].mxu0
  %1362 = vmatprep.mubr.f32.mxu0 0.0
  %1363 = vmatmul.mubr.f32.gmra.mrb[0].mxu0 %v1144
  %v1364 = vpop.f32.mrb[0].mxu0
  %v1365 = vadd.f32 0.0, %v1364
  %v1366 = vpop.f32.mrb[0].mxu0
  %1367 = vmatprep.mubr.f32.mxu0 0.0
  %1368 = vmatmul.mubr.f32.gmra.mrb[0].mxu0 %v1147
  %v1369 = vpop.f32.mrb[0].mxu0
  %v1370 = vadd.f32 0.0, %v1369
  %v1371 = vpop.f32.mrb[0].mxu0
  %1372 = vmatprep.mubr.f32.mxu0 0.0
  %1373 = vmatmul.mubr.f32.gmra.mrb[0].mxu0 %v1150
  %v1374 = vpop.f32.mrb[0].mxu0
  %v1375 = vadd.f32 0.0, %v1374
  %v1376 = vpop.f32.mrb[0].mxu0
  %1377 = vmatprep.mubr.f32.mxu0 0.0
  %1378 = vmatmul.mubr.f32.gmra.mrb[0].mxu0 %v1153
  %v1379 = vpop.f32.mrb[0].mxu0
  %v1380 = vadd.f32 0.0, %v1379
  %v1381 = vpop.f32.mrb[0].mxu0
  %1382 = vmatprep.mubr.f32.mxu0 0.0
  %1383 = vmatmul.mubr.f32.gmra.mrb[0].mxu0 %v1156
  %v1384 = vpop.f32.mrb[0].mxu0
  %v1385 = vadd.f32 0.0, %v1384
  %v1386 = vpop.f32.mrb[0].mxu0
  %1387 = vmatprep.mubr.f32.mxu0 0.0
  %1388 = vmatmul.mubr.f32.gmra.mrb[0].mxu0 %v1159
  %v1389 = vpop.f32.mrb[0].mxu0
  %v1390 = vadd.f32 0.0, %v1389
  %v1391 = vpop.f32.mrb[0].mxu0
  %1392 = vmatprep.mubr.f32.mxu0 0.0
  %1393 = vmatmul.mubr.f32.gmra.mrb[0].mxu0 %v1162
  %v1394 = vpop.f32.mrb[0].mxu0
  %v1395 = vadd.f32 0.0, %v1394
  %v1396 = vpop.f32.mrb[0].mxu0
  %1397 = vmatprep.mubr.f32.mxu0 0.0
  %1398 = vmatmul.mubr.f32.gmra.mrb[0].mxu0 %v1165
  %v1399 = vpop.f32.mrb[0].mxu0
  %v1400 = vadd.f32 0.0, %v1399
  %v1401 = vpop.f32.mrb[0].mxu0
  %1402 = vmatprep.mubr.f32.mxu0 0.0
  %1403 = vmatmul.mubr.f32.gmra.mrb[0].mxu0 %v1168
  %v1404 = vpop.f32.mrb[0].mxu0
  %v1405 = vadd.f32 0.0, %v1404
  %v1406 = vpop.f32.mrb[0].mxu0
  %1407 = vmatprep.mubr.f32.mxu0 0.0
  %1408 = vmatmul.mubr.f32.gmra.mrb[0].mxu0 %v1171
  %v1409 = vpop.f32.mrb[0].mxu0
  %v1410 = vadd.f32 0.0, %v1409
  %v1411 = vpop.f32.mrb[0].mxu0
  %1412 = vmatprep.mubr.f32.mxu0 0.0
  %1413 = vmatmul.mubr.f32.gmra.mrb[0].mxu0 %v1174
  %v1414 = vpop.f32.mrb[0].mxu0
  %v1415 = vadd.f32 0.0, %v1414
  %v1416 = vpop.f32.mrb[0].mxu0
  %1417 = vmatprep.mubr.f32.mxu0 0.0
  %1418 = vmatmul.mubr.f32.gmra.mrb[0].mxu0 %v1177
  %v1419 = vpop.f32.mrb[0].mxu0
  %v1420 = vadd.f32 0.0, %v1419
  %v1421 = vpop.f32.mrb[0].mxu0
  %1422 = vmatprep.mubr.f32.mxu0 0.0
  %1423 = vmatmul.mubr.f32.gmra.mrb[0].mxu0 %v1180
  %v1424 = vpop.f32.mrb[0].mxu0
  %v1425 = vadd.f32 0.0, %v1424
  %v1426 = vpop.f32.mrb[0].mxu0
  %1427 = vmatprep.mubr.f32.mxu0 0.0
  %1428 = vmatmul.mubr.f32.gmra.mrb[0].mxu0 %v1183
  %v1429 = vpop.f32.mrb[0].mxu0
  %v1430 = vadd.f32 0.0, %v1429
  %v1431 = vpop.f32.mrb[0].mxu0
  %1432 = vmatprep.mubr.f32.mxu0 0.0
  %1433 = vmatmul.mubr.f32.gmra.mrb[0].mxu0 %v1186
  %v1434 = vpop.f32.mrb[0].mxu0
  %v1435 = vadd.f32 0.0, %v1434
  %v1436 = vpop.f32.mrb[0].mxu0
  %1437 = vmatprep.mubr.f32.mxu0 0.0
  %1438 = vmatmul.mubr.f32.gmra.mrb[0].mxu0 %v1189
  %v1439 = vpop.f32.mrb[0].mxu0
  %v1440 = vadd.f32 0.0, %v1439
  %v1441 = vpop.f32.mrb[0].mxu0
  %1442 = vmatprep.mubr.f32.mxu0 0.0
  %1443 = vmatmul.mubr.f32.gmra.mrb[0].mxu0 %v1192
  %v1444 = vpop.f32.mrb[0].mxu0
  %v1445 = vadd.f32 0.0, %v1444
  %v1446 = vpop.f32.mrb[0].mxu0
  %1447 = vmatprep.mubr.f32.mxu0 0.0
  %1448 = vmatmul.mubr.f32.gmra.mrb[0].mxu0 %v1195
  %v1449 = vpop.f32.mrb[0].mxu0
  %v1450 = vadd.f32 0.0, %v1449
  %v1451 = vpop.f32.mrb[0].mxu0
  %1452 = vmatprep.mubr.f32.mxu0 0.0
  %1453 = vmatmul.mubr.f32.gmra.mrb[0].mxu0 %v1198
  %v1454 = vpop.f32.mrb[0].mxu0
  %v1455 = vadd.f32 0.0, %v1454
  %v1456 = vpop.f32.mrb[0].mxu0
  %1457 = vmatprep.mubr.f32.mxu0 0.0
  %1458 = vmatmul.mubr.f32.gmra.mrb[0].mxu0 %v1201
  %v1459 = vpop.f32.mrb[0].mxu0
  %v1460 = vadd.f32 0.0, %v1459
  %v1461 = vpop.f32.mrb[0].mxu0
  %1462 = vmatprep.mubr.f32.mxu0 0.0
  %1463 = vmatmul.mubr.f32.gmra.mrb[0].mxu0 %v1204
  %v1464 = vpop.f32.mrb[0].mxu0
  %v1465 = vadd.f32 0.0, %v1464
  %v1466 = vpop.f32.mrb[0].mxu0
  %1467 = vmatprep.mubr.f32.mxu0 0.0
  %1468 = vmatmul.mubr.f32.gmra.mrb[0].mxu0 %v1207
  %v1469 = vpop.f32.mrb[0].mxu0
  %v1470 = vadd.f32 0.0, %v1469
  %v1471 = vpop.f32.mrb[0].mxu0
  %1472 = vmatprep.mubr.f32.mxu0 0.0
  %1473 = vmatmul.mubr.f32.gmra.mrb[0].mxu0 %v1210
  %v1474 = vpop.f32.mrb[0].mxu0
  %v1475 = vadd.f32 0.0, %v1474
  %v1476 = vpop.f32.mrb[0].mxu0
  %1477 = vmatprep.mubr.f32.mxu0 0.0
  %1478 = vmatmul.mubr.f32.gmra.mrb[0].mxu0 %v1213
  %v1479 = vpop.f32.mrb[0].mxu0
  %v1480 = vadd.f32 0.0, %v1479
  %v1481 = vpop.f32.mrb[0].mxu0
  %1482 = vmatprep.mubr.f32.mxu0 0.0
  %1483 = vmatmul.mubr.f32.gmra.mrb[0].mxu0 %v1216
  %v1484 = vpop.f32.mrb[0].mxu0
  %v1485 = vadd.f32 0.0, %v1484
  %v1486 = vpop.f32.mrb[0].mxu0
  %1487 = vmatprep.mubr.f32.mxu0 0.0
  %1488 = vmatmul.mubr.f32.gmra.mrb[0].mxu0 %v1219
  %v1489 = vpop.f32.mrb[0].mxu0
  %v1490 = vadd.f32 0.0, %v1489
  %v1491 = vpop.f32.mrb[0].mxu0
  %1492 = vmatprep.mubr.f32.mxu0 0.0
  %1493 = vmatmul.mubr.f32.gmra.mrb[0].mxu0 %v1222
  %v1494 = vpop.f32.mrb[0].mxu0
  %v1495 = vadd.f32 0.0, %v1494
  %v1496 = vpop.f32.mrb[0].mxu0
  %1497 = vmatprep.mubr.f32.mxu0 0.0
  %1498 = vmatmul.mubr.f32.gmra.mrb[0].mxu0 %v1225
  %v1499 = vpop.f32.mrb[0].mxu0
  %v1500 = vadd.f32 0.0, %v1499
  %v1501 = vpop.f32.mrb[0].mxu0
  %1502 = vmatprep.mubr.f32.mxu0 0.0
  %1503 = vmatmul.mubr.f32.gmra.mrb[0].mxu0 %v1228
  %v1504 = vpop.f32.mrb[0].mxu0
  %v1505 = vadd.f32 0.0, %v1504
  %v1506 = vpop.f32.mrb[0].mxu0
  %1507 = vmatprep.mubr.f32.mxu0 0.0
  %1508 = vmatmul.mubr.f32.gmra.mrb[0].mxu0 %v1231
  %v1509 = vpop.f32.mrb[0].mxu0
  %v1510 = vadd.f32 0.0, %v1509
  %v1511 = vpop.f32.mrb[0].mxu0
  %1512 = vmatprep.mubr.f32.mxu0 0.0
  %1513 = vmatmul.mubr.f32.gmra.mrb[0].mxu0 %v1234
  %v1514 = vpop.f32.mrb[0].mxu0
  %v1515 = vadd.f32 0.0, %v1514
  %v1516 = vpop.f32.mrb[0].mxu0
  %1517 = vmatprep.mubr.f32.mxu0 0.0
  %1518 = vmatmul.mubr.f32.gmra.mrb[0].mxu0 %v1237
  %v1519 = vpop.f32.mrb[0].mxu0
  %v1520 = vadd.f32 0.0, %v1519
  %v1521 = vpop.f32.mrb[0].mxu0
  %1522 = vmatprep.mubr.f32.mxu0 0.0
  %1523 = vmatmul.mubr.f32.gmra.mrb[0].mxu0 %v1240
  %v1524 = vpop.f32.mrb[0].mxu0
  %v1525 = vadd.f32 0.0, %v1524
  %v1526 = vpop.f32.mrb[0].mxu0
  %1527 = vmatprep.mubr.f32.mxu0 0.0
  %1528 = vmatmul.mubr.f32.gmra.mrb[0].mxu0 %v1243
  %v1529 = vpop.f32.mrb[0].mxu0
  %v1530 = vadd.f32 0.0, %v1529
  %v1531 = vpop.f32.mrb[0].mxu0
  %1532 = vmatprep.mubr.f32.mxu0 0.0
  %1533 = vmatmul.mubr.f32.gmra.mrb[0].mxu0 %v1246
  %v1534 = vpop.f32.mrb[0].mxu0
  %v1535 = vadd.f32 0.0, %v1534
  %v1536 = vpop.f32.mrb[0].mxu0
  %1537 = vmatprep.mubr.f32.mxu0 0.0
  %1538 = vmatmul.mubr.f32.gmra.mrb[0].mxu0 %v1249
  %v1539 = vpop.f32.mrb[0].mxu0
  %v1540 = vadd.f32 0.0, %v1539
  %v1541 = vpop.f32.mrb[0].mxu0
  %1542 = vmatprep.mubr.f32.mxu0 0.0
  %1543 = vmatmul.mubr.f32.gmra.mrb[0].mxu0 %v1252
  %v1544 = vpop.f32.mrb[0].mxu0
  %v1545 = vadd.f32 0.0, %v1544
  %v1546 = vpop.f32.mrb[0].mxu0
  %1547 = vmatprep.mubr.f32.mxu0 0.0
  %1548 = vmatmul.mubr.f32.gmra.mrb[0].mxu0 %v1255
  %v1549 = vpop.f32.mrb[0].mxu0
  %v1550 = vadd.f32 0.0, %v1549
  %v1551 = vpop.f32.mrb[0].mxu0
  %1552 = vmatprep.mubr.f32.mxu0 0.0
  %1553 = vmatmul.mubr.f32.gmra.mrb[0].mxu0 %v1258
  %v1554 = vpop.f32.mrb[0].mxu0
  %v1555 = vadd.f32 0.0, %v1554
  %v1556 = vpop.f32.mrb[0].mxu0
  %1557 = vmatprep.mubr.f32.mxu0 0.0
  %1558 = vmatmul.mubr.f32.gmra.mrb[0].mxu0 %v1261
  %v1559 = vpop.f32.mrb[0].mxu0
  %v1560 = vadd.f32 0.0, %v1559
  %v1561 = vpop.f32.mrb[0].mxu0
  %1562 = vmatprep.mubr.f32.mxu0 0.0
  %1563 = vmatmul.mubr.f32.gmra.mrb[0].mxu0 %v1264
  %v1564 = vpop.f32.mrb[0].mxu0
  %v1565 = vadd.f32 0.0, %v1564
  %v1566 = vpop.f32.mrb[0].mxu0
  %1567 = vmatprep.mubr.f32.mxu0 0.0
  %1568 = vmatmul.mubr.f32.gmra.mrb[0].mxu0 %v1267
  %v1569 = vpop.f32.mrb[0].mxu0
  %v1570 = vadd.f32 0.0, %v1569
  %v1571 = vpop.f32.mrb[0].mxu0
  %1572 = vmatprep.mubr.f32.mxu0 0.0
  %1573 = vmatmul.mubr.f32.gmra.mrb[0].mxu0 %v1270
  %v1574 = vpop.f32.mrb[0].mxu0
  %v1575 = vadd.f32 0.0, %v1574
  %v1576 = vpop.f32.mrb[0].mxu0
  %1577 = vmatprep.mubr.f32.mxu0 0.0
  %1578 = vmatmul.mubr.f32.gmra.mrb[0].mxu0 %v1273
  %v1579 = vpop.f32.mrb[0].mxu0
  %v1580 = vadd.f32 0.0, %v1579
  %v1581 = vpop.f32.mrb[0].mxu0
  %1582 = vmatprep.mubr.f32.mxu0 0.0
  %1583 = vmatmul.mubr.f32.gmra.mrb[0].mxu0 %v1276
  %v1584 = vpop.f32.mrb[0].mxu0
  %v1585 = vadd.f32 0.0, %v1584
  %v1586 = vpop.f32.mrb[0].mxu0
  %1587 = vdwg.mxu0
  %v1588 = vmax.f32 %v1032, %v1345
  %v1589 = vmax.f32 %v1033, %v1350
  %v1590 = vmax.f32 %v1034, %v1355
  %v1591 = vmax.f32 %v1035, %v1360
  %v1592 = vmax.f32 %v1036, %v1365
  %v1593 = vmax.f32 %v1037, %v1370
  %v1594 = vmax.f32 %v1038, %v1375
  %v1595 = vmax.f32 %v1039, %v1380
  %v1596 = vmax.f32 %v1040, %v1385
  %v1597 = vmax.f32 %v1041, %v1390
  %v1598 = vmax.f32 %v1042, %v1395
  %v1599 = vmax.f32 %v1043, %v1400
  %v1600 = vmax.f32 %v1044, %v1405
  %v1601 = vmax.f32 %v1045, %v1410
  %v1602 = vmax.f32 %v1046, %v1415
  %v1603 = vmax.f32 %v1047, %v1420
  %v1604 = vmax.f32 %v1048, %v1425
  %v1605 = vmax.f32 %v1049, %v1430
  %v1606 = vmax.f32 %v1050, %v1435
  %v1607 = vmax.f32 %v1051, %v1440
  %v1608 = vmax.f32 %v1052, %v1445
  %v1609 = vmax.f32 %v1053, %v1450
  %v1610 = vmax.f32 %v1054, %v1455
  %v1611 = vmax.f32 %v1055, %v1460
  %v1612 = vmax.f32 %v1056, %v1465
  %v1613 = vmax.f32 %v1057, %v1470
  %v1614 = vmax.f32 %v1058, %v1475
  %v1615 = vmax.f32 %v1059, %v1480
  %v1616 = vmax.f32 %v1060, %v1485
  %v1617 = vmax.f32 %v1061, %v1490
  %v1618 = vmax.f32 %v1062, %v1495
  %v1619 = vmax.f32 %v1063, %v1500
  %v1620 = vmax.f32 %v1064, %v1505
  %v1621 = vmax.f32 %v1065, %v1510
  %v1622 = vmax.f32 %v1066, %v1515
  %v1623 = vmax.f32 %v1067, %v1520
  %v1624 = vmax.f32 %v1068, %v1525
  %v1625 = vmax.f32 %v1069, %v1530
  %v1626 = vmax.f32 %v1070, %v1535
  %v1627 = vmax.f32 %v1071, %v1540
  %v1628 = vmax.f32 %v1072, %v1545
  %v1629 = vmax.f32 %v1073, %v1550
  %v1630 = vmax.f32 %v1074, %v1555
  %v1631 = vmax.f32 %v1075, %v1560
  %v1632 = vmax.f32 %v1076, %v1565
  %v1633 = vmax.f32 %v1077, %v1570
  %v1634 = vmax.f32 %v1078, %v1575
  %v1635 = vmax.f32 %v1079, %v1580
  %v1636 = vmax.f32 %v1080, %v1585
  %s1637 = scalar_lea.vmem %s0, 1176
  %v1638 = vld [vmem:[%s1637] sm:$0xff]
  %v1639 = vld [vmem:[%s1637 + $0x8] sm:$0xff]
  %v1640 = vld [vmem:[%s1637 + $0x10] sm:$0xff]
  %v1641 = vld [vmem:[%s1637 + $0x18] sm:$0xff]
  %v1642 = vld [vmem:[%s1637 + $0x20] sm:$0xff]
  %v1643 = vld [vmem:[%s1637 + $0x28] sm:$0xff]
  %v1644 = vld [vmem:[%s1637 + $0x30] sm:$0xff]
  %v1645 = vld [vmem:[%s1637 + $0x38] sm:$0xff]
  %v1646 = vld [vmem:[%s1637 + $0x40] sm:$0xff]
  %v1647 = vld [vmem:[%s1637 + $0x48] sm:$0xff]
  %v1648 = vld [vmem:[%s1637 + $0x50] sm:$0xff]
  %v1649 = vld [vmem:[%s1637 + $0x58] sm:$0xff]
  %v1650 = vld [vmem:[%s1637 + $0x60] sm:$0xff]
  %v1651 = vld [vmem:[%s1637 + $0x68] sm:$0xff]
  %v1652 = vld [vmem:[%s1637 + $0x70] sm:$0xff]
  %v1653 = vld [vmem:[%s1637 + $0x78] sm:$0xff]
  %v1654 = vld [vmem:[%s1637 + $0x80] sm:$0xff]
  %v1655 = vld [vmem:[%s1637 + $0x88] sm:$0xff]
  %v1656 = vld [vmem:[%s1637 + $0x90] sm:$0xff]
  %v1657 = vld [vmem:[%s1637 + $0x98] sm:$0xff]
  %v1658 = vld [vmem:[%s1637 + $0xa0] sm:$0xff]
  %v1659 = vld [vmem:[%s1637 + $0xa8] sm:$0xff]
  %v1660 = vld [vmem:[%s1637 + $0xb0] sm:$0xff]
  %v1661 = vld [vmem:[%s1637 + $0xb8] sm:$0xff]
  %v1662 = vld [vmem:[%s1637 + $0xc0] sm:$0xff]
  %v1663 = vld [vmem:[%s1637 + $0xc8] sm:$0xff]
  %v1664 = vld [vmem:[%s1637 + $0xd0] sm:$0xff]
  %v1665 = vld [vmem:[%s1637 + $0xd8] sm:$0xff]
  %v1666 = vld [vmem:[%s1637 + $0xe0] sm:$0xff]
  %v1667 = vld [vmem:[%s1637 + $0xe8] sm:$0xff]
  %v1668 = vld [vmem:[%s1637 + $0xf0] sm:$0xff]
  %v1669 = vld [vmem:[%s1637 + $0xf8] sm:$0xff]
  %v1670 = vld [vmem:[%s1637 + $0x100] sm:$0xff]
  %v1671 = vld [vmem:[%s1637 + $0x108] sm:$0xff]
  %v1672 = vld [vmem:[%s1637 + $0x110] sm:$0xff]
  %v1673 = vld [vmem:[%s1637 + $0x118] sm:$0xff]
  %v1674 = vld [vmem:[%s1637 + $0x120] sm:$0xff]
  %v1675 = vld [vmem:[%s1637 + $0x128] sm:$0xff]
  %v1676 = vld [vmem:[%s1637 + $0x130] sm:$0xff]
  %v1677 = vld [vmem:[%s1637 + $0x138] sm:$0xff]
  %v1678 = vld [vmem:[%s1637 + $0x140] sm:$0xff]
  %v1679 = vld [vmem:[%s1637 + $0x148] sm:$0xff]
  %v1680 = vld [vmem:[%s1637 + $0x150] sm:$0xff]
  %v1681 = vld [vmem:[%s1637 + $0x158] sm:$0xff]
  %v1682 = vld [vmem:[%s1637 + $0x160] sm:$0xff]
  %v1683 = vld [vmem:[%s1637 + $0x168] sm:$0xff]
  %v1684 = vld [vmem:[%s1637 + $0x170] sm:$0xff]
  %v1685 = vld [vmem:[%s1637 + $0x178] sm:$0xff]
  %v1686 = vld [vmem:[%s1637 + $0x180] sm:$0xff]
  %v1688 = vsel %vm67, %v1638, 0
  %v1691 = vsel %vm67, %v1639, 0
  %v1694 = vsel %vm67, %v1640, 0
  %v1697 = vsel %vm67, %v1641, 0
  %v1700 = vsel %vm67, %v1642, 0
  %v1703 = vsel %vm67, %v1643, 0
  %v1706 = vsel %vm67, %v1644, 0
  %v1709 = vsel %vm67, %v1645, 0
  %v1712 = vsel %vm67, %v1646, 0
  %v1715 = vsel %vm67, %v1647, 0
  %v1718 = vsel %vm67, %v1648, 0
  %v1721 = vsel %vm67, %v1649, 0
  %v1724 = vsel %vm67, %v1650, 0
  %v1727 = vsel %vm67, %v1651, 0
  %v1730 = vsel %vm67, %v1652, 0
  %v1733 = vsel %vm67, %v1653, 0
  %v1736 = vsel %vm67, %v1654, 0
  %v1739 = vsel %vm67, %v1655, 0
  %v1742 = vsel %vm67, %v1656, 0
  %v1745 = vsel %vm67, %v1657, 0
  %v1748 = vsel %vm67, %v1658, 0
  %v1751 = vsel %vm67, %v1659, 0
  %v1754 = vsel %vm67, %v1660, 0
  %v1757 = vsel %vm67, %v1661, 0
  %v1760 = vsel %vm67, %v1662, 0
  %v1763 = vsel %vm67, %v1663, 0
  %v1766 = vsel %vm67, %v1664, 0
  %v1769 = vsel %vm67, %v1665, 0
  %v1772 = vsel %vm67, %v1666, 0
  %v1775 = vsel %vm67, %v1667, 0
  %v1778 = vsel %vm67, %v1668, 0
  %v1781 = vsel %vm67, %v1669, 0
  %v1784 = vsel %vm67, %v1670, 0
  %v1787 = vsel %vm67, %v1671, 0
  %v1790 = vsel %vm67, %v1672, 0
  %v1793 = vsel %vm67, %v1673, 0
  %v1796 = vsel %vm67, %v1674, 0
  %v1799 = vsel %vm67, %v1675, 0
  %v1802 = vsel %vm67, %v1676, 0
  %v1805 = vsel %vm67, %v1677, 0
  %v1808 = vsel %vm67, %v1678, 0
  %v1811 = vsel %vm67, %v1679, 0
  %v1814 = vsel %vm67, %v1680, 0
  %v1817 = vsel %vm67, %v1681, 0
  %v1820 = vsel %vm67, %v1682, 0
  %v1823 = vsel %vm67, %v1683, 0
  %v1826 = vsel %vm67, %v1684, 0
  %v1829 = vsel %vm67, %v1685, 0
  %v1832 = vsel %vm67, %v1686, 0
  %1834 = vmatprep.subr.mxu0 0.0
  %1835 = vmatpush1.msra.mxu0 %v14
  %1836 = vmatprep.subr.mxu0 0.0
  %1837 = vmatpush1.msra.mxu0 %v15
  %1838 = vmatprep.subr.mxu0 0.0
  %1839 = vmatpush1.msra.mxu0 %v16
  %1840 = vmatprep.subr.mxu0 0.0
  %1841 = vmatpush1.msra.mxu0 %v17
  %1842 = vmatprep.subr.mxu0 0.0
  %1843 = vmatpush1.msra.mxu0 0.0
  %1844 = vmatprep.subr.mxu0 0.0
  %1845 = vmatpush1.msra.mxu0 0.0
  %1846 = vmatprep.subr.mxu0 0.0
  %1847 = vmatpush1.msra.mxu0 0.0
  %1848 = vmatprep.subr.mxu0 0.0
  %1849 = vmatpush1.msra.mxu0 0.0
  %1850 = vmatprep.subr.mxu0 0.0
  %1851 = vmatpush1.msra.mxu0 0.0
  %1852 = vmatprep.subr.mxu0 0.0
  %1853 = vmatpush1.msra.mxu0 0.0
  %1854 = vmatprep.subr.mxu0 0.0
  %1855 = vmatpush1.msra.mxu0 0.0
  %1856 = vmatprep.subr.mxu0 0.0
  %1857 = vmatpush1.msra.mxu0 0.0
  %1858 = vmatprep.subr.mxu0 0.0
  %1859 = vmatpush1.msra.mxu0 0.0
  %1860 = vmatprep.subr.mxu0 0.0
  %1861 = vmatpush1.msra.mxu0 0.0
  %1862 = vmatprep.subr.mxu0 0.0
  %1863 = vmatpush1.msra.mxu0 0.0
  %1864 = vmatprep.subr.mxu0 0.0
  %1865 = vmatpush1.msra.mxu0 0.0
  %1866 = vmatprep.subr.mxu0 0.0
  %1867 = vmatpush1.msra.mxu0 0.0
  %1868 = vmatprep.subr.mxu0 0.0
  %1869 = vmatpush1.msra.mxu0 0.0
  %1870 = vmatprep.subr.mxu0 0.0
  %1871 = vmatpush1.msra.mxu0 0.0
  %1872 = vmatprep.subr.mxu0 0.0
  %1873 = vmatpush1.msra.mxu0 0.0
  %1874 = vmatprep.subr.mxu0 0.0
  %1875 = vmatpush1.msra.mxu0 0.0
  %1876 = vmatprep.subr.mxu0 0.0
  %1877 = vmatpush1.msra.mxu0 0.0
  %1878 = vmatprep.subr.mxu0 0.0
  %1879 = vmatpush1.msra.mxu0 0.0
  %1880 = vmatprep.subr.mxu0 0.0
  %1881 = vmatpush1.msra.mxu0 0.0
  %1882 = vmatprep.subr.mxu0 0.0
  %1883 = vmatpush1.msra.mxu0 0.0
  %1884 = vmatprep.subr.mxu0 0.0
  %1885 = vmatpush1.msra.mxu0 0.0
  %1886 = vmatprep.subr.mxu0 0.0
  %1887 = vmatpush1.msra.mxu0 0.0
  %1888 = vmatprep.subr.mxu0 0.0
  %1889 = vmatpush1.msra.mxu0 0.0
  %1890 = vmatprep.subr.mxu0 0.0
  %1891 = vmatpush1.msra.mxu0 0.0
  %1892 = vmatprep.subr.mxu0 0.0
  %1893 = vmatpush1.msra.mxu0 0.0
  %1894 = vmatprep.subr.mxu0 0.0
  %1895 = vmatpush1.msra.mxu0 0.0
  %1896 = vmatprep.subr.mxu0 0.0
  %1897 = vmatpush1.msra.mxu0 0.0
  %1898 = vmatprep.mubr.f32.mxu0 0.0
  %1899 = vmatmul.mubr.f32.gmra.mrb[0].mxu0 %v1688
  %v1900 = vpop.f32.mrb[0].mxu0
  %v1901 = vadd.f32 0.0, %v1900
  %v1902 = vpop.f32.mrb[0].mxu0
  %1903 = vmatprep.mubr.f32.mxu0 0.0
  %1904 = vmatmul.mubr.f32.gmra.mrb[0].mxu0 %v1691
  %v1905 = vpop.f32.mrb[0].mxu0
  %v1906 = vadd.f32 0.0, %v1905
  %v1907 = vpop.f32.mrb[0].mxu0
  %1908 = vmatprep.mubr.f32.mxu0 0.0
  %1909 = vmatmul.mubr.f32.gmra.mrb[0].mxu0 %v1694
  %v1910 = vpop.f32.mrb[0].mxu0
  %v1911 = vadd.f32 0.0, %v1910
  %v1912 = vpop.f32.mrb[0].mxu0
  %1913 = vmatprep.mubr.f32.mxu0 0.0
  %1914 = vmatmul.mubr.f32.gmra.mrb[0].mxu0 %v1697
  %v1915 = vpop.f32.mrb[0].mxu0
  %v1916 = vadd.f32 0.0, %v1915
  %v1917 = vpop.f32.mrb[0].mxu0
  %1918 = vmatprep.mubr.f32.mxu0 0.0
  %1919 = vmatmul.mubr.f32.gmra.mrb[0].mxu0 %v1700
  %v1920 = vpop.f32.mrb[0].mxu0
  %v1921 = vadd.f32 0.0, %v1920
  %v1922 = vpop.f32.mrb[0].mxu0
  %1923 = vmatprep.mubr.f32.mxu0 0.0
  %1924 = vmatmul.mubr.f32.gmra.mrb[0].mxu0 %v1703
  %v1925 = vpop.f32.mrb[0].mxu0
  %v1926 = vadd.f32 0.0, %v1925
  %v1927 = vpop.f32.mrb[0].mxu0
  %1928 = vmatprep.mubr.f32.mxu0 0.0
  %1929 = vmatmul.mubr.f32.gmra.mrb[0].mxu0 %v1706
  %v1930 = vpop.f32.mrb[0].mxu0
  %v1931 = vadd.f32 0.0, %v1930
  %v1932 = vpop.f32.mrb[0].mxu0
  %1933 = vmatprep.mubr.f32.mxu0 0.0
  %1934 = vmatmul.mubr.f32.gmra.mrb[0].mxu0 %v1709
  %v1935 = vpop.f32.mrb[0].mxu0
  %v1936 = vadd.f32 0.0, %v1935
  %v1937 = vpop.f32.mrb[0].mxu0
  %1938 = vmatprep.mubr.f32.mxu0 0.0
  %1939 = vmatmul.mubr.f32.gmra.mrb[0].mxu0 %v1712
  %v1940 = vpop.f32.mrb[0].mxu0
  %v1941 = vadd.f32 0.0, %v1940
  %v1942 = vpop.f32.mrb[0].mxu0
  %1943 = vmatprep.mubr.f32.mxu0 0.0
  %1944 = vmatmul.mubr.f32.gmra.mrb[0].mxu0 %v1715
  %v1945 = vpop.f32.mrb[0].mxu0
  %v1946 = vadd.f32 0.0, %v1945
  %v1947 = vpop.f32.mrb[0].mxu0
  %1948 = vmatprep.mubr.f32.mxu0 0.0
  %1949 = vmatmul.mubr.f32.gmra.mrb[0].mxu0 %v1718
  %v1950 = vpop.f32.mrb[0].mxu0
  %v1951 = vadd.f32 0.0, %v1950
  %v1952 = vpop.f32.mrb[0].mxu0
  %1953 = vmatprep.mubr.f32.mxu0 0.0
  %1954 = vmatmul.mubr.f32.gmra.mrb[0].mxu0 %v1721
  %v1955 = vpop.f32.mrb[0].mxu0
  %v1956 = vadd.f32 0.0, %v1955
  %v1957 = vpop.f32.mrb[0].mxu0
  %1958 = vmatprep.mubr.f32.mxu0 0.0
  %1959 = vmatmul.mubr.f32.gmra.mrb[0].mxu0 %v1724
  %v1960 = vpop.f32.mrb[0].mxu0
  %v1961 = vadd.f32 0.0, %v1960
  %v1962 = vpop.f32.mrb[0].mxu0
  %1963 = vmatprep.mubr.f32.mxu0 0.0
  %1964 = vmatmul.mubr.f32.gmra.mrb[0].mxu0 %v1727
  %v1965 = vpop.f32.mrb[0].mxu0
  %v1966 = vadd.f32 0.0, %v1965
  %v1967 = vpop.f32.mrb[0].mxu0
  %1968 = vmatprep.mubr.f32.mxu0 0.0
  %1969 = vmatmul.mubr.f32.gmra.mrb[0].mxu0 %v1730
  %v1970 = vpop.f32.mrb[0].mxu0
  %v1971 = vadd.f32 0.0, %v1970
  %v1972 = vpop.f32.mrb[0].mxu0
  %1973 = vmatprep.mubr.f32.mxu0 0.0
  %1974 = vmatmul.mubr.f32.gmra.mrb[0].mxu0 %v1733
  %v1975 = vpop.f32.mrb[0].mxu0
  %v1976 = vadd.f32 0.0, %v1975
  %v1977 = vpop.f32.mrb[0].mxu0
  %1978 = vmatprep.mubr.f32.mxu0 0.0
  %1979 = vmatmul.mubr.f32.gmra.mrb[0].mxu0 %v1736
  %v1980 = vpop.f32.mrb[0].mxu0
  %v1981 = vadd.f32 0.0, %v1980
  %v1982 = vpop.f32.mrb[0].mxu0
  %1983 = vmatprep.mubr.f32.mxu0 0.0
  %1984 = vmatmul.mubr.f32.gmra.mrb[0].mxu0 %v1739
  %v1985 = vpop.f32.mrb[0].mxu0
  %v1986 = vadd.f32 0.0, %v1985
  %v1987 = vpop.f32.mrb[0].mxu0
  %1988 = vmatprep.mubr.f32.mxu0 0.0
  %1989 = vmatmul.mubr.f32.gmra.mrb[0].mxu0 %v1742
  %v1990 = vpop.f32.mrb[0].mxu0
  %v1991 = vadd.f32 0.0, %v1990
  %v1992 = vpop.f32.mrb[0].mxu0
  %1993 = vmatprep.mubr.f32.mxu0 0.0
  %1994 = vmatmul.mubr.f32.gmra.mrb[0].mxu0 %v1745
  %v1995 = vpop.f32.mrb[0].mxu0
  %v1996 = vadd.f32 0.0, %v1995
  %v1997 = vpop.f32.mrb[0].mxu0
  %1998 = vmatprep.mubr.f32.mxu0 0.0
  %1999 = vmatmul.mubr.f32.gmra.mrb[0].mxu0 %v1748
  %v2000 = vpop.f32.mrb[0].mxu0
  %v2001 = vadd.f32 0.0, %v2000
  %v2002 = vpop.f32.mrb[0].mxu0
  %2003 = vmatprep.mubr.f32.mxu0 0.0
  %2004 = vmatmul.mubr.f32.gmra.mrb[0].mxu0 %v1751
  %v2005 = vpop.f32.mrb[0].mxu0
  %v2006 = vadd.f32 0.0, %v2005
  %v2007 = vpop.f32.mrb[0].mxu0
  %2008 = vmatprep.mubr.f32.mxu0 0.0
  %2009 = vmatmul.mubr.f32.gmra.mrb[0].mxu0 %v1754
  %v2010 = vpop.f32.mrb[0].mxu0
  %v2011 = vadd.f32 0.0, %v2010
  %v2012 = vpop.f32.mrb[0].mxu0
  %2013 = vmatprep.mubr.f32.mxu0 0.0
  %2014 = vmatmul.mubr.f32.gmra.mrb[0].mxu0 %v1757
  %v2015 = vpop.f32.mrb[0].mxu0
  %v2016 = vadd.f32 0.0, %v2015
  %v2017 = vpop.f32.mrb[0].mxu0
  %2018 = vmatprep.mubr.f32.mxu0 0.0
  %2019 = vmatmul.mubr.f32.gmra.mrb[0].mxu0 %v1760
  %v2020 = vpop.f32.mrb[0].mxu0
  %v2021 = vadd.f32 0.0, %v2020
  %v2022 = vpop.f32.mrb[0].mxu0
  %2023 = vmatprep.mubr.f32.mxu0 0.0
  %2024 = vmatmul.mubr.f32.gmra.mrb[0].mxu0 %v1763
  %v2025 = vpop.f32.mrb[0].mxu0
  %v2026 = vadd.f32 0.0, %v2025
  %v2027 = vpop.f32.mrb[0].mxu0
  %2028 = vmatprep.mubr.f32.mxu0 0.0
  %2029 = vmatmul.mubr.f32.gmra.mrb[0].mxu0 %v1766
  %v2030 = vpop.f32.mrb[0].mxu0
  %v2031 = vadd.f32 0.0, %v2030
  %v2032 = vpop.f32.mrb[0].mxu0
  %2033 = vmatprep.mubr.f32.mxu0 0.0
  %2034 = vmatmul.mubr.f32.gmra.mrb[0].mxu0 %v1769
  %v2035 = vpop.f32.mrb[0].mxu0
  %v2036 = vadd.f32 0.0, %v2035
  %v2037 = vpop.f32.mrb[0].mxu0
  %2038 = vmatprep.mubr.f32.mxu0 0.0
  %2039 = vmatmul.mubr.f32.gmra.mrb[0].mxu0 %v1772
  %v2040 = vpop.f32.mrb[0].mxu0
  %v2041 = vadd.f32 0.0, %v2040
  %v2042 = vpop.f32.mrb[0].mxu0
  %2043 = vmatprep.mubr.f32.mxu0 0.0
  %2044 = vmatmul.mubr.f32.gmra.mrb[0].mxu0 %v1775
  %v2045 = vpop.f32.mrb[0].mxu0
  %v2046 = vadd.f32 0.0, %v2045
  %v2047 = vpop.f32.mrb[0].mxu0
  %2048 = vmatprep.mubr.f32.mxu0 0.0
  %2049 = vmatmul.mubr.f32.gmra.mrb[0].mxu0 %v1778
  %v2050 = vpop.f32.mrb[0].mxu0
  %v2051 = vadd.f32 0.0, %v2050
  %v2052 = vpop.f32.mrb[0].mxu0
  %2053 = vmatprep.mubr.f32.mxu0 0.0
  %2054 = vmatmul.mubr.f32.gmra.mrb[0].mxu0 %v1781
  %v2055 = vpop.f32.mrb[0].mxu0
  %v2056 = vadd.f32 0.0, %v2055
  %v2057 = vpop.f32.mrb[0].mxu0
  %2058 = vmatprep.mubr.f32.mxu0 0.0
  %2059 = vmatmul.mubr.f32.gmra.mrb[0].mxu0 %v1784
  %v2060 = vpop.f32.mrb[0].mxu0
  %v2061 = vadd.f32 0.0, %v2060
  %v2062 = vpop.f32.mrb[0].mxu0
  %2063 = vmatprep.mubr.f32.mxu0 0.0
  %2064 = vmatmul.mubr.f32.gmra.mrb[0].mxu0 %v1787
  %v2065 = vpop.f32.mrb[0].mxu0
  %v2066 = vadd.f32 0.0, %v2065
  %v2067 = vpop.f32.mrb[0].mxu0
  %2068 = vmatprep.mubr.f32.mxu0 0.0
  %2069 = vmatmul.mubr.f32.gmra.mrb[0].mxu0 %v1790
  %v2070 = vpop.f32.mrb[0].mxu0
  %v2071 = vadd.f32 0.0, %v2070
  %v2072 = vpop.f32.mrb[0].mxu0
  %2073 = vmatprep.mubr.f32.mxu0 0.0
  %2074 = vmatmul.mubr.f32.gmra.mrb[0].mxu0 %v1793
  %v2075 = vpop.f32.mrb[0].mxu0
  %v2076 = vadd.f32 0.0, %v2075
  %v2077 = vpop.f32.mrb[0].mxu0
  %2078 = vmatprep.mubr.f32.mxu0 0.0
  %2079 = vmatmul.mubr.f32.gmra.mrb[0].mxu0 %v1796
  %v2080 = vpop.f32.mrb[0].mxu0
  %v2081 = vadd.f32 0.0, %v2080
  %v2082 = vpop.f32.mrb[0].mxu0
  %2083 = vmatprep.mubr.f32.mxu0 0.0
  %2084 = vmatmul.mubr.f32.gmra.mrb[0].mxu0 %v1799
  %v2085 = vpop.f32.mrb[0].mxu0
  %v2086 = vadd.f32 0.0, %v2085
  %v2087 = vpop.f32.mrb[0].mxu0
  %2088 = vmatprep.mubr.f32.mxu0 0.0
  %2089 = vmatmul.mubr.f32.gmra.mrb[0].mxu0 %v1802
  %v2090 = vpop.f32.mrb[0].mxu0
  %v2091 = vadd.f32 0.0, %v2090
  %v2092 = vpop.f32.mrb[0].mxu0
  %2093 = vmatprep.mubr.f32.mxu0 0.0
  %2094 = vmatmul.mubr.f32.gmra.mrb[0].mxu0 %v1805
  %v2095 = vpop.f32.mrb[0].mxu0
  %v2096 = vadd.f32 0.0, %v2095
  %v2097 = vpop.f32.mrb[0].mxu0
  %2098 = vmatprep.mubr.f32.mxu0 0.0
  %2099 = vmatmul.mubr.f32.gmra.mrb[0].mxu0 %v1808
  %v2100 = vpop.f32.mrb[0].mxu0
  %v2101 = vadd.f32 0.0, %v2100
  %v2102 = vpop.f32.mrb[0].mxu0
  %2103 = vmatprep.mubr.f32.mxu0 0.0
  %2104 = vmatmul.mubr.f32.gmra.mrb[0].mxu0 %v1811
  %v2105 = vpop.f32.mrb[0].mxu0
  %v2106 = vadd.f32 0.0, %v2105
  %v2107 = vpop.f32.mrb[0].mxu0
  %2108 = vmatprep.mubr.f32.mxu0 0.0
  %2109 = vmatmul.mubr.f32.gmra.mrb[0].mxu0 %v1814
  %v2110 = vpop.f32.mrb[0].mxu0
  %v2111 = vadd.f32 0.0, %v2110
  %v2112 = vpop.f32.mrb[0].mxu0
  %2113 = vmatprep.mubr.f32.mxu0 0.0
  %2114 = vmatmul.mubr.f32.gmra.mrb[0].mxu0 %v1817
  %v2115 = vpop.f32.mrb[0].mxu0
  %v2116 = vadd.f32 0.0, %v2115
  %v2117 = vpop.f32.mrb[0].mxu0
  %2118 = vmatprep.mubr.f32.mxu0 0.0
  %2119 = vmatmul.mubr.f32.gmra.mrb[0].mxu0 %v1820
  %v2120 = vpop.f32.mrb[0].mxu0
  %v2121 = vadd.f32 0.0, %v2120
  %v2122 = vpop.f32.mrb[0].mxu0
  %2123 = vmatprep.mubr.f32.mxu0 0.0
  %2124 = vmatmul.mubr.f32.gmra.mrb[0].mxu0 %v1823
  %v2125 = vpop.f32.mrb[0].mxu0
  %v2126 = vadd.f32 0.0, %v2125
  %v2127 = vpop.f32.mrb[0].mxu0
  %2128 = vmatprep.mubr.f32.mxu0 0.0
  %2129 = vmatmul.mubr.f32.gmra.mrb[0].mxu0 %v1826
  %v2130 = vpop.f32.mrb[0].mxu0
  %v2131 = vadd.f32 0.0, %v2130
  %v2132 = vpop.f32.mrb[0].mxu0
  %2133 = vmatprep.mubr.f32.mxu0 0.0
  %2134 = vmatmul.mubr.f32.gmra.mrb[0].mxu0 %v1829
  %v2135 = vpop.f32.mrb[0].mxu0
  %v2136 = vadd.f32 0.0, %v2135
  %v2137 = vpop.f32.mrb[0].mxu0
  %2138 = vmatprep.mubr.f32.mxu0 0.0
  %2139 = vmatmul.mubr.f32.gmra.mrb[0].mxu0 %v1832
  %v2140 = vpop.f32.mrb[0].mxu0
  %v2141 = vadd.f32 0.0, %v2140
  %v2142 = vpop.f32.mrb[0].mxu0
  %2143 = vdwg.mxu0
  %v2144 = vmax.f32 %v1588, %v1901
  %v2145 = vmax.f32 %v1589, %v1906
  %v2146 = vmax.f32 %v1590, %v1911
  %v2147 = vmax.f32 %v1591, %v1916
  %v2148 = vmax.f32 %v1592, %v1921
  %v2149 = vmax.f32 %v1593, %v1926
  %v2150 = vmax.f32 %v1594, %v1931
  %v2151 = vmax.f32 %v1595, %v1936
  %v2152 = vmax.f32 %v1596, %v1941
  %v2153 = vmax.f32 %v1597, %v1946
  %v2154 = vmax.f32 %v1598, %v1951
  %v2155 = vmax.f32 %v1599, %v1956
  %v2156 = vmax.f32 %v1600, %v1961
  %v2157 = vmax.f32 %v1601, %v1966
  %v2158 = vmax.f32 %v1602, %v1971
  %v2159 = vmax.f32 %v1603, %v1976
  %v2160 = vmax.f32 %v1604, %v1981
  %v2161 = vmax.f32 %v1605, %v1986
  %v2162 = vmax.f32 %v1606, %v1991
  %v2163 = vmax.f32 %v1607, %v1996
  %v2164 = vmax.f32 %v1608, %v2001
  %v2165 = vmax.f32 %v1609, %v2006
  %v2166 = vmax.f32 %v1610, %v2011
  %v2167 = vmax.f32 %v1611, %v2016
  %v2168 = vmax.f32 %v1612, %v2021
  %v2169 = vmax.f32 %v1613, %v2026
  %v2170 = vmax.f32 %v1614, %v2031
  %v2171 = vmax.f32 %v1615, %v2036
  %v2172 = vmax.f32 %v1616, %v2041
  %v2173 = vmax.f32 %v1617, %v2046
  %v2174 = vmax.f32 %v1618, %v2051
  %v2175 = vmax.f32 %v1619, %v2056
  %v2176 = vmax.f32 %v1620, %v2061
  %v2177 = vmax.f32 %v1621, %v2066
  %v2178 = vmax.f32 %v1622, %v2071
  %v2179 = vmax.f32 %v1623, %v2076
  %v2180 = vmax.f32 %v1624, %v2081
  %v2181 = vmax.f32 %v1625, %v2086
  %v2182 = vmax.f32 %v1626, %v2091
  %v2183 = vmax.f32 %v1627, %v2096
  %v2184 = vmax.f32 %v1628, %v2101
  %v2185 = vmax.f32 %v1629, %v2106
  %v2186 = vmax.f32 %v1630, %v2111
  %v2187 = vmax.f32 %v1631, %v2116
  %v2188 = vmax.f32 %v1632, %v2121
  %v2189 = vmax.f32 %v1633, %v2126
  %v2190 = vmax.f32 %v1634, %v2131
  %v2191 = vmax.f32 %v1635, %v2136
  %v2192 = vmax.f32 %v1636, %v2141
  %v2193 = vld [vmem:[%s2] sm:$0x1]
  %v2195 = vlaneseq
  %v2196 = vshrl.u32 %v2195, 7
  %v2197 = vsub.s32 0, %v2196
  %v2198 = vrot.slane %v2193, %v2197
  %v2200 = vadd.f32 %v2144, %v2198
  %v2201 = vadd.f32 %v2145, %v2198
  %v2202 = vadd.f32 %v2146, %v2198
  %v2203 = vadd.f32 %v2147, %v2198
  %v2204 = vadd.f32 %v2148, %v2198
  %v2205 = vadd.f32 %v2149, %v2198
  %v2206 = vadd.f32 %v2150, %v2198
  %v2207 = vadd.f32 %v2151, %v2198
  %v2208 = vadd.f32 %v2152, %v2198
  %v2209 = vadd.f32 %v2153, %v2198
  %v2210 = vadd.f32 %v2154, %v2198
  %v2211 = vadd.f32 %v2155, %v2198
  %v2212 = vadd.f32 %v2156, %v2198
  %v2213 = vadd.f32 %v2157, %v2198
  %v2214 = vadd.f32 %v2158, %v2198
  %v2215 = vadd.f32 %v2159, %v2198
  %v2216 = vadd.f32 %v2160, %v2198
  %v2217 = vadd.f32 %v2161, %v2198
  %v2218 = vadd.f32 %v2162, %v2198
  %v2219 = vadd.f32 %v2163, %v2198
  %v2220 = vadd.f32 %v2164, %v2198
  %v2221 = vadd.f32 %v2165, %v2198
  %v2222 = vadd.f32 %v2166, %v2198
  %v2223 = vadd.f32 %v2167, %v2198
  %v2224 = vadd.f32 %v2168, %v2198
  %v2225 = vadd.f32 %v2169, %v2198
  %v2226 = vadd.f32 %v2170, %v2198
  %v2227 = vadd.f32 %v2171, %v2198
  %v2228 = vadd.f32 %v2172, %v2198
  %v2229 = vadd.f32 %v2173, %v2198
  %v2230 = vadd.f32 %v2174, %v2198
  %v2231 = vadd.f32 %v2175, %v2198
  %v2232 = vadd.f32 %v2176, %v2198
  %v2233 = vadd.f32 %v2177, %v2198
  %v2234 = vadd.f32 %v2178, %v2198
  %v2235 = vadd.f32 %v2179, %v2198
  %v2236 = vadd.f32 %v2180, %v2198
  %v2237 = vadd.f32 %v2181, %v2198
  %v2238 = vadd.f32 %v2182, %v2198
  %v2239 = vadd.f32 %v2183, %v2198
  %v2240 = vadd.f32 %v2184, %v2198
  %v2241 = vadd.f32 %v2185, %v2198
  %v2242 = vadd.f32 %v2186, %v2198
  %v2243 = vadd.f32 %v2187, %v2198
  %v2244 = vadd.f32 %v2188, %v2198
  %v2245 = vadd.f32 %v2189, %v2198
  %v2246 = vadd.f32 %v2190, %v2198
  %v2247 = vadd.f32 %v2191, %v2198
  %v2248 = vadd.f32 %v2192, %v2198
  %v2249 = vmax.f32 %v2200, 0.0
  %v2250 = vmax.f32 %v2201, 0.0
  %v2251 = vmax.f32 %v2202, 0.0
  %v2252 = vmax.f32 %v2203, 0.0
  %v2253 = vmax.f32 %v2204, 0.0
  %v2254 = vmax.f32 %v2205, 0.0
  %v2255 = vmax.f32 %v2206, 0.0
  %v2256 = vmax.f32 %v2207, 0.0
  %v2257 = vmax.f32 %v2208, 0.0
  %v2258 = vmax.f32 %v2209, 0.0
  %v2259 = vmax.f32 %v2210, 0.0
  %v2260 = vmax.f32 %v2211, 0.0
  %v2261 = vmax.f32 %v2212, 0.0
  %v2262 = vmax.f32 %v2213, 0.0
  %v2263 = vmax.f32 %v2214, 0.0
  %v2264 = vmax.f32 %v2215, 0.0
  %v2265 = vmax.f32 %v2216, 0.0
  %v2266 = vmax.f32 %v2217, 0.0
  %v2267 = vmax.f32 %v2218, 0.0
  %v2268 = vmax.f32 %v2219, 0.0
  %v2269 = vmax.f32 %v2220, 0.0
  %v2270 = vmax.f32 %v2221, 0.0
  %v2271 = vmax.f32 %v2222, 0.0
  %v2272 = vmax.f32 %v2223, 0.0
  %v2273 = vmax.f32 %v2224, 0.0
  %v2274 = vmax.f32 %v2225, 0.0
  %v2275 = vmax.f32 %v2226, 0.0
  %v2276 = vmax.f32 %v2227, 0.0
  %v2277 = vmax.f32 %v2228, 0.0
  %v2278 = vmax.f32 %v2229, 0.0
  %v2279 = vmax.f32 %v2230, 0.0
  %v2280 = vmax.f32 %v2231, 0.0
  %v2281 = vmax.f32 %v2232, 0.0
  %v2282 = vmax.f32 %v2233, 0.0
  %v2283 = vmax.f32 %v2234, 0.0
  %v2284 = vmax.f32 %v2235, 0.0
  %v2285 = vmax.f32 %v2236, 0.0
  %v2286 = vmax.f32 %v2237, 0.0
  %v2287 = vmax.f32 %v2238, 0.0
  %v2288 = vmax.f32 %v2239, 0.0
  %v2289 = vmax.f32 %v2240, 0.0
  %v2290 = vmax.f32 %v2241, 0.0
  %v2291 = vmax.f32 %v2242, 0.0
  %v2292 = vmax.f32 %v2243, 0.0
  %v2293 = vmax.f32 %v2244, 0.0
  %v2294 = vmax.f32 %v2245, 0.0
  %v2295 = vmax.f32 %v2246, 0.0
  %v2296 = vmax.f32 %v2247, 0.0
  %v2297 = vmax.f32 %v2248, 0.0
  %2298 = vst [vmem:[%s3] sm:$0xff] %v2249
  %2299 = vst [vmem:[%s3 + $0x8] sm:$0xff] %v2250
  %2300 = vst [vmem:[%s3 + $0x10] sm:$0xff] %v2251
  %2301 = vst [vmem:[%s3 + $0x18] sm:$0xff] %v2252
  %2302 = vst [vmem:[%s3 + $0x20] sm:$0xff] %v2253
  %2303 = vst [vmem:[%s3 + $0x28] sm:$0xff] %v2254
  %2304 = vst [vmem:[%s3 + $0x30] sm:$0xff] %v2255
  %2305 = vst [vmem:[%s3 + $0x38] sm:$0xff] %v2256
  %2306 = vst [vmem:[%s3 + $0x40] sm:$0xff] %v2257
  %2307 = vst [vmem:[%s3 + $0x48] sm:$0xff] %v2258
  %2308 = vst [vmem:[%s3 + $0x50] sm:$0xff] %v2259
  %2309 = vst [vmem:[%s3 + $0x58] sm:$0xff] %v2260
  %2310 = vst [vmem:[%s3 + $0x60] sm:$0xff] %v2261
  %2311 = vst [vmem:[%s3 + $0x68] sm:$0xff] %v2262
  %2312 = vst [vmem:[%s3 + $0x70] sm:$0xff] %v2263
  %2313 = vst [vmem:[%s3 + $0x78] sm:$0xff] %v2264
  %2314 = vst [vmem:[%s3 + $0x80] sm:$0xff] %v2265
  %2315 = vst [vmem:[%s3 + $0x88] sm:$0xff] %v2266
  %2316 = vst [vmem:[%s3 + $0x90] sm:$0xff] %v2267
  %2317 = vst [vmem:[%s3 + $0x98] sm:$0xff] %v2268
  %2318 = vst [vmem:[%s3 + $0xa0] sm:$0xff] %v2269
  %2319 = vst [vmem:[%s3 + $0xa8] sm:$0xff] %v2270
  %2320 = vst [vmem:[%s3 + $0xb0] sm:$0xff] %v2271
  %2321 = vst [vmem:[%s3 + $0xb8] sm:$0xff] %v2272
  %2322 = vst [vmem:[%s3 + $0xc0] sm:$0xff] %v2273
  %2323 = vst [vmem:[%s3 + $0xc8] sm:$0xff] %v2274
  %2324 = vst [vmem:[%s3 + $0xd0] sm:$0xff] %v2275
  %2325 = vst [vmem:[%s3 + $0xd8] sm:$0xff] %v2276
  %2326 = vst [vmem:[%s3 + $0xe0] sm:$0xff] %v2277
  %2327 = vst [vmem:[%s3 + $0xe8] sm:$0xff] %v2278
  %2328 = vst [vmem:[%s3 + $0xf0] sm:$0xff] %v2279
  %2329 = vst [vmem:[%s3 + $0xf8] sm:$0xff] %v2280
  %2330 = vst [vmem:[%s3 + $0x100] sm:$0xff] %v2281
  %2331 = vst [vmem:[%s3 + $0x108] sm:$0xff] %v2282
  %2332 = vst [vmem:[%s3 + $0x110] sm:$0xff] %v2283
  %2333 = vst [vmem:[%s3 + $0x118] sm:$0xff] %v2284
  %2334 = vst [vmem:[%s3 + $0x120] sm:$0xff] %v2285
  %2335 = vst [vmem:[%s3 + $0x128] sm:$0xff] %v2286
  %2336 = vst [vmem:[%s3 + $0x130] sm:$0xff] %v2287
  %2337 = vst [vmem:[%s3 + $0x138] sm:$0xff] %v2288
  %2338 = vst [vmem:[%s3 + $0x140] sm:$0xff] %v2289
  %2339 = vst [vmem:[%s3 + $0x148] sm:$0xff] %v2290
  %2340 = vst [vmem:[%s3 + $0x150] sm:$0xff] %v2291
  %2341 = vst [vmem:[%s3 + $0x158] sm:$0xff] %v2292
  %2342 = vst [vmem:[%s3 + $0x160] sm:$0xff] %v2293
  %2343 = vst [vmem:[%s3 + $0x168] sm:$0xff] %v2294
  %2344 = vst [vmem:[%s3 + $0x170] sm:$0xff] %v2295
  %2345 = vst [vmem:[%s3 + $0x178] sm:$0xff] %v2296
  %2346 = vst [vmem:[%s3 + $0x180] sm:$0xff] %v2297
  // Predicated region
  $region14: #{lenet5_forward.3} parent=0 // pred_check
    _
  $region15: #{lenet5_forward.3} parent=0 // pred_check_branch
    %2348 = sbr.rel (0) target = $region17
  $region16: #{lenet5_forward.3} parent=0 // pred_region
    _
  $region17: #{lenet5_forward.3} parent=0 // pred_fallthru
    _
  // Predicated region
  $region18: #{lenet5_forward.3} parent=0 // pred_check
    _
  $region19: #{lenet5_forward.3} parent=0 // pred_check_branch
    %2350 = sbr.rel (0) target = $region21
  $region20: #{lenet5_forward.3} parent=0 // pred_region
    _
  $region21: #{lenet5_forward.3} parent=0 // pred_fallthru
    _

// kernel: lenet5_forward.4
$region0: #{lenet5_forward.4}
  #allocation0 [shape = 'u32[]', space=smem, size = 0x4, offset = 0x4, fixed_abs, tag = 'smem constant byte address 0x4 - core index']
  #allocation1 [shape = 'u32[144,128]{1,0:T(1,128)}', space=vmem, size = 0x12000, scoped, tag = 'internal scratch']
  %s0 = inlined_call_operand.vmem [shape: f32[4,50,152], index: 0, kind: input, shape index: {}]
  %s1 = inlined_call_operand.vmem [shape: f32[152,128], index: 1, kind: input, shape index: {}]
  %s2 = inlined_call_operand.vmem [shape: f32[1,128], index: 2, kind: input, shape index: {}]
  %s3 = inlined_call_operand.vmem [shape: f32[50,128], index: 3, kind: output, shape index: {}]
  %s4 = sld [smem:[#allocation0]]
  $region22: #{lenet5_forward.4} parent=0
    _
  %s6 = ssub.s32 1, %s4
  %s7 = scalar_select 0, %s6, %s4
  // Predicated region
  $region2: #{lenet5_forward.4} parent=0 // pred_check
    _
  $region3: #{lenet5_forward.4} parent=0 // pred_check_branch
    %9 = sbr.rel (0) target = $region5
  $region4: #{lenet5_forward.4} parent=0 // pred_region
    _
  $region5: #{lenet5_forward.4} parent=0 // pred_fallthru
    _
  // Predicated region
  $region6: #{lenet5_forward.4} parent=0 // pred_check
    _
  $region7: #{lenet5_forward.4} parent=0 // pred_check_branch
    %11 = sbr.rel (0) target = $region9
  $region8: #{lenet5_forward.4} parent=0 // pred_region
    _
  $region9: #{lenet5_forward.4} parent=0 // pred_fallthru
    _
  // Predicated region
  $region10: #{lenet5_forward.4} parent=0 // pred_check
    _
  $region11: #{lenet5_forward.4} parent=0 // pred_check_branch
    %13 = sbr.rel (0) target = $region13
  $region12: #{lenet5_forward.4} parent=0 // pred_region
    _
  $region13: #{lenet5_forward.4} parent=0 // pred_fallthru
    _
  %v14 = vld [vmem:[%s1] sm:$0xff]
  %v15 = vld [vmem:[%s1 + $0x8] sm:$0xff]
  %v16 = vld [vmem:[%s1 + $0x10] sm:$0xff]
  %v17 = vld [vmem:[%s1 + $0x18] sm:$0xff]
  %v18 = vld [vmem:[%s1 + $0x20] sm:$0xff]
  %v19 = vld [vmem:[%s1 + $0x28] sm:$0xff]
  %v20 = vld [vmem:[%s1 + $0x30] sm:$0xff]
  %v21 = vld [vmem:[%s1 + $0x38] sm:$0xff]
  %v22 = vld [vmem:[%s1 + $0x40] sm:$0xff]
  %v23 = vld [vmem:[%s1 + $0x48] sm:$0xff]
  %v24 = vld [vmem:[%s1 + $0x50] sm:$0xff]
  %v25 = vld [vmem:[%s1 + $0x58] sm:$0xff]
  %v26 = vld [vmem:[%s1 + $0x60] sm:$0xff]
  %v27 = vld [vmem:[%s1 + $0x68] sm:$0xff]
  %v28 = vld [vmem:[%s1 + $0x70] sm:$0xff]
  %v29 = vld [vmem:[%s1 + $0x78] sm:$0xff]
  %v30 = vld [vmem:[%s1 + $0x80] sm:$0xff]
  %v31 = vld [vmem:[%s1 + $0x88] sm:$0xff]
  %v32 = vld [vmem:[%s1 + $0x90] sm:$0xff]
  %v33 = vld [vmem:[%s0] sm:$0xff]
  %v34 = vld [vmem:[%s0 + $0x8] sm:$0xff]
  %v35 = vld [vmem:[%s0 + $0x10] sm:$0xff]
  %v36 = vld [vmem:[%s0 + $0x18] sm:$0xff]
  %v37 = vld [vmem:[%s0 + $0x20] sm:$0xff]
  %v38 = vld [vmem:[%s0 + $0x28] sm:$0xff]
  %v39 = vld [vmem:[%s0 + $0x30] sm:$0xff]
  %v40 = vld [vmem:[%s0 + $0x38] sm:$0xff]
  %v41 = vld [vmem:[%s0 + $0x40] sm:$0xff]
  %v42 = vld [vmem:[%s0 + $0x48] sm:$0xff]
  %v43 = vld [vmem:[%s0 + $0x50] sm:$0xff]
  %v44 = vld [vmem:[%s0 + $0x58] sm:$0xff]
  %v45 = vld [vmem:[%s0 + $0x60] sm:$0x3]
  %v46 = vld [vmem:[%s0 + $0x68] sm:$0x3]
  %vm47 = vcmask 195584
  %v49 = vsel %vm47, %v34, 0
  %v52 = vsel %vm47, %v36, 0
  %v55 = vsel %vm47, %v38, 0
  %v58 = vsel %vm47, %v40, 0
  %v61 = vsel %vm47, %v42, 0
  %v64 = vsel %vm47, %v44, 0
  %v67 = vsel %vm47, %v46, 0
  %69 = vmatprep.subr.mxu0 0.0
  %70 = vmatpush1.msra.mxu0 %v14
  %71 = vmatprep.subr.mxu0 0.0
  %72 = vmatpush1.msra.mxu0 %v15
  %73 = vmatprep.subr.mxu0 0.0
  %74 = vmatpush1.msra.mxu0 %v16
  %75 = vmatprep.subr.mxu0 0.0
  %76 = vmatpush1.msra.mxu0 %v17
  %77 = vmatprep.subr.mxu0 0.0
  %78 = vmatpush1.msra.mxu0 %v18
  %79 = vmatprep.subr.mxu0 0.0
  %80 = vmatpush1.msra.mxu0 %v19
  %81 = vmatprep.subr.mxu0 0.0
  %82 = vmatpush1.msra.mxu0 %v20
  %83 = vmatprep.subr.mxu0 0.0
  %84 = vmatpush1.msra.mxu0 %v21
  %85 = vmatprep.subr.mxu0 0.0
  %86 = vmatpush1.msra.mxu0 %v22
  %87 = vmatprep.subr.mxu0 0.0
  %88 = vmatpush1.msra.mxu0 %v23
  %89 = vmatprep.subr.mxu0 0.0
  %90 = vmatpush1.msra.mxu0 %v24
  %91 = vmatprep.subr.mxu0 0.0
  %92 = vmatpush1.msra.mxu0 %v25
  %93 = vmatprep.subr.mxu0 0.0
  %94 = vmatpush1.msra.mxu0 %v26
  %95 = vmatprep.subr.mxu0 0.0
  %96 = vmatpush1.msra.mxu0 %v27
  %97 = vmatprep.subr.mxu0 0.0
  %98 = vmatpush1.msra.mxu0 %v28
  %99 = vmatprep.subr.mxu0 0.0
  %100 = vmatpush1.msra.mxu0 %v29
  %101 = vmatprep.subr.mxu0 0.0
  %102 = vmatpush1.msra.mxu0 %v30
  %103 = vmatprep.subr.mxu0 0.0
  %104 = vmatpush1.msra.mxu0 %v31
  %105 = vmatprep.subr.mxu0 0.0
  %106 = vmatpush1.msra.mxu0 %v32
  %107 = vmatprep.subr.mxu0 0.0
  %108 = vmatpush1.msra.mxu0 0.0
  %109 = vmatprep.subr.mxu0 0.0
  %110 = vmatpush1.msra.mxu0 0.0
  %111 = vmatprep.subr.mxu0 0.0
  %112 = vmatpush1.msra.mxu0 0.0
  %113 = vmatprep.subr.mxu0 0.0
  %114 = vmatpush1.msra.mxu0 0.0
  %115 = vmatprep.subr.mxu0 0.0
  %116 = vmatpush1.msra.mxu0 0.0
  %117 = vmatprep.subr.mxu0 0.0
  %118 = vmatpush1.msra.mxu0 0.0
  %119 = vmatprep.subr.mxu0 0.0
  %120 = vmatpush1.msra.mxu0 0.0
  %121 = vmatprep.subr.mxu0 0.0
  %122 = vmatpush1.msra.mxu0 0.0
  %123 = vmatprep.subr.mxu0 0.0
  %124 = vmatpush1.msra.mxu0 0.0
  %125 = vmatprep.subr.mxu0 0.0
  %126 = vmatpush1.msra.mxu0 0.0
  %127 = vmatprep.subr.mxu0 0.0
  %128 = vmatpush1.msra.mxu0 0.0
  %129 = vmatprep.subr.mxu0 0.0
  %130 = vmatpush1.msra.mxu0 0.0
  %131 = vmatprep.subr.mxu0 0.0
  %132 = vmatpush1.msra.mxu0 0.0
  %133 = vmatprep.mubr.f32.mxu0 %v49
  %134 = vmatmul.mubr.f32.gmra.mrb[0].mxu0 %v33
  %v135 = vpop.f32.mrb[0].mxu0
  %v136 = vadd.f32 0.0, %v135
  %v137 = vpop.f32.mrb[0].mxu0
  %138 = vmatprep.mubr.f32.mxu0 %v52
  %139 = vmatmul.mubr.f32.gmra.mrb[0].mxu0 %v35
  %v140 = vpop.f32.mrb[0].mxu0
  %v141 = vadd.f32 0.0, %v140
  %v142 = vpop.f32.mrb[0].mxu0
  %143 = vmatprep.mubr.f32.mxu0 %v55
  %144 = vmatmul.mubr.f32.gmra.mrb[0].mxu0 %v37
  %v145 = vpop.f32.mrb[0].mxu0
  %v146 = vadd.f32 0.0, %v145
  %v147 = vpop.f32.mrb[0].mxu0
  %148 = vmatprep.mubr.f32.mxu0 %v58
  %149 = vmatmul.mubr.f32.gmra.mrb[0].mxu0 %v39
  %v150 = vpop.f32.mrb[0].mxu0
  %v151 = vadd.f32 0.0, %v150
  %v152 = vpop.f32.mrb[0].mxu0
  %153 = vmatprep.mubr.f32.mxu0 %v61
  %154 = vmatmul.mubr.f32.gmra.mrb[0].mxu0 %v41
  %v155 = vpop.f32.mrb[0].mxu0
  %v156 = vadd.f32 0.0, %v155
  %v157 = vpop.f32.mrb[0].mxu0
  %158 = vmatprep.mubr.f32.mxu0 %v64
  %159 = vmatmul.mubr.f32.gmra.mrb[0].mxu0 %v43
  %v160 = vpop.f32.mrb[0].mxu0
  %v161 = vadd.f32 0.0, %v160
  %v162 = vpop.f32.mrb[0].mxu0
  %163 = vmatprep.mubr.f32.mxu0 %v67
  %164 = vmatmul.mubr.f32.gmra.mrb[0].mxu0 %v45
  %v165 = vpop.f32.mrb[0].mxu0
  %v166 = vadd.f32 0.0, %v165
  %v167 = vpop.f32.mrb[0].mxu0
  %168 = vdwg.mxu0
  %s169 = scalar_lea.vmem %s0, 112
  %v170 = vld [vmem:[%s169] sm:$0xff]
  %v171 = vld [vmem:[%s169 + $0x8] sm:$0xff]
  %v172 = vld [vmem:[%s169 + $0x10] sm:$0xff]
  %v173 = vld [vmem:[%s169 + $0x18] sm:$0xff]
  %v174 = vld [vmem:[%s169 + $0x20] sm:$0xff]
  %v175 = vld [vmem:[%s169 + $0x28] sm:$0xff]
  %v176 = vld [vmem:[%s169 + $0x30] sm:$0xff]
  %v177 = vld [vmem:[%s169 + $0x38] sm:$0xff]
  %v178 = vld [vmem:[%s169 + $0x40] sm:$0xff]
  %v179 = vld [vmem:[%s169 + $0x48] sm:$0xff]
  %v180 = vld [vmem:[%s169 + $0x50] sm:$0xff]
  %v181 = vld [vmem:[%s169 + $0x58] sm:$0xff]
  %v182 = vld [vmem:[%s169 + $0x60] sm:$0x3]
  %v183 = vld [vmem:[%s169 + $0x68] sm:$0x3]
  %v185 = vsel %vm47, %v171, 0
  %v188 = vsel %vm47, %v173, 0
  %v191 = vsel %vm47, %v175, 0
  %v194 = vsel %vm47, %v177, 0
  %v197 = vsel %vm47, %v179, 0
  %v200 = vsel %vm47, %v181, 0
  %v203 = vsel %vm47, %v183, 0
  %205 = vmatprep.subr.mxu0 0.0
  %206 = vmatpush1.msra.mxu0 %v14
  %207 = vmatprep.subr.mxu0 0.0
  %208 = vmatpush1.msra.mxu0 %v15
  %209 = vmatprep.subr.mxu0 0.0
  %210 = vmatpush1.msra.mxu0 %v16
  %211 = vmatprep.subr.mxu0 0.0
  %212 = vmatpush1.msra.mxu0 %v17
  %213 = vmatprep.subr.mxu0 0.0
  %214 = vmatpush1.msra.mxu0 %v18
  %215 = vmatprep.subr.mxu0 0.0
  %216 = vmatpush1.msra.mxu0 %v19
  %217 = vmatprep.subr.mxu0 0.0
  %218 = vmatpush1.msra.mxu0 %v20
  %219 = vmatprep.subr.mxu0 0.0
  %220 = vmatpush1.msra.mxu0 %v21
  %221 = vmatprep.subr.mxu0 0.0
  %222 = vmatpush1.msra.mxu0 %v22
  %223 = vmatprep.subr.mxu0 0.0
  %224 = vmatpush1.msra.mxu0 %v23
  %225 = vmatprep.subr.mxu0 0.0
  %226 = vmatpush1.msra.mxu0 %v24
  %227 = vmatprep.subr.mxu0 0.0
  %228 = vmatpush1.msra.mxu0 %v25
  %229 = vmatprep.subr.mxu0 0.0
  %230 = vmatpush1.msra.mxu0 %v26
  %231 = vmatprep.subr.mxu0 0.0
  %232 = vmatpush1.msra.mxu0 %v27
  %233 = vmatprep.subr.mxu0 0.0
  %234 = vmatpush1.msra.mxu0 %v28
  %235 = vmatprep.subr.mxu0 0.0
  %236 = vmatpush1.msra.mxu0 %v29
  %237 = vmatprep.subr.mxu0 0.0
  %238 = vmatpush1.msra.mxu0 %v30
  %239 = vmatprep.subr.mxu0 0.0
  %240 = vmatpush1.msra.mxu0 %v31
  %241 = vmatprep.subr.mxu0 0.0
  %242 = vmatpush1.msra.mxu0 %v32
  %243 = vmatprep.subr.mxu0 0.0
  %244 = vmatpush1.msra.mxu0 0.0
  %245 = vmatprep.subr.mxu0 0.0
  %246 = vmatpush1.msra.mxu0 0.0
  %247 = vmatprep.subr.mxu0 0.0
  %248 = vmatpush1.msra.mxu0 0.0
  %249 = vmatprep.subr.mxu0 0.0
  %250 = vmatpush1.msra.mxu0 0.0
  %251 = vmatprep.subr.mxu0 0.0
  %252 = vmatpush1.msra.mxu0 0.0
  %253 = vmatprep.subr.mxu0 0.0
  %254 = vmatpush1.msra.mxu0 0.0
  %255 = vmatprep.subr.mxu0 0.0
  %256 = vmatpush1.msra.mxu0 0.0
  %257 = vmatprep.subr.mxu0 0.0
  %258 = vmatpush1.msra.mxu0 0.0
  %259 = vmatprep.subr.mxu0 0.0
  %260 = vmatpush1.msra.mxu0 0.0
  %261 = vmatprep.subr.mxu0 0.0
  %262 = vmatpush1.msra.mxu0 0.0
  %263 = vmatprep.subr.mxu0 0.0
  %264 = vmatpush1.msra.mxu0 0.0
  %265 = vmatprep.subr.mxu0 0.0
  %266 = vmatpush1.msra.mxu0 0.0
  %267 = vmatprep.subr.mxu0 0.0
  %268 = vmatpush1.msra.mxu0 0.0
  %269 = vmatprep.mubr.f32.mxu0 %v185
  %270 = vmatmul.mubr.f32.gmra.mrb[0].mxu0 %v170
  %v271 = vpop.f32.mrb[0].mxu0
  %v272 = vadd.f32 0.0, %v271
  %v273 = vpop.f32.mrb[0].mxu0
  %274 = vmatprep.mubr.f32.mxu0 %v188
  %275 = vmatmul.mubr.f32.gmra.mrb[0].mxu0 %v172
  %v276 = vpop.f32.mrb[0].mxu0
  %v277 = vadd.f32 0.0, %v276
  %v278 = vpop.f32.mrb[0].mxu0
  %279 = vmatprep.mubr.f32.mxu0 %v191
  %280 = vmatmul.mubr.f32.gmra.mrb[0].mxu0 %v174
  %v281 = vpop.f32.mrb[0].mxu0
  %v282 = vadd.f32 0.0, %v281
  %v283 = vpop.f32.mrb[0].mxu0
  %284 = vmatprep.mubr.f32.mxu0 %v194
  %285 = vmatmul.mubr.f32.gmra.mrb[0].mxu0 %v176
  %v286 = vpop.f32.mrb[0].mxu0
  %v287 = vadd.f32 0.0, %v286
  %v288 = vpop.f32.mrb[0].mxu0
  %289 = vmatprep.mubr.f32.mxu0 %v197
  %290 = vmatmul.mubr.f32.gmra.mrb[0].mxu0 %v178
  %v291 = vpop.f32.mrb[0].mxu0
  %v292 = vadd.f32 0.0, %v291
  %v293 = vpop.f32.mrb[0].mxu0
  %294 = vmatprep.mubr.f32.mxu0 %v200
  %295 = vmatmul.mubr.f32.gmra.mrb[0].mxu0 %v180
  %v296 = vpop.f32.mrb[0].mxu0
  %v297 = vadd.f32 0.0, %v296
  %v298 = vpop.f32.mrb[0].mxu0
  %299 = vmatprep.mubr.f32.mxu0 %v203
  %300 = vmatmul.mubr.f32.gmra.mrb[0].mxu0 %v182
  %v301 = vpop.f32.mrb[0].mxu0
  %v302 = vadd.f32 0.0, %v301
  %v303 = vpop.f32.mrb[0].mxu0
  %304 = vdwg.mxu0
  %v305 = vmax.f32 %v136, %v272
  %v306 = vmax.f32 %v141, %v277
  %v307 = vmax.f32 %v146, %v282
  %v308 = vmax.f32 %v151, %v287
  %v309 = vmax.f32 %v156, %v292
  %v310 = vmax.f32 %v161, %v297
  %v311 = vmax.f32 %v166, %v302
  %s312 = scalar_lea.vmem %s0, 224
  %v313 = vld [vmem:[%s312] sm:$0xff]
  %v314 = vld [vmem:[%s312 + $0x8] sm:$0xff]
  %v315 = vld [vmem:[%s312 + $0x10] sm:$0xff]
  %v316 = vld [vmem:[%s312 + $0x18] sm:$0xff]
  %v317 = vld [vmem:[%s312 + $0x20] sm:$0xff]
  %v318 = vld [vmem:[%s312 + $0x28] sm:$0xff]
  %v319 = vld [vmem:[%s312 + $0x30] sm:$0xff]
  %v320 = vld [vmem:[%s312 + $0x38] sm:$0xff]
  %v321 = vld [vmem:[%s312 + $0x40] sm:$0xff]
  %v322 = vld [vmem:[%s312 + $0x48] sm:$0xff]
  %v323 = vld [vmem:[%s312 + $0x50] sm:$0xff]
  %v324 = vld [vmem:[%s312 + $0x58] sm:$0xff]
  %v325 = vld [vmem:[%s312 + $0x60] sm:$0x3]
  %v326 = vld [vmem:[%s312 + $0x68] sm:$0x3]
  %v328 = vsel %vm47, %v314, 0
  %v331 = vsel %vm47, %v316, 0
  %v334 = vsel %vm47, %v318, 0
  %v337 = vsel %vm47, %v320, 0
  %v340 = vsel %vm47, %v322, 0
  %v343 = vsel %vm47, %v324, 0
  %v346 = vsel %vm47, %v326, 0
  %348 = vmatprep.subr.mxu0 0.0
  %349 = vmatpush1.msra.mxu0 %v14
  %350 = vmatprep.subr.mxu0 0.0
  %351 = vmatpush1.msra.mxu0 %v15
  %352 = vmatprep.subr.mxu0 0.0
  %353 = vmatpush1.msra.mxu0 %v16
  %354 = vmatprep.subr.mxu0 0.0
  %355 = vmatpush1.msra.mxu0 %v17
  %356 = vmatprep.subr.mxu0 0.0
  %357 = vmatpush1.msra.mxu0 %v18
  %358 = vmatprep.subr.mxu0 0.0
  %359 = vmatpush1.msra.mxu0 %v19
  %360 = vmatprep.subr.mxu0 0.0
  %361 = vmatpush1.msra.mxu0 %v20
  %362 = vmatprep.subr.mxu0 0.0
  %363 = vmatpush1.msra.mxu0 %v21
  %364 = vmatprep.subr.mxu0 0.0
  %365 = vmatpush1.msra.mxu0 %v22
  %366 = vmatprep.subr.mxu0 0.0
  %367 = vmatpush1.msra.mxu0 %v23
  %368 = vmatprep.subr.mxu0 0.0
  %369 = vmatpush1.msra.mxu0 %v24
  %370 = vmatprep.subr.mxu0 0.0
  %371 = vmatpush1.msra.mxu0 %v25
  %372 = vmatprep.subr.mxu0 0.0
  %373 = vmatpush1.msra.mxu0 %v26
  %374 = vmatprep.subr.mxu0 0.0
  %375 = vmatpush1.msra.mxu0 %v27
  %376 = vmatprep.subr.mxu0 0.0
  %377 = vmatpush1.msra.mxu0 %v28
  %378 = vmatprep.subr.mxu0 0.0
  %379 = vmatpush1.msra.mxu0 %v29
  %380 = vmatprep.subr.mxu0 0.0
  %381 = vmatpush1.msra.mxu0 %v30
  %382 = vmatprep.subr.mxu0 0.0
  %383 = vmatpush1.msra.mxu0 %v31
  %384 = vmatprep.subr.mxu0 0.0
  %385 = vmatpush1.msra.mxu0 %v32
  %386 = vmatprep.subr.mxu0 0.0
  %387 = vmatpush1.msra.mxu0 0.0
  %388 = vmatprep.subr.mxu0 0.0
  %389 = vmatpush1.msra.mxu0 0.0
  %390 = vmatprep.subr.mxu0 0.0
  %391 = vmatpush1.msra.mxu0 0.0
  %392 = vmatprep.subr.mxu0 0.0
  %393 = vmatpush1.msra.mxu0 0.0
  %394 = vmatprep.subr.mxu0 0.0
  %395 = vmatpush1.msra.mxu0 0.0
  %396 = vmatprep.subr.mxu0 0.0
  %397 = vmatpush1.msra.mxu0 0.0
  %398 = vmatprep.subr.mxu0 0.0
  %399 = vmatpush1.msra.mxu0 0.0
  %400 = vmatprep.subr.mxu0 0.0
  %401 = vmatpush1.msra.mxu0 0.0
  %402 = vmatprep.subr.mxu0 0.0
  %403 = vmatpush1.msra.mxu0 0.0
  %404 = vmatprep.subr.mxu0 0.0
  %405 = vmatpush1.msra.mxu0 0.0
  %406 = vmatprep.subr.mxu0 0.0
  %407 = vmatpush1.msra.mxu0 0.0
  %408 = vmatprep.subr.mxu0 0.0
  %409 = vmatpush1.msra.mxu0 0.0
  %410 = vmatprep.subr.mxu0 0.0
  %411 = vmatpush1.msra.mxu0 0.0
  %412 = vmatprep.mubr.f32.mxu0 %v328
  %413 = vmatmul.mubr.f32.gmra.mrb[0].mxu0 %v313
  %v414 = vpop.f32.mrb[0].mxu0
  %v415 = vadd.f32 0.0, %v414
  %v416 = vpop.f32.mrb[0].mxu0
  %417 = vmatprep.mubr.f32.mxu0 %v331
  %418 = vmatmul.mubr.f32.gmra.mrb[0].mxu0 %v315
  %v419 = vpop.f32.mrb[0].mxu0
  %v420 = vadd.f32 0.0, %v419
  %v421 = vpop.f32.mrb[0].mxu0
  %422 = vmatprep.mubr.f32.mxu0 %v334
  %423 = vmatmul.mubr.f32.gmra.mrb[0].mxu0 %v317
  %v424 = vpop.f32.mrb[0].mxu0
  %v425 = vadd.f32 0.0, %v424
  %v426 = vpop.f32.mrb[0].mxu0
  %427 = vmatprep.mubr.f32.mxu0 %v337
  %428 = vmatmul.mubr.f32.gmra.mrb[0].mxu0 %v319
  %v429 = vpop.f32.mrb[0].mxu0
  %v430 = vadd.f32 0.0, %v429
  %v431 = vpop.f32.mrb[0].mxu0
  %432 = vmatprep.mubr.f32.mxu0 %v340
  %433 = vmatmul.mubr.f32.gmra.mrb[0].mxu0 %v321
  %v434 = vpop.f32.mrb[0].mxu0
  %v435 = vadd.f32 0.0, %v434
  %v436 = vpop.f32.mrb[0].mxu0
  %437 = vmatprep.mubr.f32.mxu0 %v343
  %438 = vmatmul.mubr.f32.gmra.mrb[0].mxu0 %v323
  %v439 = vpop.f32.mrb[0].mxu0
  %v440 = vadd.f32 0.0, %v439
  %v441 = vpop.f32.mrb[0].mxu0
  %442 = vmatprep.mubr.f32.mxu0 %v346
  %443 = vmatmul.mubr.f32.gmra.mrb[0].mxu0 %v325
  %v444 = vpop.f32.mrb[0].mxu0
  %v445 = vadd.f32 0.0, %v444
  %v446 = vpop.f32.mrb[0].mxu0
  %447 = vdwg.mxu0
  %v448 = vmax.f32 %v305, %v415
  %v449 = vmax.f32 %v306, %v420
  %v450 = vmax.f32 %v307, %v425
  %v451 = vmax.f32 %v308, %v430
  %v452 = vmax.f32 %v309, %v435
  %v453 = vmax.f32 %v310, %v440
  %v454 = vmax.f32 %v311, %v445
  %s455 = scalar_lea.vmem %s0, 336
  %v456 = vld [vmem:[%s455] sm:$0xff]
  %v457 = vld [vmem:[%s455 + $0x8] sm:$0xff]
  %v458 = vld [vmem:[%s455 + $0x10] sm:$0xff]
  %v459 = vld [vmem:[%s455 + $0x18] sm:$0xff]
  %v460 = vld [vmem:[%s455 + $0x20] sm:$0xff]
  %v461 = vld [vmem:[%s455 + $0x28] sm:$0xff]
  %v462 = vld [vmem:[%s455 + $0x30] sm:$0xff]
  %v463 = vld [vmem:[%s455 + $0x38] sm:$0xff]
  %v464 = vld [vmem:[%s455 + $0x40] sm:$0xff]
  %v465 = vld [vmem:[%s455 + $0x48] sm:$0xff]
  %v466 = vld [vmem:[%s455 + $0x50] sm:$0xff]
  %v467 = vld [vmem:[%s455 + $0x58] sm:$0xff]
  %v468 = vld [vmem:[%s455 + $0x60] sm:$0x3]
  %v469 = vld [vmem:[%s455 + $0x68] sm:$0x3]
  %v471 = vsel %vm47, %v457, 0
  %v474 = vsel %vm47, %v459, 0
  %v477 = vsel %vm47, %v461, 0
  %v480 = vsel %vm47, %v463, 0
  %v483 = vsel %vm47, %v465, 0
  %v486 = vsel %vm47, %v467, 0
  %v489 = vsel %vm47, %v469, 0
  %491 = vmatprep.subr.mxu0 0.0
  %492 = vmatpush1.msra.mxu0 %v14
  %493 = vmatprep.subr.mxu0 0.0
  %494 = vmatpush1.msra.mxu0 %v15
  %495 = vmatprep.subr.mxu0 0.0
  %496 = vmatpush1.msra.mxu0 %v16
  %497 = vmatprep.subr.mxu0 0.0
  %498 = vmatpush1.msra.mxu0 %v17
  %499 = vmatprep.subr.mxu0 0.0
  %500 = vmatpush1.msra.mxu0 %v18
  %501 = vmatprep.subr.mxu0 0.0
  %502 = vmatpush1.msra.mxu0 %v19
  %503 = vmatprep.subr.mxu0 0.0
  %504 = vmatpush1.msra.mxu0 %v20
  %505 = vmatprep.subr.mxu0 0.0
  %506 = vmatpush1.msra.mxu0 %v21
  %507 = vmatprep.subr.mxu0 0.0
  %508 = vmatpush1.msra.mxu0 %v22
  %509 = vmatprep.subr.mxu0 0.0
  %510 = vmatpush1.msra.mxu0 %v23
  %511 = vmatprep.subr.mxu0 0.0
  %512 = vmatpush1.msra.mxu0 %v24
  %513 = vmatprep.subr.mxu0 0.0
  %514 = vmatpush1.msra.mxu0 %v25
  %515 = vmatprep.subr.mxu0 0.0
  %516 = vmatpush1.msra.mxu0 %v26
  %517 = vmatprep.subr.mxu0 0.0
  %518 = vmatpush1.msra.mxu0 %v27
  %519 = vmatprep.subr.mxu0 0.0
  %520 = vmatpush1.msra.mxu0 %v28
  %521 = vmatprep.subr.mxu0 0.0
  %522 = vmatpush1.msra.mxu0 %v29
  %523 = vmatprep.subr.mxu0 0.0
  %524 = vmatpush1.msra.mxu0 %v30
  %525 = vmatprep.subr.mxu0 0.0
  %526 = vmatpush1.msra.mxu0 %v31
  %527 = vmatprep.subr.mxu0 0.0
  %528 = vmatpush1.msra.mxu0 %v32
  %529 = vmatprep.subr.mxu0 0.0
  %530 = vmatpush1.msra.mxu0 0.0
  %531 = vmatprep.subr.mxu0 0.0
  %532 = vmatpush1.msra.mxu0 0.0
  %533 = vmatprep.subr.mxu0 0.0
  %534 = vmatpush1.msra.mxu0 0.0
  %535 = vmatprep.subr.mxu0 0.0
  %536 = vmatpush1.msra.mxu0 0.0
  %537 = vmatprep.subr.mxu0 0.0
  %538 = vmatpush1.msra.mxu0 0.0
  %539 = vmatprep.subr.mxu0 0.0
  %540 = vmatpush1.msra.mxu0 0.0
  %541 = vmatprep.subr.mxu0 0.0
  %542 = vmatpush1.msra.mxu0 0.0
  %543 = vmatprep.subr.mxu0 0.0
  %544 = vmatpush1.msra.mxu0 0.0
  %545 = vmatprep.subr.mxu0 0.0
  %546 = vmatpush1.msra.mxu0 0.0
  %547 = vmatprep.subr.mxu0 0.0
  %548 = vmatpush1.msra.mxu0 0.0
  %549 = vmatprep.subr.mxu0 0.0
  %550 = vmatpush1.msra.mxu0 0.0
  %551 = vmatprep.subr.mxu0 0.0
  %552 = vmatpush1.msra.mxu0 0.0
  %553 = vmatprep.subr.mxu0 0.0
  %554 = vmatpush1.msra.mxu0 0.0
  %555 = vmatprep.mubr.f32.mxu0 %v471
  %556 = vmatmul.mubr.f32.gmra.mrb[0].mxu0 %v456
  %v557 = vpop.f32.mrb[0].mxu0
  %v558 = vadd.f32 0.0, %v557
  %v559 = vpop.f32.mrb[0].mxu0
  %560 = vmatprep.mubr.f32.mxu0 %v474
  %561 = vmatmul.mubr.f32.gmra.mrb[0].mxu0 %v458
  %v562 = vpop.f32.mrb[0].mxu0
  %v563 = vadd.f32 0.0, %v562
  %v564 = vpop.f32.mrb[0].mxu0
  %565 = vmatprep.mubr.f32.mxu0 %v477
  %566 = vmatmul.mubr.f32.gmra.mrb[0].mxu0 %v460
  %v567 = vpop.f32.mrb[0].mxu0
  %v568 = vadd.f32 0.0, %v567
  %v569 = vpop.f32.mrb[0].mxu0
  %570 = vmatprep.mubr.f32.mxu0 %v480
  %571 = vmatmul.mubr.f32.gmra.mrb[0].mxu0 %v462
  %v572 = vpop.f32.mrb[0].mxu0
  %v573 = vadd.f32 0.0, %v572
  %v574 = vpop.f32.mrb[0].mxu0
  %575 = vmatprep.mubr.f32.mxu0 %v483
  %576 = vmatmul.mubr.f32.gmra.mrb[0].mxu0 %v464
  %v577 = vpop.f32.mrb[0].mxu0
  %v578 = vadd.f32 0.0, %v577
  %v579 = vpop.f32.mrb[0].mxu0
  %580 = vmatprep.mubr.f32.mxu0 %v486
  %581 = vmatmul.mubr.f32.gmra.mrb[0].mxu0 %v466
  %v582 = vpop.f32.mrb[0].mxu0
  %v583 = vadd.f32 0.0, %v582
  %v584 = vpop.f32.mrb[0].mxu0
  %585 = vmatprep.mubr.f32.mxu0 %v489
  %586 = vmatmul.mubr.f32.gmra.mrb[0].mxu0 %v468
  %v587 = vpop.f32.mrb[0].mxu0
  %v588 = vadd.f32 0.0, %v587
  %v589 = vpop.f32.mrb[0].mxu0
  %590 = vdwg.mxu0
  %v591 = vmax.f32 %v448, %v558
  %v592 = vmax.f32 %v449, %v563
  %v593 = vmax.f32 %v450, %v568
  %v594 = vmax.f32 %v451, %v573
  %v595 = vmax.f32 %v452, %v578
  %v596 = vmax.f32 %v453, %v583
  %v597 = vmax.f32 %v454, %v588
  %v598 = vld [vmem:[%s2] sm:$0x1]
  %v600 = vlaneseq
  %v601 = vshrl.u32 %v600, 7
  %v602 = vsub.s32 0, %v601
  %v603 = vrot.slane %v598, %v602
  %v605 = vadd.f32 %v591, %v603
  %v606 = vadd.f32 %v592, %v603
  %v607 = vadd.f32 %v593, %v603
  %v608 = vadd.f32 %v594, %v603
  %v609 = vadd.f32 %v595, %v603
  %v610 = vadd.f32 %v596, %v603
  %v611 = vadd.f32 %v597, %v603
  %v612 = vmax.f32 %v605, 0.0
  %v613 = vmax.f32 %v606, 0.0
  %v614 = vmax.f32 %v607, 0.0
  %v615 = vmax.f32 %v608, 0.0
  %v616 = vmax.f32 %v609, 0.0
  %v617 = vmax.f32 %v610, 0.0
  %v618 = vmax.f32 %v611, 0.0
  %619 = vst [vmem:[%s3] sm:$0xff] %v612
  %620 = vst [vmem:[%s3 + $0x8] sm:$0xff] %v613
  %621 = vst [vmem:[%s3 + $0x10] sm:$0xff] %v614
  %622 = vst [vmem:[%s3 + $0x18] sm:$0xff] %v615
  %623 = vst [vmem:[%s3 + $0x20] sm:$0xff] %v616
  %624 = vst [vmem:[%s3 + $0x28] sm:$0xff] %v617
  %625 = vst [vmem:[%s3 + $0x30] sm:$0x3] %v618
  // Predicated region
  $region14: #{lenet5_forward.4} parent=0 // pred_check
    _
  $region15: #{lenet5_forward.4} parent=0 // pred_check_branch
    %627 = sbr.rel (0) target = $region17
  $region16: #{lenet5_forward.4} parent=0 // pred_region
    _
  $region17: #{lenet5_forward.4} parent=0 // pred_fallthru
    _
  // Predicated region
  $region18: #{lenet5_forward.4} parent=0 // pred_check
    _
  $region19: #{lenet5_forward.4} parent=0 // pred_check_branch
    %629 = sbr.rel (0) target = $region21
  $region20: #{lenet5_forward.4} parent=0 // pred_region
    _
  $region21: #{lenet5_forward.4} parent=0 // pred_fallthru
    _

// kernel: lenet5_forward.5
$region0: #{lenet5_forward.5}
  #allocation0 [shape = 'u32[]', space=smem, size = 0x4, offset = 0x4, fixed_abs, tag = 'smem constant byte address 0x4 - core index']
  #allocation1 [shape = 'u32[144,128]{1,0:T(1,128)}', space=vmem, size = 0x12000, scoped, tag = 'internal scratch']
  %s0 = inlined_call_operand.vmem [shape: f32[8,400], index: 0, kind: input, shape index: {}]
  %s1 = inlined_call_operand.vmem [shape: f32[400,128], index: 1, kind: input, shape index: {}]
  %s2 = inlined_call_operand.vmem [shape: f32[1,128], index: 2, kind: input, shape index: {}]
  %s3 = inlined_call_operand.vmem [shape: f32[128,128], index: 3, kind: input, shape index: {}]
  %s4 = inlined_call_operand.vmem [shape: f32[1,128], index: 4, kind: input, shape index: {}]
  %s5 = inlined_call_operand.vmem [shape: f32[128,128], index: 5, kind: input, shape index: {}]
  %s6 = inlined_call_operand.vmem [shape: f32[1,128], index: 6, kind: input, shape index: {}]
  %s7 = inlined_call_operand.vmem [shape: f32[8,128], index: 7, kind: output, shape index: {}]
  %s8 = sld [smem:[#allocation0]]
  $region38: #{lenet5_forward.5} parent=0
    _
  %s10 = ssub.s32 1, %s8
  %s11 = scalar_select 0, %s10, %s8
  // Predicated region
  $region2: #{lenet5_forward.5} parent=0 // pred_check
    _
  $region3: #{lenet5_forward.5} parent=0 // pred_check_branch
    %13 = sbr.rel (0) target = $region5
  $region4: #{lenet5_forward.5} parent=0 // pred_region
    _
  $region5: #{lenet5_forward.5} parent=0 // pred_fallthru
    _
  // Predicated region
  $region6: #{lenet5_forward.5} parent=0 // pred_check
    _
  $region7: #{lenet5_forward.5} parent=0 // pred_check_branch
    %15 = sbr.rel (0) target = $region9
  $region8: #{lenet5_forward.5} parent=0 // pred_region
    _
  $region9: #{lenet5_forward.5} parent=0 // pred_fallthru
    _
  // Predicated region
  $region10: #{lenet5_forward.5} parent=0 // pred_check
    _
  $region11: #{lenet5_forward.5} parent=0 // pred_check_branch
    %17 = sbr.rel (0) target = $region13
  $region12: #{lenet5_forward.5} parent=0 // pred_region
    _
  $region13: #{lenet5_forward.5} parent=0 // pred_fallthru
    _
  // Predicated region
  $region14: #{lenet5_forward.5} parent=0 // pred_check
    _
  $region15: #{lenet5_forward.5} parent=0 // pred_check_branch
    %19 = sbr.rel (0) target = $region17
  $region16: #{lenet5_forward.5} parent=0 // pred_region
    _
  $region17: #{lenet5_forward.5} parent=0 // pred_fallthru
    _
  // Predicated region
  $region18: #{lenet5_forward.5} parent=0 // pred_check
    _
  $region19: #{lenet5_forward.5} parent=0 // pred_check_branch
    %21 = sbr.rel (0) target = $region21
  $region20: #{lenet5_forward.5} parent=0 // pred_region
    _
  $region21: #{lenet5_forward.5} parent=0 // pred_fallthru
    _
  // Predicated region
  $region22: #{lenet5_forward.5} parent=0 // pred_check
    _
  $region23: #{lenet5_forward.5} parent=0 // pred_check_branch
    %23 = sbr.rel (0) target = $region25
  $region24: #{lenet5_forward.5} parent=0 // pred_region
    _
  $region25: #{lenet5_forward.5} parent=0 // pred_fallthru
    _
  // Predicated region
  $region26: #{lenet5_forward.5} parent=0 // pred_check
    _
  $region27: #{lenet5_forward.5} parent=0 // pred_check_branch
    %25 = sbr.rel (0) target = $region29
  $region28: #{lenet5_forward.5} parent=0 // pred_region
    _
  $region29: #{lenet5_forward.5} parent=0 // pred_fallthru
    _
  %v26 = vld [vmem:[%s0] sm:$0xff]
  %v27 = vld [vmem:[%s0 + $0x8] sm:$0xff]
  %v28 = vld [vmem:[%s0 + $0x10] sm:$0xff]
  %v29 = vld [vmem:[%s0 + $0x18] sm:$0xff]
  %v30 = vld [vmem:[%s1] sm:$0xff]
  %v31 = vld [vmem:[%s1 + $0x8] sm:$0xff]
  %v32 = vld [vmem:[%s1 + $0x10] sm:$0xff]
  %v33 = vld [vmem:[%s1 + $0x18] sm:$0xff]
  %v34 = vld [vmem:[%s1 + $0x20] sm:$0xff]
  %v35 = vld [vmem:[%s1 + $0x28] sm:$0xff]
  %v36 = vld [vmem:[%s1 + $0x30] sm:$0xff]
  %v37 = vld [vmem:[%s1 + $0x38] sm:$0xff]
  %v38 = vld [vmem:[%s1 + $0x40] sm:$0xff]
  %v39 = vld [vmem:[%s1 + $0x48] sm:$0xff]
  %v40 = vld [vmem:[%s1 + $0x50] sm:$0xff]
  %v41 = vld [vmem:[%s1 + $0x58] sm:$0xff]
  %v42 = vld [vmem:[%s1 + $0x60] sm:$0xff]
  %v43 = vld [vmem:[%s1 + $0x68] sm:$0xff]
  %v44 = vld [vmem:[%s1 + $0x70] sm:$0xff]
  %v45 = vld [vmem:[%s1 + $0x78] sm:$0xff]
  %v46 = vld [vmem:[%s1 + $0x80] sm:$0xff]
  %v47 = vld [vmem:[%s1 + $0x88] sm:$0xff]
  %v48 = vld [vmem:[%s1 + $0x90] sm:$0xff]
  %v49 = vld [vmem:[%s1 + $0x98] sm:$0xff]
  %v50 = vld [vmem:[%s1 + $0xa0] sm:$0xff]
  %v51 = vld [vmem:[%s1 + $0xa8] sm:$0xff]
  %v52 = vld [vmem:[%s1 + $0xb0] sm:$0xff]
  %v53 = vld [vmem:[%s1 + $0xb8] sm:$0xff]
  %v54 = vld [vmem:[%s1 + $0xc0] sm:$0xff]
  %v55 = vld [vmem:[%s1 + $0xc8] sm:$0xff]
  %v56 = vld [vmem:[%s1 + $0xd0] sm:$0xff]
  %v57 = vld [vmem:[%s1 + $0xd8] sm:$0xff]
  %v58 = vld [vmem:[%s1 + $0xe0] sm:$0xff]
  %v59 = vld [vmem:[%s1 + $0xe8] sm:$0xff]
  %v60 = vld [vmem:[%s1 + $0xf0] sm:$0xff]
  %v61 = vld [vmem:[%s1 + $0xf8] sm:$0xff]
  %v62 = vld [vmem:[%s1 + $0x100] sm:$0xff]
  %v63 = vld [vmem:[%s1 + $0x108] sm:$0xff]
  %v64 = vld [vmem:[%s1 + $0x110] sm:$0xff]
  %v65 = vld [vmem:[%s1 + $0x118] sm:$0xff]
  %v66 = vld [vmem:[%s1 + $0x120] sm:$0xff]
  %v67 = vld [vmem:[%s1 + $0x128] sm:$0xff]
  %v68 = vld [vmem:[%s1 + $0x130] sm:$0xff]
  %v69 = vld [vmem:[%s1 + $0x138] sm:$0xff]
  %v70 = vld [vmem:[%s1 + $0x140] sm:$0xff]
  %v71 = vld [vmem:[%s1 + $0x148] sm:$0xff]
  %v72 = vld [vmem:[%s1 + $0x150] sm:$0xff]
  %v73 = vld [vmem:[%s1 + $0x158] sm:$0xff]
  %v74 = vld [vmem:[%s1 + $0x160] sm:$0xff]
  %v75 = vld [vmem:[%s1 + $0x168] sm:$0xff]
  %v76 = vld [vmem:[%s1 + $0x170] sm:$0xff]
  %v77 = vld [vmem:[%s1 + $0x178] sm:$0xff]
  %v78 = vld [vmem:[%s1 + $0x180] sm:$0xff]
  %v79 = vld [vmem:[%s1 + $0x188] sm:$0xff]
  %v80 = vld [vmem:[%s2] sm:$0x1]
  %v82 = vlaneseq
  %v83 = vshrl.u32 %v82, 7
  %v84 = vsub.s32 0, %v83
  %v85 = vrot.slane %v80, %v84
  %vm87 = vcmask 130048
  %v89 = vsel %vm87, %v29, 0
  %91 = vmatprep.subr.mxu0 0.0
  %92 = vmatpush1.msra.mxu0 %v30
  %93 = vmatprep.subr.mxu0 0.0
  %94 = vmatpush1.msra.mxu0 %v31
  %95 = vmatprep.subr.mxu0 0.0
  %96 = vmatpush1.msra.mxu0 %v32
  %97 = vmatprep.subr.mxu0 0.0
  %98 = vmatpush1.msra.mxu0 %v33
  %99 = vmatprep.subr.mxu0 0.0
  %100 = vmatpush1.msra.mxu0 %v34
  %101 = vmatprep.subr.mxu0 0.0
  %102 = vmatpush1.msra.mxu0 %v35
  %103 = vmatprep.subr.mxu0 0.0
  %104 = vmatpush1.msra.mxu0 %v36
  %105 = vmatprep.subr.mxu0 0.0
  %106 = vmatpush1.msra.mxu0 %v37
  %107 = vmatprep.subr.mxu0 0.0
  %108 = vmatpush1.msra.mxu0 %v38
  %109 = vmatprep.subr.mxu0 0.0
  %110 = vmatpush1.msra.mxu0 %v39
  %111 = vmatprep.subr.mxu0 0.0
  %112 = vmatpush1.msra.mxu0 %v40
  %113 = vmatprep.subr.mxu0 0.0
  %114 = vmatpush1.msra.mxu0 %v41
  %115 = vmatprep.subr.mxu0 0.0
  %116 = vmatpush1.msra.mxu0 %v42
  %117 = vmatprep.subr.mxu0 0.0
  %118 = vmatpush1.msra.mxu0 %v43
  %119 = vmatprep.subr.mxu0 0.0
  %120 = vmatpush1.msra.mxu0 %v44
  %121 = vmatprep.subr.mxu0 0.0
  %122 = vmatpush1.msra.mxu0 %v45
  %123 = vmatprep.subr.mxu0 0.0
  %124 = vmatpush1.msra.mxu0 %v46
  %125 = vmatprep.subr.mxu0 0.0
  %126 = vmatpush1.msra.mxu0 %v47
  %127 = vmatprep.subr.mxu0 0.0
  %128 = vmatpush1.msra.mxu0 %v48
  %129 = vmatprep.subr.mxu0 0.0
  %130 = vmatpush1.msra.mxu0 %v49
  %131 = vmatprep.subr.mxu0 0.0
  %132 = vmatpush1.msra.mxu0 %v50
  %133 = vmatprep.subr.mxu0 0.0
  %134 = vmatpush1.msra.mxu0 %v51
  %135 = vmatprep.subr.mxu0 0.0
  %136 = vmatpush1.msra.mxu0 %v52
  %137 = vmatprep.subr.mxu0 0.0
  %138 = vmatpush1.msra.mxu0 %v53
  %139 = vmatprep.subr.mxu0 0.0
  %140 = vmatpush1.msra.mxu0 %v54
  %141 = vmatprep.subr.mxu0 0.0
  %142 = vmatpush1.msra.mxu0 %v55
  %143 = vmatprep.subr.mxu0 0.0
  %144 = vmatpush1.msra.mxu0 %v56
  %145 = vmatprep.subr.mxu0 0.0
  %146 = vmatpush1.msra.mxu0 %v57
  %147 = vmatprep.subr.mxu0 0.0
  %148 = vmatpush1.msra.mxu0 %v58
  %149 = vmatprep.subr.mxu0 0.0
  %150 = vmatpush1.msra.mxu0 %v59
  %151 = vmatprep.subr.mxu0 0.0
  %152 = vmatpush1.msra.mxu0 %v60
  %153 = vmatprep.subr.mxu0 0.0
  %154 = vmatpush1.msra.mxu0 %v61
  %155 = vmatprep.mubr.f32.mxu0 %v27
  %156 = vmatmul.mubr.f32.gmra.mrb[0].mxu0 %v26
  %v157 = vpop.f32.mrb[0].mxu0
  %v158 = vadd.f32 %v85, %v157
  %v159 = vpop.f32.mrb[0].mxu0
  %160 = vdwg.mxu0
  %161 = vmatprep.subr.mxu0 0.0
  %162 = vmatpush1.msra.mxu0 %v62
  %163 = vmatprep.subr.mxu0 0.0
  %164 = vmatpush1.msra.mxu0 %v63
  %165 = vmatprep.subr.mxu0 0.0
  %166 = vmatpush1.msra.mxu0 %v64
  %167 = vmatprep.subr.mxu0 0.0
  %168 = vmatpush1.msra.mxu0 %v65
  %169 = vmatprep.subr.mxu0 0.0
  %170 = vmatpush1.msra.mxu0 %v66
  %171 = vmatprep.subr.mxu0 0.0
  %172 = vmatpush1.msra.mxu0 %v67
  %173 = vmatprep.subr.mxu0 0.0
  %174 = vmatpush1.msra.mxu0 %v68
  %175 = vmatprep.subr.mxu0 0.0
  %176 = vmatpush1.msra.mxu0 %v69
  %177 = vmatprep.subr.mxu0 0.0
  %178 = vmatpush1.msra.mxu0 %v70
  %179 = vmatprep.subr.mxu0 0.0
  %180 = vmatpush1.msra.mxu0 %v71
  %181 = vmatprep.subr.mxu0 0.0
  %182 = vmatpush1.msra.mxu0 %v72
  %183 = vmatprep.subr.mxu0 0.0
  %184 = vmatpush1.msra.mxu0 %v73
  %185 = vmatprep.subr.mxu0 0.0
  %186 = vmatpush1.msra.mxu0 %v74
  %187 = vmatprep.subr.mxu0 0.0
  %188 = vmatpush1.msra.mxu0 %v75
  %189 = vmatprep.subr.mxu0 0.0
  %190 = vmatpush1.msra.mxu0 %v76
  %191 = vmatprep.subr.mxu0 0.0
  %192 = vmatpush1.msra.mxu0 %v77
  %193 = vmatprep.subr.mxu0 0.0
  %194 = vmatpush1.msra.mxu0 %v78
  %195 = vmatprep.subr.mxu0 0.0
  %196 = vmatpush1.msra.mxu0 %v79
  %197 = vmatprep.subr.mxu0 0.0
  %198 = vmatpush1.msra.mxu0 0.0
  %199 = vmatprep.subr.mxu0 0.0
  %200 = vmatpush1.msra.mxu0 0.0
  %201 = vmatprep.subr.mxu0 0.0
  %202 = vmatpush1.msra.mxu0 0.0
  %203 = vmatprep.subr.mxu0 0.0
  %204 = vmatpush1.msra.mxu0 0.0
  %205 = vmatprep.subr.mxu0 0.0
  %206 = vmatpush1.msra.mxu0 0.0
  %207 = vmatprep.subr.mxu0 0.0
  %208 = vmatpush1.msra.mxu0 0.0
  %209 = vmatprep.subr.mxu0 0.0
  %210 = vmatpush1.msra.mxu0 0.0
  %211 = vmatprep.subr.mxu0 0.0
  %212 = vmatpush1.msra.mxu0 0.0
  %213 = vmatprep.subr.mxu0 0.0
  %214 = vmatpush1.msra.mxu0 0.0
  %215 = vmatprep.subr.mxu0 0.0
  %216 = vmatpush1.msra.mxu0 0.0
  %217 = vmatprep.subr.mxu0 0.0
  %218 = vmatpush1.msra.mxu0 0.0
  %219 = vmatprep.subr.mxu0 0.0
  %220 = vmatpush1.msra.mxu0 0.0
  %221 = vmatprep.subr.mxu0 0.0
  %222 = vmatpush1.msra.mxu0 0.0
  %223 = vmatprep.subr.mxu0 0.0
  %224 = vmatpush1.msra.mxu0 0.0
  %225 = vmatprep.mubr.f32.mxu0 %v89
  %226 = vmatmul.mubr.f32.gmra.mrb[0].mxu0 %v28
  %v227 = vpop.f32.mrb[0].mxu0
  %v228 = vadd.f32 %v158, %v227
  %v229 = vpop.f32.mrb[0].mxu0
  %230 = vdwg.mxu0
  %v231 = vmax.f32 %v228, 0.0
  %v232 = vld [vmem:[%s3] sm:$0xff]
  %v233 = vld [vmem:[%s3 + $0x8] sm:$0xff]
  %v234 = vld [vmem:[%s3 + $0x10] sm:$0xff]
  %v235 = vld [vmem:[%s3 + $0x18] sm:$0xff]
  %v236 = vld [vmem:[%s3 + $0x20] sm:$0xff]
  %v237 = vld [vmem:[%s3 + $0x28] sm:$0xff]
  %v238 = vld [vmem:[%s3 + $0x30] sm:$0xff]
  %v239 = vld [vmem:[%s3 + $0x38] sm:$0xff]
  %v240 = vld [vmem:[%s3 + $0x40] sm:$0xff]
  %v241 = vld [vmem:[%s3 + $0x48] sm:$0xff]
  %v242 = vld [vmem:[%s3 + $0x50] sm:$0xff]
  %v243 = vld [vmem:[%s3 + $0x58] sm:$0xff]
  %v244 = vld [vmem:[%s3 + $0x60] sm:$0xff]
  %v245 = vld [vmem:[%s3 + $0x68] sm:$0xff]
  %v246 = vld [vmem:[%s3 + $0x70] sm:$0xff]
  %v247 = vld [vmem:[%s3 + $0x78] sm:$0xff]
  %v248 = vld [vmem:[%s4] sm:$0x1]
  %v250 = vlaneseq
  %v251 = vshrl.u32 %v250, 7
  %v252 = vsub.s32 0, %v251
  %v253 = vrot.slane %v248, %v252
  %255 = vmatprep.subr.mxu0 0.0
  %256 = vmatpush1.msra.mxu0 %v232
  %257 = vmatprep.subr.mxu0 0.0
  %258 = vmatpush1.msra.mxu0 %v233
  %259 = vmatprep.subr.mxu0 0.0
  %260 = vmatpush1.msra.mxu0 %v234
  %261 = vmatprep.subr.mxu0 0.0
  %262 = vmatpush1.msra.mxu0 %v235
  %263 = vmatprep.subr.mxu0 0.0
  %264 = vmatpush1.msra.mxu0 %v236
  %265 = vmatprep.subr.mxu0 0.0
  %266 = vmatpush1.msra.mxu0 %v237
  %267 = vmatprep.subr.mxu0 0.0
  %268 = vmatpush1.msra.mxu0 %v238
  %269 = vmatprep.subr.mxu0 0.0
  %270 = vmatpush1.msra.mxu0 %v239
  %271 = vmatprep.subr.mxu0 0.0
  %272 = vmatpush1.msra.mxu0 %v240
  %273 = vmatprep.subr.mxu0 0.0
  %274 = vmatpush1.msra.mxu0 %v241
  %275 = vmatprep.subr.mxu0 0.0
  %276 = vmatpush1.msra.mxu0 %v242
  %277 = vmatprep.subr.mxu0 0.0
  %278 = vmatpush1.msra.mxu0 %v243
  %279 = vmatprep.subr.mxu0 0.0
  %280 = vmatpush1.msra.mxu0 %v244
  %281 = vmatprep.subr.mxu0 0.0
  %282 = vmatpush1.msra.mxu0 %v245
  %283 = vmatprep.subr.mxu0 0.0
  %284 = vmatpush1.msra.mxu0 %v246
  %285 = vmatprep.subr.mxu0 0.0
  %286 = vmatpush1.msra.mxu0 %v247
  %287 = vmatprep.subr.mxu0 0.0
  %288 = vmatpush1.msra.mxu0 0.0
  %289 = vmatprep.subr.mxu0 0.0
  %290 = vmatpush1.msra.mxu0 0.0
  %291 = vmatprep.subr.mxu0 0.0
  %292 = vmatpush1.msra.mxu0 0.0
  %293 = vmatprep.subr.mxu0 0.0
  %294 = vmatpush1.msra.mxu0 0.0
  %295 = vmatprep.subr.mxu0 0.0
  %296 = vmatpush1.msra.mxu0 0.0
  %297 = vmatprep.subr.mxu0 0.0
  %298 = vmatpush1.msra.mxu0 0.0
  %299 = vmatprep.subr.mxu0 0.0
  %300 = vmatpush1.msra.mxu0 0.0
  %301 = vmatprep.subr.mxu0 0.0
  %302 = vmatpush1.msra.mxu0 0.0
  %303 = vmatprep.subr.mxu0 0.0
  %304 = vmatpush1.msra.mxu0 0.0
  %305 = vmatprep.subr.mxu0 0.0
  %306 = vmatpush1.msra.mxu0 0.0
  %307 = vmatprep.subr.mxu0 0.0
  %308 = vmatpush1.msra.mxu0 0.0
  %309 = vmatprep.subr.mxu0 0.0
  %310 = vmatpush1.msra.mxu0 0.0
  %311 = vmatprep.subr.mxu0 0.0
  %312 = vmatpush1.msra.mxu0 0.0
  %313 = vmatprep.subr.mxu0 0.0
  %314 = vmatpush1.msra.mxu0 0.0
  %315 = vmatprep.subr.mxu0 0.0
  %316 = vmatpush1.msra.mxu0 0.0
  %317 = vmatprep.subr.mxu0 0.0
  %318 = vmatpush1.msra.mxu0 0.0
  %319 = vmatprep.mubr.f32.mxu0 0.0
  %320 = vmatmul.mubr.f32.gmra.mrb[0].mxu0 %v231
  %v321 = vpop.f32.mrb[0].mxu0
  %v322 = vadd.f32 %v253, %v321
  %v323 = vpop.f32.mrb[0].mxu0
  %324 = vdwg.mxu0
  %v325 = vmax.f32 %v322, 0.0
  %v326 = vld [vmem:[%s5] sm:$0xff]
  %v327 = vld [vmem:[%s5 + $0x8] sm:$0xff]
  %v328 = vld [vmem:[%s5 + $0x10] sm:$0xff]
  %v329 = vld [vmem:[%s5 + $0x18] sm:$0xff]
  %v330 = vld [vmem:[%s5 + $0x20] sm:$0xff]
  %v331 = vld [vmem:[%s5 + $0x28] sm:$0xff]
  %v332 = vld [vmem:[%s5 + $0x30] sm:$0xff]
  %v333 = vld [vmem:[%s5 + $0x38] sm:$0xff]
  %v334 = vld [vmem:[%s5 + $0x40] sm:$0xff]
  %v335 = vld [vmem:[%s5 + $0x48] sm:$0xff]
  %v336 = vld [vmem:[%s5 + $0x50] sm:$0xff]
  %v337 = vld [vmem:[%s5 + $0x58] sm:$0xff]
  %v338 = vld [vmem:[%s5 + $0x60] sm:$0xff]
  %v339 = vld [vmem:[%s5 + $0x68] sm:$0xff]
  %v340 = vld [vmem:[%s5 + $0x70] sm:$0xff]
  %v341 = vld [vmem:[%s5 + $0x78] sm:$0xff]
  %v342 = vld [vmem:[%s6] sm:$0x1]
  %v344 = vlaneseq
  %v345 = vshrl.u32 %v344, 7
  %v346 = vsub.s32 0, %v345
  %v347 = vrot.slane %v342, %v346
  %349 = vmatprep.subr.mxu0 0.0
  %350 = vmatpush1.msra.mxu0 %v326
  %351 = vmatprep.subr.mxu0 0.0
  %352 = vmatpush1.msra.mxu0 %v327
  %353 = vmatprep.subr.mxu0 0.0
  %354 = vmatpush1.msra.mxu0 %v328
  %355 = vmatprep.subr.mxu0 0.0
  %356 = vmatpush1.msra.mxu0 %v329
  %357 = vmatprep.subr.mxu0 0.0
  %358 = vmatpush1.msra.mxu0 %v330
  %359 = vmatprep.subr.mxu0 0.0
  %360 = vmatpush1.msra.mxu0 %v331
  %361 = vmatprep.subr.mxu0 0.0
  %362 = vmatpush1.msra.mxu0 %v332
  %363 = vmatprep.subr.mxu0 0.0
  %364 = vmatpush1.msra.mxu0 %v333
  %365 = vmatprep.subr.mxu0 0.0
  %366 = vmatpush1.msra.mxu0 %v334
  %367 = vmatprep.subr.mxu0 0.0
  %368 = vmatpush1.msra.mxu0 %v335
  %369 = vmatprep.subr.mxu0 0.0
  %370 = vmatpush1.msra.mxu0 %v336
  %371 = vmatprep.subr.mxu0 0.0
  %372 = vmatpush1.msra.mxu0 %v337
  %373 = vmatprep.subr.mxu0 0.0
  %374 = vmatpush1.msra.mxu0 %v338
  %375 = vmatprep.subr.mxu0 0.0
  %376 = vmatpush1.msra.mxu0 %v339
  %377 = vmatprep.subr.mxu0 0.0
  %378 = vmatpush1.msra.mxu0 %v340
  %379 = vmatprep.subr.mxu0 0.0
  %380 = vmatpush1.msra.mxu0 %v341
  %381 = vmatprep.subr.mxu0 0.0
  %382 = vmatpush1.msra.mxu0 0.0
  %383 = vmatprep.subr.mxu0 0.0
  %384 = vmatpush1.msra.mxu0 0.0
  %385 = vmatprep.subr.mxu0 0.0
  %386 = vmatpush1.msra.mxu0 0.0
  %387 = vmatprep.subr.mxu0 0.0
  %388 = vmatpush1.msra.mxu0 0.0
  %389 = vmatprep.subr.mxu0 0.0
  %390 = vmatpush1.msra.mxu0 0.0
  %391 = vmatprep.subr.mxu0 0.0
  %392 = vmatpush1.msra.mxu0 0.0
  %393 = vmatprep.subr.mxu0 0.0
  %394 = vmatpush1.msra.mxu0 0.0
  %395 = vmatprep.subr.mxu0 0.0
  %396 = vmatpush1.msra.mxu0 0.0
  %397 = vmatprep.subr.mxu0 0.0
  %398 = vmatpush1.msra.mxu0 0.0
  %399 = vmatprep.subr.mxu0 0.0
  %400 = vmatpush1.msra.mxu0 0.0
  %401 = vmatprep.subr.mxu0 0.0
  %402 = vmatpush1.msra.mxu0 0.0
  %403 = vmatprep.subr.mxu0 0.0
  %404 = vmatpush1.msra.mxu0 0.0
  %405 = vmatprep.subr.mxu0 0.0
  %406 = vmatpush1.msra.mxu0 0.0
  %407 = vmatprep.subr.mxu0 0.0
  %408 = vmatpush1.msra.mxu0 0.0
  %409 = vmatprep.subr.mxu0 0.0
  %410 = vmatpush1.msra.mxu0 0.0
  %411 = vmatprep.subr.mxu0 0.0
  %412 = vmatpush1.msra.mxu0 0.0
  %413 = vmatprep.mubr.f32.mxu0 0.0
  %414 = vmatmul.mubr.f32.gmra.mrb[0].mxu0 %v325
  %v415 = vpop.f32.mrb[0].mxu0
  %v416 = vadd.f32 %v347, %v415
  %v417 = vpop.f32.mrb[0].mxu0
  %418 = vdwg.mxu0
  %419 = vst [vmem:[%s7] sm:$0xff] %v416
  // Predicated region
  $region30: #{lenet5_forward.5} parent=0 // pred_check
    _
  $region31: #{lenet5_forward.5} parent=0 // pred_check_branch
    %421 = sbr.rel (0) target = $region33
  $region32: #{lenet5_forward.5} parent=0 // pred_region
    _
  $region33: #{lenet5_forward.5} parent=0 // pred_fallthru
    _
  // Predicated region
  $region34: #{lenet5_forward.5} parent=0 // pred_check
    _
  $region35: #{lenet5_forward.5} parent=0 // pred_check_branch
    %423 = sbr.rel (0) target = $region37
  $region36: #{lenet5_forward.5} parent=0 // pred_region
    _
  $region37: #{lenet5_forward.5} parent=0 // pred_fallthru
    _

</llo_original>
